<compile_context>
chip_gen: v5e
topology: v5e:2x2
jax: 0.10.0
libtpu: 0.0.40
codegen_flags: <defaults>
</compile_context>

<pallas_src>
import functools

import jax
import jax.numpy as jnp
from jax import lax
from jax.experimental import pallas as pl
from jax.experimental.pallas import tpu as pltpu


# ----------------------------------------------------------------------------
# Fused kernel:  TSM -> conv1(1x1)+bn1+relu -> conv2(3x3,p=1)+bn2+relu
#                -> conv3(1x1)+bn3 -> +residual -> relu
# One grid step = one video clip of T = n_segment frames (NHWC, bf16).
# ----------------------------------------------------------------------------
def bottleneck_kernel(x_ref,
                      w1a_ref, w1b_ref, w1c_ref, s1_ref, b1_ref,
                      w2_ref, s2_ref, b2_ref,
                      w3_ref, s3_ref, b3_ref,
                      o_ref, y1pad_ref,
                      *, activate_tsm, last_relu):
    T, H, W, Cin = x_ref.shape
    Cmid = w2_ref.shape[2]
    Cout = w3_ref.shape[1]
    fold = w1a_ref.shape[0]
    M = T * H * W
    HW = H * W
    Wpad = y1pad_ref.shape[2]
    LEFT = Wpad - (W + 1)          # interior column offset (sublane aligned)
    f32 = jnp.float32

    x = x_ref[...]                                        # (T, H, W, Cin) bf16

    # ---- conv1 (1x1) with the TSM shift folded in as K-sliced partials ----
    # y1[t] = x[t+1, :fold] @ W1A + x[t-1, fold:2fold] @ W1B + x[t, 2fold:] @ W1C
    # (zero contribution at the clip boundaries), by linearity of the 1x1 conv.
    if activate_tsm:
        pC = jnp.dot(x[..., 2 * fold:].reshape(M, Cin - 2 * fold), w1c_ref[...],
                     preferred_element_type=f32).reshape(T, HW, Cmid)
        pA = jnp.dot(x[..., :fold].reshape(M, fold), w1a_ref[...],
                     preferred_element_type=f32).reshape(T, HW, Cmid)
        pB = jnp.dot(x[..., fold:2 * fold].reshape(M, fold), w1b_ref[...],
                     preferred_element_type=f32).reshape(T, HW, Cmid)
        zf = jnp.zeros((1, HW, Cmid), f32)
        y1 = (pC
              + jnp.concatenate([pA[1:], zf], axis=0)     # frame t <- pA of t+1
              + jnp.concatenate([zf, pB[:-1]], axis=0))   # frame t <- pB of t-1
        y1 = y1.reshape(M, Cmid)
    else:
        y1 = (jnp.dot(x[..., :fold].reshape(M, fold), w1a_ref[...],
                      preferred_element_type=f32)
              + jnp.dot(x[..., fold:2 * fold].reshape(M, fold), w1b_ref[...],
                        preferred_element_type=f32)
              + jnp.dot(x[..., 2 * fold:].reshape(M, Cin - 2 * fold), w1c_ref[...],
                        preferred_element_type=f32))

    # bn1 + relu in f32, then cast once for the bf16 scratch store
    y1 = jnp.maximum(y1 * s1_ref[...] + b1_ref[...], 0.0)
    y1 = y1.astype(y1pad_ref.dtype)

    # ---- stage y1 into the padded scratch ----------------------------------
    # Only the halo cells read by the 3x3 taps (rows 0 / H+1, cols LEFT-1 and
    # LEFT+W) are zeroed; cols < LEFT-1 are never read.  Interior + halos are
    # rewritten every step -> no cross-step state, safe with "parallel".
    zdt = y1pad_ref.dtype
    y1pad_ref[:, 0:1, :, :] = jnp.zeros((T, 1, Wpad, Cmid), zdt)
    y1pad_ref[:, H + 1:H + 2, :, :] = jnp.zeros((T, 1, Wpad, Cmid), zdt)
    y1pad_ref[:, 1:H + 1, LEFT - 1:LEFT, :] = jnp.zeros((T, H, 1, Cmid), zdt)
    y1pad_ref[:, 1:H + 1, LEFT + W:LEFT + W + 1, :] = jnp.zeros((T, H, 1, Cmid), zdt)
    # the big store is sublane-aligned (LEFT = 16)
    y1pad_ref[:, 1:H + 1, LEFT:LEFT + W, :] = y1.reshape(T, H, W, Cmid)

    # ---- conv2 (3x3, pad=1, stride=1): 9 slab dots, dx slice hoisted -------
    acc = None
    for dx in range(3):
        # one (misaligned) width-shifted extraction per dx instead of per tap
        slab = y1pad_ref[:, :, LEFT - 1 + dx:LEFT - 1 + dx + W, :]  # (T,H+2,W,Cmid)
        for dy in range(3):
            tap = slab[:, dy:dy + H, :, :].reshape(M, Cmid)
            d = jnp.dot(tap, w2_ref[dy * 3 + dx], preferred_element_type=f32)
            acc = d if acc is None else acc + d
    y2 = jnp.maximum(acc * s2_ref[...] + b2_ref[...], 0.0)          # f32
    y2 = y2.astype(jnp.bfloat16)

    # ---- conv3 (1x1) + bn3 + residual (+ relu) ------------------------------
    y3 = jnp.dot(y2, w3_ref[...], preferred_element_type=f32)
    y3 = y3 * s3_ref[...] + b3_ref[...]
    out = y3 + x.reshape(M, Cout).astype(f32)        # residual = un-shifted x
    if last_relu:
        out = jnp.maximum(out, 0.0)
    o_ref[...] = out.reshape(T, H, W, Cout).astype(o_ref.dtype)


def bottleneck_pallas(x_nhwc, params, n_segment, *, activate_tsm=True,
                      last_relu=True):
    x_bf = x_nhwc.astype(jnp.bfloat16)
    NT, H, W, Cin = x_bf.shape
    w1a, w1b, w1c = params["w1a"], params["w1b"], params["w1c"]
    s1, b1 = params["s1"], params["b1"]
    w2, s2, b2 = params["w2"], params["s2"], params["b2"]
    w3, s3, b3 = params["w3"], params["s3"], params["b3"]
    Cmid = w2.shape[2]
    Cout = w3.shape[1]

    assert NT % n_segment == 0, "nt must be a multiple of n_segment"
    assert Cin == Cout, "residual path requires inplanes == planes (downsample=None)"
    assert Cin % 8 == 0, "TSM fold (= Cin // 8) must be >= 1 and integral"

    T = n_segment
    n_videos = NT // T

    LEFT = 16                       # bf16 sublane-aligned left pad of the scratch
    Wpad = LEFT + W + 1

    kernel = functools.partial(bottleneck_kernel,
                               activate_tsm=activate_tsm, last_relu=last_relu)

    weights = (w1a, w1b, w1c, s1, b1, w2, s2, b2, w3, s3, b3)

    # Explicit VMEM budget: 2x double-buffered in/out blocks + scratch + weights.
    blk_in = T * H * W * Cin * 2           # bf16
    blk_out = T * H * W * Cout * 2         # bf16
    scr = T * (H + 2) * Wpad * Cmid * 2    # bf16 scratch
    wts = sum(int(a.size) * a.dtype.itemsize for a in weights)
    need = 2 * (blk_in + blk_out) + scr + 2 * wts
    vmem_limit = int(min(max(int(need * 1.5) + (8 << 20), 32 << 20), 100 << 20))

    grid_spec = pltpu.PrefetchScalarGridSpec(
        num_scalar_prefetch=0,
        grid=(n_videos,),
        in_specs=[
            pl.BlockSpec((T, H, W, Cin), lambda v: (v, 0, 0, 0)),
            pl.BlockSpec(w1a.shape, lambda v: (0, 0)),
            pl.BlockSpec(w1b.shape, lambda v: (0, 0)),
            pl.BlockSpec(w1c.shape, lambda v: (0, 0)),
            pl.BlockSpec(s1.shape, lambda v: (0, 0)),
            pl.BlockSpec(b1.shape, lambda v: (0, 0)),
            pl.BlockSpec(w2.shape, lambda v: (0, 0, 0)),
            pl.BlockSpec(s2.shape, lambda v: (0, 0)),
            pl.BlockSpec(b2.shape, lambda v: (0, 0)),
            pl.BlockSpec(w3.shape, lambda v: (0, 0)),
            pl.BlockSpec(s3.shape, lambda v: (0, 0)),
            pl.BlockSpec(b3.shape, lambda v: (0, 0)),
        ],
        out_specs=pl.BlockSpec((T, H, W, Cout), lambda v: (v, 0, 0, 0)),
        scratch_shapes=[pltpu.VMEM((T, H + 2, Wpad, Cmid), jnp.bfloat16)],
    )

    return pl.pallas_call(
        kernel,
        out_shape=jax.ShapeDtypeStruct((NT, H, W, Cout), jnp.bfloat16),
        grid_spec=grid_spec,
        compiler_params=pltpu.CompilerParams(
            dimension_semantics=("parallel",),      # clips independent -> both TCs
            vmem_limit_bytes=vmem_limit),
    )(x_bf, *weights)


# ----------------------------------------------------------------------------
# Module wrapper (NHWC in / NHWC out; TSM + residual fused into the kernel)
# ----------------------------------------------------------------------------
def bottleneck_ample_forward(x_nhwc, params, n_segment, activate_tsm=True):
    return bottleneck_pallas(x_nhwc, params, n_segment,
                             activate_tsm=activate_tsm, last_relu=True)


# ----------------------------------------------------------------------------
# Deterministic parameter construction (PyTorch shapes, BN folded, eval mode)
# ----------------------------------------------------------------------------
def make_params(key, inplanes, planes):
    cmid = planes // 4          # Bottleneck_ample.expansion = 4
    cout = planes
    fold = inplanes // 8
    ks = jax.random.split(key, 12)
    eps = 1e-5

    def bn_fold(kg, kb, km, kv, c):
        gamma = jax.random.uniform(kg, (c,), jnp.float32, 0.5, 1.5)
        beta = 0.1 * jax.random.normal(kb, (c,), jnp.float32)
        mean = 0.1 * jax.random.normal(km, (c,), jnp.float32)
        var = jax.random.uniform(kv, (c,), jnp.float32, 0.5, 1.5)
        scale = gamma / jnp.sqrt(var + eps)
        bias = beta - mean * scale
        return scale, bias

    # PyTorch conv weights (OIHW, f32 masters)
    w1_oihw = 0.1 * jax.random.normal(ks[0], (cmid, inplanes, 1, 1), jnp.float32)
    w2_oihw = 0.1 * jax.random.normal(ks[1], (cmid, cmid, 3, 3), jnp.float32)
    w3_oihw = 0.1 * jax.random.normal(ks[2], (cout, cmid, 1, 1), jnp.float32)

    s1, b1 = bn_fold(ks[3], ks[4], ks[5], ks[6], cmid)
    s2, b2 = bn_fold(ks[7], ks[8], ks[9], ks[10], cmid)
    s3, b3 = bn_fold(ks[11], ks[3], ks[7], ks[0], cout)

    # kernel-side layouts (bf16 MXU operands)
    w1_io = jnp.transpose(w1_oihw[:, :, 0, 0], (1, 0)).astype(jnp.bfloat16)   # (Cin, Cmid)
    w2_k = jnp.transpose(w2_oihw, (2, 3, 1, 0)).reshape(9, cmid, cmid).astype(jnp.bfloat16)
    w3_k = jnp.transpose(w3_oihw[:, :, 0, 0], (1, 0)).astype(jnp.bfloat16)    # (Cmid, Cout)

    params = {
        "w1a": w1_io[:fold], "w1b": w1_io[fold:2 * fold], "w1c": w1_io[2 * fold:],
        "w2": w2_k, "w3": w3_k,
        "s1": s1.reshape(1, cmid), "b1": b1.reshape(1, cmid),
        "s2": s2.reshape(1, cmid), "b2": b2.reshape(1, cmid),
        "s3": s3.reshape(1, cout), "b3": b3.reshape(1, cout),
        # reference-side (OIHW, f32 masters)
        "w1_oihw": w1_oihw, "w2_oihw": w2_oihw, "w3_oihw": w3_oihw,
    }
    return params


# ----------------------------------------------------------------------------
# Pure-JAX reference (lax.conv, NHWC, same bf16 operand discipline) — harness
# ----------------------------------------------------------------------------
def tsm_shift_nhwc(x, n_segment, fold_div=8):
    nt, h, w, c = x.shape
    nb = nt // n_segment
    x5 = x.reshape(nb, n_segment, h, w, c)
    fold = c // fold_div
    out = jnp.zeros_like(x5)
    out = out.at[:, :-1, :, :, :fold].set(x5[:, 1:, :, :, :fold])
    out = out.at[:, 1:, :, :, fold:2 * fold].set(x5[:, :-1, :, :, fold:2 * fold])
    out = out.at[:, :, :, :, 2 * fold:].set(x5[:, :, :, :, 2 * fold:])
    return out.reshape(nt, h, w, c)


def reference_forward(x_bf16, p, n_segment, activate_tsm=True):
    dn = ("NHWC", "HWIO", "NHWC")

    def conv(x, w_oihw, padding):
        w = jnp.transpose(w_oihw, (2, 3, 1, 0)).astype(jnp.bfloat16)   # OIHW -> HWIO
        return lax.conv_general_dilated(x, w, (1, 1), padding,
                                        dimension_numbers=dn,
                                        preferred_element_type=jnp.float32)

    def bn(x, s, b):
        return x * s.reshape(1, 1, 1, -1) + b.reshape(1, 1, 1, -1)

    residual = x_bf16.astype(jnp.float32)
    out = tsm_shift_nhwc(x_bf16, n_segment) if activate_tsm else x_bf16
    out = jnp.maximum(bn(conv(out, p["w1_oihw"], "VALID"), p["s1"], p["b1"]), 0.0)
    out = out.astype(jnp.bfloat16)
    out = jnp.maximum(bn(conv(out, p["w2_oihw"], ((1, 1), (1, 1))), p["s2"], p["b2"]), 0.0)
    out = out.astype(jnp.bfloat16)
    out = bn(conv(out, p["w3_oihw"], "VALID"), p["s3"], p["b3"])
    out = out + residual
    return jnp.maximum(out, 0.0)      # f32


if __name__ == "__main__":
    # small shapes: nt = 8 frames (2 clips x 4 segments), 64 channels, 8x8 spatial
    inplanes = 64
    planes = 64          # residual path requires inplanes == planes (downsample=None)
    num_segments = 4
    nt, H, W = 8, 8, 8

    key = jax.random.PRNGKey(0)
    kx, kp = jax.random.split(key)
    x = jax.random.normal(kx, (nt, H, W, inplanes), jnp.float32).astype(jnp.bfloat16)
    params = make_params(kp, inplanes, planes)

    y = bottleneck_ample_forward(x, params, num_segments, activate_tsm=True)
    y = jax.block_until_ready(y)

    y_ref = reference_forward(x, params, num_segments, activate_tsm=True)
    y_ref = jax.block_until_ready(y_ref)

    assert y.shape == (nt, H, W, planes)
    err = float(jnp.max(jnp.abs(y.astype(jnp.float32) - y_ref)))
    assert jnp.allclose(y.astype(jnp.float32), y_ref, atol=3e-2, rtol=3e-2), err

    print("KERNEL_OK")
</pallas_src>

<mosaic_0001>
module attributes {stable_mosaic.version = 11 : i64} {
  func.func @bottleneck_kernel(%arg0: i32, %arg1: memref<4x8x8x64xbf16, #tpu.memory_space<vmem>>, %arg2: memref<8x16xbf16, #tpu.memory_space<vmem>>, %arg3: memref<8x16xbf16, #tpu.memory_space<vmem>>, %arg4: memref<48x16xbf16, #tpu.memory_space<vmem>>, %arg5: memref<1x16xf32, #tpu.memory_space<vmem>>, %arg6: memref<1x16xf32, #tpu.memory_space<vmem>>, %arg7: memref<9x16x16xbf16, #tpu.memory_space<vmem>>, %arg8: memref<1x16xf32, #tpu.memory_space<vmem>>, %arg9: memref<1x16xf32, #tpu.memory_space<vmem>>, %arg10: memref<16x64xbf16, #tpu.memory_space<vmem>>, %arg11: memref<1x64xf32, #tpu.memory_space<vmem>>, %arg12: memref<1x64xf32, #tpu.memory_space<vmem>>, %arg13: memref<4x8x8x64xbf16, #tpu.memory_space<vmem>>, %arg14: memref<4x10x25x16xbf16, #tpu.memory_space<vmem>>) attributes {dimension_semantics = [#tpu.dimension_semantics<parallel>], iteration_bounds = array<i64: 2>, scalar_prefetch = 0 : i64, scratch_operands = 1 : i64, tpu.core_type = #tpu.core_type<tc>, window_params = [{transform_indices = @transform_0, window_bounds = array<i64: 4, 8, 8, 64>}, {pipeline_mode = #tpu.pipeline_mode<synchronous>, transform_indices = @transform_1, window_bounds = array<i64: 8, 16>}, {pipeline_mode = #tpu.pipeline_mode<synchronous>, transform_indices = @transform_2, window_bounds = array<i64: 8, 16>}, {pipeline_mode = #tpu.pipeline_mode<synchronous>, transform_indices = @transform_3, window_bounds = array<i64: 48, 16>}, {pipeline_mode = #tpu.pipeline_mode<synchronous>, transform_indices = @transform_4, window_bounds = array<i64: 1, 16>}, {pipeline_mode = #tpu.pipeline_mode<synchronous>, transform_indices = @transform_5, window_bounds = array<i64: 1, 16>}, {pipeline_mode = #tpu.pipeline_mode<synchronous>, transform_indices = @transform_6, window_bounds = array<i64: 9, 16, 16>}, {pipeline_mode = #tpu.pipeline_mode<synchronous>, transform_indices = @transform_7, window_bounds = array<i64: 1, 16>}, {pipeline_mode = #tpu.pipeline_mode<synchronous>, transform_indices = @transform_8, window_bounds = array<i64: 1, 16>}, {pipeline_mode = #tpu.pipeline_mode<synchronous>, transform_indices = @transform_9, window_bounds = array<i64: 16, 64>}, {pipeline_mode = #tpu.pipeline_mode<synchronous>, transform_indices = @transform_10, window_bounds = array<i64: 1, 64>}, {pipeline_mode = #tpu.pipeline_mode<synchronous>, transform_indices = @transform_11, window_bounds = array<i64: 1, 64>}, {transform_indices = @transform_12, window_bounds = array<i64: 4, 8, 8, 64>}]} {
    %c0 = arith.constant 0 : index
    %c0_0 = arith.constant 0 : index
    %c0_1 = arith.constant 0 : index
    %c0_2 = arith.constant 0 : index
    %0 = vector.load %arg1[%c0, %c0_0, %c0_1, %c0_2] : memref<4x8x8x64xbf16, #tpu.memory_space<vmem>>, vector<4x8x8x64xbf16>
    %1 = vector.extract_strided_slice %0 {offsets = [0, 0, 0, 16], sizes = [4, 8, 8, 48], strides = [1, 1, 1, 1]} : vector<4x8x8x64xbf16> to vector<4x8x8x48xbf16>
    %2 = vector.shape_cast %1 : vector<4x8x8x48xbf16> to vector<256x48xbf16>
    %c0_3 = arith.constant 0 : index
    %c0_4 = arith.constant 0 : index
    %3 = vector.load %arg4[%c0_3, %c0_4] : memref<48x16xbf16, #tpu.memory_space<vmem>>, vector<48x16xbf16>
    %cst = arith.constant dense<0.000000e+00> : vector<256x16xf32>
    %4 = tpu.matmul %2, %3, %cst {dimension_numbers = #tpu.dot_dimension_numbers<[1], [0], [0], [1], [0, 0, 1, 1], [], []>} : vector<256x48xbf16>, vector<48x16xbf16>, vector<256x16xf32> -> vector<256x16xf32>
    %5 = vector.shape_cast %4 : vector<256x16xf32> to vector<4x64x16xf32>
    %6 = vector.extract_strided_slice %0 {offsets = [0, 0, 0, 0], sizes = [4, 8, 8, 8], strides = [1, 1, 1, 1]} : vector<4x8x8x64xbf16> to vector<4x8x8x8xbf16>
    %7 = vector.shape_cast %6 : vector<4x8x8x8xbf16> to vector<256x8xbf16>
    %c0_5 = arith.constant 0 : index
    %c0_6 = arith.constant 0 : index
    %8 = vector.load %arg2[%c0_5, %c0_6] : memref<8x16xbf16, #tpu.memory_space<vmem>>, vector<8x16xbf16>
    %cst_7 = arith.constant dense<0.000000e+00> : vector<256x16xf32>
    %9 = tpu.matmul %7, %8, %cst_7 {dimension_numbers = #tpu.dot_dimension_numbers<[1], [0], [0], [1], [0, 0, 1, 1], [], []>} : vector<256x8xbf16>, vector<8x16xbf16>, vector<256x16xf32> -> vector<256x16xf32>
    %10 = vector.shape_cast %9 : vector<256x16xf32> to vector<4x64x16xf32>
    %11 = vector.extract_strided_slice %0 {offsets = [0, 0, 0, 8], sizes = [4, 8, 8, 8], strides = [1, 1, 1, 1]} : vector<4x8x8x64xbf16> to vector<4x8x8x8xbf16>
    %12 = vector.shape_cast %11 : vector<4x8x8x8xbf16> to vector<256x8xbf16>
    %c0_8 = arith.constant 0 : index
    %c0_9 = arith.constant 0 : index
    %13 = vector.load %arg3[%c0_8, %c0_9] : memref<8x16xbf16, #tpu.memory_space<vmem>>, vector<8x16xbf16>
    %cst_10 = arith.constant dense<0.000000e+00> : vector<256x16xf32>
    %14 = tpu.matmul %12, %13, %cst_10 {dimension_numbers = #tpu.dot_dimension_numbers<[1], [0], [0], [1], [0, 0, 1, 1], [], []>} : vector<256x8xbf16>, vector<8x16xbf16>, vector<256x16xf32> -> vector<256x16xf32>
    %15 = vector.shape_cast %14 : vector<256x16xf32> to vector<4x64x16xf32>
    %cst_11 = arith.constant 0.000000e+00 : f32
    %16 = vector.broadcast %cst_11 : f32 to vector<1x64x16xf32>
    %17 = vector.extract_strided_slice %10 {offsets = [1, 0, 0], sizes = [3, 64, 16], strides = [1, 1, 1]} : vector<4x64x16xf32> to vector<3x64x16xf32>
    %18 = tpu.concatenate %17, %16 in 0 : vector<3x64x16xf32>, vector<1x64x16xf32> -> vector<4x64x16xf32>
    %19 = arith.addf %5, %18 : vector<4x64x16xf32>
    %20 = vector.extract_strided_slice %15 {offsets = [0, 0, 0], sizes = [3, 64, 16], strides = [1, 1, 1]} : vector<4x64x16xf32> to vector<3x64x16xf32>
    %21 = tpu.concatenate %16, %20 in 0 : vector<1x64x16xf32>, vector<3x64x16xf32> -> vector<4x64x16xf32>
    %22 = arith.addf %19, %21 : vector<4x64x16xf32>
    %23 = vector.shape_cast %22 : vector<4x64x16xf32> to vector<256x16xf32>
    %c0_12 = arith.constant 0 : index
    %c0_13 = arith.constant 0 : index
    %24 = vector.load %arg5[%c0_12, %c0_13] : memref<1x16xf32, #tpu.memory_space<vmem>>, vector<1x16xf32>
    %25 = vector.broadcast %24 : vector<1x16xf32> to vector<256x16xf32>
    %26 = arith.mulf %23, %25 : vector<256x16xf32>
    %c0_14 = arith.constant 0 : index
    %c0_15 = arith.constant 0 : index
    %27 = vector.load %arg6[%c0_14, %c0_15] : memref<1x16xf32, #tpu.memory_space<vmem>>, vector<1x16xf32>
    %28 = vector.broadcast %27 : vector<1x16xf32> to vector<256x16xf32>
    %29 = arith.addf %26, %28 : vector<256x16xf32>
    %cst_16 = arith.constant 0.000000e+00 : f32
    %30 = vector.broadcast %cst_16 : f32 to vector<256x16xf32>
    %31 = arith.maximumf %29, %30 : vector<256x16xf32>
    %32 = arith.truncf %31 : vector<256x16xf32> to vector<256x16xbf16>
    %cst_17 = arith.constant 0.000000e+00 : bf16
    %33 = vector.broadcast %cst_17 : bf16 to vector<4x1x25x16xbf16>
    %c0_18 = arith.constant 0 : index
    %c0_19 = arith.constant 0 : index
    %c0_20 = arith.constant 0 : index
    %c0_21 = arith.constant 0 : index
    %34 = vector.load %arg14[%c0_18, %c0_19, %c0_20, %c0_21] : memref<4x10x25x16xbf16, #tpu.memory_space<vmem>>, vector<4x1x25x16xbf16>
    tpu.vector_store %arg14[%c0_18, %c0_19, %c0_20, %c0_21], %33 {strides = array<i32>} : memref<4x10x25x16xbf16, #tpu.memory_space<vmem>>, vector<4x1x25x16xbf16>,
    %cst_22 = arith.constant 0.000000e+00 : bf16
    %35 = vector.broadcast %cst_22 : bf16 to vector<4x1x25x16xbf16>
    %c0_23 = arith.constant 0 : index
    %c9 = arith.constant 9 : index
    %c0_24 = arith.constant 0 : index
    %c0_25 = arith.constant 0 : index
    %36 = vector.load %arg14[%c0_23, %c9, %c0_24, %c0_25] : memref<4x10x25x16xbf16, #tpu.memory_space<vmem>>, vector<4x1x25x16xbf16>
    tpu.vector_store %arg14[%c0_23, %c9, %c0_24, %c0_25], %35 {strides = array<i32>} : memref<4x10x25x16xbf16, #tpu.memory_space<vmem>>, vector<4x1x25x16xbf16>,
    %cst_26 = arith.constant 0.000000e+00 : bf16
    %37 = vector.broadcast %cst_26 : bf16 to vector<4x8x1x16xbf16>
    %c0_27 = arith.constant 0 : index
    %c1 = arith.constant 1 : index
    %c15 = arith.constant 15 : index
    %c0_28 = arith.constant 0 : index
    %38 = vector.load %arg14[%c0_27, %c1, %c15, %c0_28] : memref<4x10x25x16xbf16, #tpu.memory_space<vmem>>, vector<4x8x1x16xbf16>
    tpu.vector_store %arg14[%c0_27, %c1, %c15, %c0_28], %37 {strides = array<i32>} : memref<4x10x25x16xbf16, #tpu.memory_space<vmem>>, vector<4x8x1x16xbf16>,
    %cst_29 = arith.constant 0.000000e+00 : bf16
    %39 = vector.broadcast %cst_29 : bf16 to vector<4x8x1x16xbf16>
    %c0_30 = arith.constant 0 : index
    %c1_31 = arith.constant 1 : index
    %c24 = arith.constant 24 : index
    %c0_32 = arith.constant 0 : index
    %40 = vector.load %arg14[%c0_30, %c1_31, %c24, %c0_32] : memref<4x10x25x16xbf16, #tpu.memory_space<vmem>>, vector<4x8x1x16xbf16>
    tpu.vector_store %arg14[%c0_30, %c1_31, %c24, %c0_32], %39 {strides = array<i32>} : memref<4x10x25x16xbf16, #tpu.memory_space<vmem>>, vector<4x8x1x16xbf16>,
    %41 = vector.shape_cast %32 : vector<256x16xbf16> to vector<4x8x8x16xbf16>
    %c0_33 = arith.constant 0 : index
    %c1_34 = arith.constant 1 : index
    %c16 = arith.constant 16 : index
    %c0_35 = arith.constant 0 : index
    %42 = vector.load %arg14[%c0_33, %c1_34, %c16, %c0_35] : memref<4x10x25x16xbf16, #tpu.memory_space<vmem>>, vector<4x8x8x16xbf16>
    tpu.vector_store %arg14[%c0_33, %c1_34, %c16, %c0_35], %41 {strides = array<i32>} : memref<4x10x25x16xbf16, #tpu.memory_space<vmem>>, vector<4x8x8x16xbf16>,
    %c0_36 = arith.constant 0 : index
    %c0_37 = arith.constant 0 : index
    %c15_38 = arith.constant 15 : index
    %c0_39 = arith.constant 0 : index
    %43 = vector.load %arg14[%c0_36, %c0_37, %c15_38, %c0_39] : memref<4x10x25x16xbf16, #tpu.memory_space<vmem>>, vector<4x10x8x16xbf16>
    %44 = vector.extract_strided_slice %43 {offsets = [0, 0, 0, 0], sizes = [4, 8, 8, 16], strides = [1, 1, 1, 1]} : vector<4x10x8x16xbf16> to vector<4x8x8x16xbf16>
    %45 = vector.shape_cast %44 : vector<4x8x8x16xbf16> to vector<256x16xbf16>
    %c0_40 = arith.constant 0 : index
    %c0_41 = arith.constant 0 : index
    %c0_42 = arith.constant 0 : index
    %46 = vector.load %arg7[%c0_40, %c0_41, %c0_42] : memref<9x16x16xbf16, #tpu.memory_space<vmem>>, vector<1x16x16xbf16>
    %47 = vector.shape_cast %46 : vector<1x16x16xbf16> to vector<16x16xbf16>
    %cst_43 = arith.constant dense<0.000000e+00> : vector<256x16xf32>
    %48 = tpu.matmul %45, %47, %cst_43 {dimension_numbers = #tpu.dot_dimension_numbers<[1], [0], [0], [1], [0, 0, 1, 1], [], []>} : vector<256x16xbf16>, vector<16x16xbf16>, vector<256x16xf32> -> vector<256x16xf32>
    %49 = vector.extract_strided_slice %43 {offsets = [0, 1, 0, 0], sizes = [4, 8, 8, 16], strides = [1, 1, 1, 1]} : vector<4x10x8x16xbf16> to vector<4x8x8x16xbf16>
    %50 = vector.shape_cast %49 : vector<4x8x8x16xbf16> to vector<256x16xbf16>
    %c3 = arith.constant 3 : index
    %c0_44 = arith.constant 0 : index
    %c0_45 = arith.constant 0 : index
    %51 = vector.load %arg7[%c3, %c0_44, %c0_45] : memref<9x16x16xbf16, #tpu.memory_space<vmem>>, vector<1x16x16xbf16>
    %52 = vector.shape_cast %51 : vector<1x16x16xbf16> to vector<16x16xbf16>
    %cst_46 = arith.constant dense<0.000000e+00> : vector<256x16xf32>
    %53 = tpu.matmul %50, %52, %cst_46 {dimension_numbers = #tpu.dot_dimension_numbers<[1], [0], [0], [1], [0, 0, 1, 1], [], []>} : vector<256x16xbf16>, vector<16x16xbf16>, vector<256x16xf32> -> vector<256x16xf32>
    %54 = arith.addf %48, %53 : vector<256x16xf32>
    %55 = vector.extract_strided_slice %43 {offsets = [0, 2, 0, 0], sizes = [4, 8, 8, 16], strides = [1, 1, 1, 1]} : vector<4x10x8x16xbf16> to vector<4x8x8x16xbf16>
    %56 = vector.shape_cast %55 : vector<4x8x8x16xbf16> to vector<256x16xbf16>
    %c6 = arith.constant 6 : index
    %c0_47 = arith.constant 0 : index
    %c0_48 = arith.constant 0 : index
    %57 = vector.load %arg7[%c6, %c0_47, %c0_48] : memref<9x16x16xbf16, #tpu.memory_space<vmem>>, vector<1x16x16xbf16>
    %58 = vector.shape_cast %57 : vector<1x16x16xbf16> to vector<16x16xbf16>
    %cst_49 = arith.constant dense<0.000000e+00> : vector<256x16xf32>
    %59 = tpu.matmul %56, %58, %cst_49 {dimension_numbers = #tpu.dot_dimension_numbers<[1], [0], [0], [1], [0, 0, 1, 1], [], []>} : vector<256x16xbf16>, vector<16x16xbf16>, vector<256x16xf32> -> vector<256x16xf32>
    %60 = arith.addf %54, %59 : vector<256x16xf32>
    %c0_50 = arith.constant 0 : index
    %c0_51 = arith.constant 0 : index
    %c16_52 = arith.constant 16 : index
    %c0_53 = arith.constant 0 : index
    %61 = vector.load %arg14[%c0_50, %c0_51, %c16_52, %c0_53] : memref<4x10x25x16xbf16, #tpu.memory_space<vmem>>, vector<4x10x8x16xbf16>
    %62 = vector.extract_strided_slice %61 {offsets = [0, 0, 0, 0], sizes = [4, 8, 8, 16], strides = [1, 1, 1, 1]} : vector<4x10x8x16xbf16> to vector<4x8x8x16xbf16>
    %63 = vector.shape_cast %62 : vector<4x8x8x16xbf16> to vector<256x16xbf16>
    %c1_54 = arith.constant 1 : index
    %c0_55 = arith.constant 0 : index
    %c0_56 = arith.constant 0 : index
    %64 = vector.load %arg7[%c1_54, %c0_55, %c0_56] : memref<9x16x16xbf16, #tpu.memory_space<vmem>>, vector<1x16x16xbf16>
    %65 = vector.shape_cast %64 : vector<1x16x16xbf16> to vector<16x16xbf16>
    %cst_57 = arith.constant dense<0.000000e+00> : vector<256x16xf32>
    %66 = tpu.matmul %63, %65, %cst_57 {dimension_numbers = #tpu.dot_dimension_numbers<[1], [0], [0], [1], [0, 0, 1, 1], [], []>} : vector<256x16xbf16>, vector<16x16xbf16>, vector<256x16xf32> -> vector<256x16xf32>
    %67 = arith.addf %60, %66 : vector<256x16xf32>
    %68 = vector.extract_strided_slice %61 {offsets = [0, 1, 0, 0], sizes = [4, 8, 8, 16], strides = [1, 1, 1, 1]} : vector<4x10x8x16xbf16> to vector<4x8x8x16xbf16>
    %69 = vector.shape_cast %68 : vector<4x8x8x16xbf16> to vector<256x16xbf16>
    %c4 = arith.constant 4 : index
    %c0_58 = arith.constant 0 : index
    %c0_59 = arith.constant 0 : index
    %70 = vector.load %arg7[%c4, %c0_58, %c0_59] : memref<9x16x16xbf16, #tpu.memory_space<vmem>>, vector<1x16x16xbf16>
    %71 = vector.shape_cast %70 : vector<1x16x16xbf16> to vector<16x16xbf16>
    %cst_60 = arith.constant dense<0.000000e+00> : vector<256x16xf32>
    %72 = tpu.matmul %69, %71, %cst_60 {dimension_numbers = #tpu.dot_dimension_numbers<[1], [0], [0], [1], [0, 0, 1, 1], [], []>} : vector<256x16xbf16>, vector<16x16xbf16>, vector<256x16xf32> -> vector<256x16xf32>
    %73 = arith.addf %67, %72 : vector<256x16xf32>
    %74 = vector.extract_strided_slice %61 {offsets = [0, 2, 0, 0], sizes = [4, 8, 8, 16], strides = [1, 1, 1, 1]} : vector<4x10x8x16xbf16> to vector<4x8x8x16xbf16>
    %75 = vector.shape_cast %74 : vector<4x8x8x16xbf16> to vector<256x16xbf16>
    %c7 = arith.constant 7 : index
    %c0_61 = arith.constant 0 : index
    %c0_62 = arith.constant 0 : index
    %76 = vector.load %arg7[%c7, %c0_61, %c0_62] : memref<9x16x16xbf16, #tpu.memory_space<vmem>>, vector<1x16x16xbf16>
    %77 = vector.shape_cast %76 : vector<1x16x16xbf16> to vector<16x16xbf16>
    %cst_63 = arith.constant dense<0.000000e+00> : vector<256x16xf32>
    %78 = tpu.matmul %75, %77, %cst_63 {dimension_numbers = #tpu.dot_dimension_numbers<[1], [0], [0], [1], [0, 0, 1, 1], [], []>} : vector<256x16xbf16>, vector<16x16xbf16>, vector<256x16xf32> -> vector<256x16xf32>
    %79 = arith.addf %73, %78 : vector<256x16xf32>
    %c0_64 = arith.constant 0 : index
    %c0_65 = arith.constant 0 : index
    %c17 = arith.constant 17 : index
    %c0_66 = arith.constant 0 : index
    %80 = vector.load %arg14[%c0_64, %c0_65, %c17, %c0_66] : memref<4x10x25x16xbf16, #tpu.memory_space<vmem>>, vector<4x10x8x16xbf16>
    %81 = vector.extract_strided_slice %80 {offsets = [0, 0, 0, 0], sizes = [4, 8, 8, 16], strides = [1, 1, 1, 1]} : vector<4x10x8x16xbf16> to vector<4x8x8x16xbf16>
    %82 = vector.shape_cast %81 : vector<4x8x8x16xbf16> to vector<256x16xbf16>
    %c2 = arith.constant 2 : index
    %c0_67 = arith.constant 0 : index
    %c0_68 = arith.constant 0 : index
    %83 = vector.load %arg7[%c2, %c0_67, %c0_68] : memref<9x16x16xbf16, #tpu.memory_space<vmem>>, vector<1x16x16xbf16>
    %84 = vector.shape_cast %83 : vector<1x16x16xbf16> to vector<16x16xbf16>
    %cst_69 = arith.constant dense<0.000000e+00> : vector<256x16xf32>
    %85 = tpu.matmul %82, %84, %cst_69 {dimension_numbers = #tpu.dot_dimension_numbers<[1], [0], [0], [1], [0, 0, 1, 1], [], []>} : vector<256x16xbf16>, vector<16x16xbf16>, vector<256x16xf32> -> vector<256x16xf32>
    %86 = arith.addf %79, %85 : vector<256x16xf32>
    %87 = vector.extract_strided_slice %80 {offsets = [0, 1, 0, 0], sizes = [4, 8, 8, 16], strides = [1, 1, 1, 1]} : vector<4x10x8x16xbf16> to vector<4x8x8x16xbf16>
    %88 = vector.shape_cast %87 : vector<4x8x8x16xbf16> to vector<256x16xbf16>
    %c5 = arith.constant 5 : index
    %c0_70 = arith.constant 0 : index
    %c0_71 = arith.constant 0 : index
    %89 = vector.load %arg7[%c5, %c0_70, %c0_71] : memref<9x16x16xbf16, #tpu.memory_space<vmem>>, vector<1x16x16xbf16>
    %90 = vector.shape_cast %89 : vector<1x16x16xbf16> to vector<16x16xbf16>
    %cst_72 = arith.constant dense<0.000000e+00> : vector<256x16xf32>
    %91 = tpu.matmul %88, %90, %cst_72 {dimension_numbers = #tpu.dot_dimension_numbers<[1], [0], [0], [1], [0, 0, 1, 1], [], []>} : vector<256x16xbf16>, vector<16x16xbf16>, vector<256x16xf32> -> vector<256x16xf32>
    %92 = arith.addf %86, %91 : vector<256x16xf32>
    %93 = vector.extract_strided_slice %80 {offsets = [0, 2, 0, 0], sizes = [4, 8, 8, 16], strides = [1, 1, 1, 1]} : vector<4x10x8x16xbf16> to vector<4x8x8x16xbf16>
    %94 = vector.shape_cast %93 : vector<4x8x8x16xbf16> to vector<256x16xbf16>
    %c8 = arith.constant 8 : index
    %c0_73 = arith.constant 0 : index
    %c0_74 = arith.constant 0 : index
    %95 = vector.load %arg7[%c8, %c0_73, %c0_74] : memref<9x16x16xbf16, #tpu.memory_space<vmem>>, vector<1x16x16xbf16>
    %96 = vector.shape_cast %95 : vector<1x16x16xbf16> to vector<16x16xbf16>
    %cst_75 = arith.constant dense<0.000000e+00> : vector<256x16xf32>
    %97 = tpu.matmul %94, %96, %cst_75 {dimension_numbers = #tpu.dot_dimension_numbers<[1], [0], [0], [1], [0, 0, 1, 1], [], []>} : vector<256x16xbf16>, vector<16x16xbf16>, vector<256x16xf32> -> vector<256x16xf32>
    %98 = arith.addf %92, %97 : vector<256x16xf32>
    %c0_76 = arith.constant 0 : index
    %c0_77 = arith.constant 0 : index
    %99 = vector.load %arg8[%c0_76, %c0_77] : memref<1x16xf32, #tpu.memory_space<vmem>>, vector<1x16xf32>
    %100 = vector.broadcast %99 : vector<1x16xf32> to vector<256x16xf32>
    %101 = arith.mulf %98, %100 : vector<256x16xf32>
    %c0_78 = arith.constant 0 : index
    %c0_79 = arith.constant 0 : index
    %102 = vector.load %arg9[%c0_78, %c0_79] : memref<1x16xf32, #tpu.memory_space<vmem>>, vector<1x16xf32>
    %103 = vector.broadcast %102 : vector<1x16xf32> to vector<256x16xf32>
    %104 = arith.addf %101, %103 : vector<256x16xf32>
    %cst_80 = arith.constant 0.000000e+00 : f32
    %105 = vector.broadcast %cst_80 : f32 to vector<256x16xf32>
    %106 = arith.maximumf %104, %105 : vector<256x16xf32>
    %107 = arith.truncf %106 : vector<256x16xf32> to vector<256x16xbf16>
    %c0_81 = arith.constant 0 : index
    %c0_82 = arith.constant 0 : index
    %108 = vector.load %arg10[%c0_81, %c0_82] : memref<16x64xbf16, #tpu.memory_space<vmem>>, vector<16x64xbf16>
    %cst_83 = arith.constant dense<0.000000e+00> : vector<256x64xf32>
    %109 = tpu.matmul %107, %108, %cst_83 {dimension_numbers = #tpu.dot_dimension_numbers<[1], [0], [0], [1], [0, 0, 1, 1], [], []>} : vector<256x16xbf16>, vector<16x64xbf16>, vector<256x64xf32> -> vector<256x64xf32>
    %c0_84 = arith.constant 0 : index
    %c0_85 = arith.constant 0 : index
    %110 = vector.load %arg11[%c0_84, %c0_85] : memref<1x64xf32, #tpu.memory_space<vmem>>, vector<1x64xf32>
    %111 = vector.broadcast %110 : vector<1x64xf32> to vector<256x64xf32>
    %112 = arith.mulf %109, %111 : vector<256x64xf32>
    %c0_86 = arith.constant 0 : index
    %c0_87 = arith.constant 0 : index
    %113 = vector.load %arg12[%c0_86, %c0_87] : memref<1x64xf32, #tpu.memory_space<vmem>>, vector<1x64xf32>
    %114 = vector.broadcast %113 : vector<1x64xf32> to vector<256x64xf32>
    %115 = arith.addf %112, %114 : vector<256x64xf32>
    %116 = vector.shape_cast %0 : vector<4x8x8x64xbf16> to vector<256x64xbf16>
    %117 = arith.extf %116 : vector<256x64xbf16> to vector<256x64xf32>
    %118 = arith.addf %115, %117 : vector<256x64xf32>
    %cst_88 = arith.constant 0.000000e+00 : f32
    %119 = vector.broadcast %cst_88 : f32 to vector<256x64xf32>
    %120 = arith.maximumf %118, %119 : vector<256x64xf32>
    %121 = vector.shape_cast %120 : vector<256x64xf32> to vector<4x8x8x64xf32>
    %122 = arith.truncf %121 : vector<4x8x8x64xf32> to vector<4x8x8x64xbf16>
    %c0_89 = arith.constant 0 : index
    %c0_90 = arith.constant 0 : index
    %c0_91 = arith.constant 0 : index
    %c0_92 = arith.constant 0 : index
    %123 = vector.load %arg13[%c0_89, %c0_90, %c0_91, %c0_92] : memref<4x8x8x64xbf16, #tpu.memory_space<vmem>>, vector<4x8x8x64xbf16>
    tpu.vector_store %arg13[%c0_89, %c0_90, %c0_91, %c0_92], %122 {strides = array<i32>} : memref<4x8x8x64xbf16, #tpu.memory_space<vmem>>, vector<4x8x8x64xbf16>,
    return
  }
  func.func @transform_0(%arg0: i32) -> (i32, i32, i32, i32) {
    %c0_i32 = arith.constant 0 : i32
    %c0_i32_0 = arith.constant 0 : i32
    %c0_i32_1 = arith.constant 0 : i32
    %c0_i32_2 = arith.constant 0 : i32
    return %arg0, %c0_i32, %c0_i32_0, %c0_i32_1 : i32, i32, i32, i32
  }
  func.func @transform_1(%arg0: i32) -> (i32, i32) {
    %c0_i32 = arith.constant 0 : i32
    %c0_i32_0 = arith.constant 0 : i32
    %c0_i32_1 = arith.constant 0 : i32
    return %c0_i32, %c0_i32_0 : i32, i32
  }
  func.func @transform_2(%arg0: i32) -> (i32, i32) {
    %c0_i32 = arith.constant 0 : i32
    %c0_i32_0 = arith.constant 0 : i32
    %c0_i32_1 = arith.constant 0 : i32
    return %c0_i32, %c0_i32_0 : i32, i32
  }
  func.func @transform_3(%arg0: i32) -> (i32, i32) {
    %c0_i32 = arith.constant 0 : i32
    %c0_i32_0 = arith.constant 0 : i32
    %c0_i32_1 = arith.constant 0 : i32
    return %c0_i32, %c0_i32_0 : i32, i32
  }
  func.func @transform_4(%arg0: i32) -> (i32, i32) {
    %c0_i32 = arith.constant 0 : i32
    %c0_i32_0 = arith.constant 0 : i32
    %c0_i32_1 = arith.constant 0 : i32
    return %c0_i32, %c0_i32_0 : i32, i32
  }
  func.func @transform_5(%arg0: i32) -> (i32, i32) {
    %c0_i32 = arith.constant 0 : i32
    %c0_i32_0 = arith.constant 0 : i32
    %c0_i32_1 = arith.constant 0 : i32
    return %c0_i32, %c0_i32_0 : i32, i32
  }
  func.func @transform_6(%arg0: i32) -> (i32, i32, i32) {
    %c0_i32 = arith.constant 0 : i32
    %c0_i32_0 = arith.constant 0 : i32
    %c0_i32_1 = arith.constant 0 : i32
    %c0_i32_2 = arith.constant 0 : i32
    return %c0_i32, %c0_i32_0, %c0_i32_1 : i32, i32, i32
  }
  func.func @transform_7(%arg0: i32) -> (i32, i32) {
    %c0_i32 = arith.constant 0 : i32
    %c0_i32_0 = arith.constant 0 : i32
    %c0_i32_1 = arith.constant 0 : i32
    return %c0_i32, %c0_i32_0 : i32, i32
  }
  func.func @transform_8(%arg0: i32) -> (i32, i32) {
    %c0_i32 = arith.constant 0 : i32
    %c0_i32_0 = arith.constant 0 : i32
    %c0_i32_1 = arith.constant 0 : i32
    return %c0_i32, %c0_i32_0 : i32, i32
  }
  func.func @transform_9(%arg0: i32) -> (i32, i32) {
    %c0_i32 = arith.constant 0 : i32
    %c0_i32_0 = arith.constant 0 : i32
    %c0_i32_1 = arith.constant 0 : i32
    return %c0_i32, %c0_i32_0 : i32, i32
  }
  func.func @transform_10(%arg0: i32) -> (i32, i32) {
    %c0_i32 = arith.constant 0 : i32
    %c0_i32_0 = arith.constant 0 : i32
    %c0_i32_1 = arith.constant 0 : i32
    return %c0_i32, %c0_i32_0 : i32, i32
  }
  func.func @transform_11(%arg0: i32) -> (i32, i32) {
    %c0_i32 = arith.constant 0 : i32
    %c0_i32_0 = arith.constant 0 : i32
    %c0_i32_1 = arith.constant 0 : i32
    return %c0_i32, %c0_i32_0 : i32, i32
  }
  func.func @transform_12(%arg0: i32) -> (i32, i32, i32, i32) {
    %c0_i32 = arith.constant 0 : i32
    %c0_i32_0 = arith.constant 0 : i32
    %c0_i32_1 = arith.constant 0 : i32
    %c0_i32_2 = arith.constant 0 : i32
    return %arg0, %c0_i32, %c0_i32_0, %c0_i32_1 : i32, i32, i32, i32
  }
}

</mosaic_0001>

<llo_original>
// kernel: tpu_custom_call.1
$region0: #{tpu_custom_call.1}
  #allocation0 [shape = 'u32[]', space=smem, size = 0x4, offset = 0x4, fixed_abs, tag = 'smem constant byte address 0x4 - core index']
  #allocation1 [shape = 'u32[72,128]{1,0:T(1,128)}', space=vmem, size = 0x9000, scoped, tag = 'internal scratch']
  #allocation2 [shape = 'bf16[4,10,25,16]{3,2,1,0:T(8,128)(2,1)}', space=vmem, size = 0x50000, scoped, tag = 'scratch operand']
  %s0 = inlined_call_operand.hbm [shape: bf16[8,8,8,64], index: 0, kind: input, shape index: {}]
  %s1 = inlined_call_operand.vmem [shape: bf16[8,16], index: 1, kind: input, shape index: {}]
  %s2 = inlined_call_operand.vmem [shape: bf16[8,16], index: 2, kind: input, shape index: {}]
  %s3 = inlined_call_operand.vmem [shape: bf16[48,16], index: 3, kind: input, shape index: {}]
  %s4 = inlined_call_operand.vmem [shape: f32[1,16], index: 4, kind: input, shape index: {}]
  %s5 = inlined_call_operand.vmem [shape: f32[1,16], index: 5, kind: input, shape index: {}]
  %s6 = inlined_call_operand.hbm [shape: bf16[9,16,16], index: 6, kind: input, shape index: {}]
  %s7 = inlined_call_operand.vmem [shape: f32[1,16], index: 7, kind: input, shape index: {}]
  %s8 = inlined_call_operand.vmem [shape: f32[1,16], index: 8, kind: input, shape index: {}]
  %s9 = inlined_call_operand.vmem [shape: bf16[16,64], index: 9, kind: input, shape index: {}]
  %s10 = inlined_call_operand.vmem [shape: f32[1,64], index: 10, kind: input, shape index: {}]
  %s11 = inlined_call_operand.vmem [shape: f32[1,64], index: 11, kind: input, shape index: {}]
  %s12 = inlined_call_operand.hbm [shape: bf16[8,8,8,64], index: 12, kind: output, shape index: {}]
  %s13 = sld [smem:[#allocation0]]
  $region89: #{tpu_custom_call.1} parent=0
    _
  %s15 = ssub.s32 1, %s13
  %s16 = scalar_select 0, %s15, %s13
  $region1: #{tpu_custom_call.1} parent=0
    #allocation3 [shape = 'u8[131072]{0}', space=vmem, size = 0x20000, scoped, tag = 'input window, operand 0']
    #allocation4 [shape = 's32[2]{0}', space=sflag, size = 0x8, scoped, tag = 'scoped memory for tpu_custom_call.1']
    #allocation5 [shape = 's32[2]{0}', space=sflag, size = 0x8, scoped, tag = 'scoped memory for tpu_custom_call.1']
    #allocation6 [shape = 'u8[36864]{0}', space=vmem, size = 0x9000, scoped, tag = 'input window, operand 6, single buffered']
    #allocation7 [shape = 's32[1]{0}', space=sflag, size = 0x4, scoped, tag = 'scoped memory for tpu_custom_call.1']
    #allocation8 [shape = 'u8[131072]{0}', space=vmem, size = 0x20000, scoped, tag = 'output window, operand 0']
    %17 = vsyncpa [#allocation4], 0
    %s18 = scalar_lea.sflag [#allocation4], 1
    %19 = vsyncpa %s18, 0
    %20 = vsyncpa [#allocation7], 0
    %21 = vsyncpa [#allocation5], 0
    %s22 = scalar_lea.sflag [#allocation5], 1
    %23 = vsyncpa %s22, 0
    loop: start=0, step=1, limit=4
    $region2: #{tpu_custom_call.1} parent=1 // loop_pre_header
      _
    $region3: #{tpu_custom_call.1} parent=1 // loop_header
      %s25 = sphi 0, %s29
      %p26 = scmp.ge.s32.totalorder %s25, 4
      %s35 = sphi 0, %s37
      %s38 = sphi 0, %s35
      %s39 = sphi 0, %s38
      %s55 = sphi 0, %s39
      %s59 = sphi 0, %s59
      %s61 = sphi 0, %s59
      %s62 = sphi 0, %s61
      %s76 = sphi 0, %s62
      %s80 = sphi 0, %s80
      %s82 = sphi 0, %s80
      %s83 = sphi 0, %s82
      %s97 = sphi 0, %s83
      %s101 = sphi 0, %s101
      %s103 = sphi 0, %s101
      %s104 = sphi 0, %s103
      %s118 = sphi 0, %s104
      %s122 = sphi 0, %s122
      %s124 = sphi 0, %s122
      %s125 = sphi 0, %s124
      %s139 = sphi 0, %s125
      %s143 = sphi 0, %s143
      %s145 = sphi 0, %s143
      %s146 = sphi 0, %s145
      %s160 = sphi 0, %s146
      %s164 = sphi 0, %s164
      %s166 = sphi 0, %s164
      %s167 = sphi 0, %s166
      %s181 = sphi 0, %s167
      %s185 = sphi 0, %s185
      %s187 = sphi 0, %s185
      %s188 = sphi 0, %s187
      %s202 = sphi 0, %s188
      %s206 = sphi 0, %s206
      %s208 = sphi 0, %s206
      %s209 = sphi 0, %s208
      %s223 = sphi 0, %s209
      %s227 = sphi 0, %s227
      %s229 = sphi 0, %s227
      %s230 = sphi 0, %s229
      %s244 = sphi 0, %s230
      %s248 = sphi 0, %s248
      %s250 = sphi 0, %s248
      %s251 = sphi 0, %s250
      %s265 = sphi 0, %s251
      %s269 = sphi 0, %s269
      %s271 = sphi 0, %s269
      %s272 = sphi 0, %s271
      %s286 = sphi 0, %s272
      %s292 = sphi 0, %s294
      %s295 = sphi 0, %s292
      %s296 = sphi 0, %s295
      %s312 = sphi 0, %s296
    $region4: #{tpu_custom_call.1} parent=1 // loop_header_branch
      %28 = sbr.rel (%p26) target = $region8
    $region5: #{tpu_custom_call.1} parent=1 // loop_body
      %s30 = ssub.s32 %s25, 1
      %s31 = ssub.s32 %s25, 2
      %s32 = sadd.s32 %s25, 1
      %s33 = ssub.s32 %s25, %s32
      %p34 = scmp.eq.s32.totalorder %s33, 0
      %s36 = sadd.s32 %s35, 1
      %s37 = scalar_select %p34, %s35, %s36
      %p40 = pneg %p34
      %p41 = scmp.eq.s32.totalorder %s25, 1
      %p42 = por %p40, %p41
      %p43 = scmp.ne.s32.totalorder %s35, %s38
      %p44 = scmp.eq.s32.totalorder %s25, 0
      %p45 = por %p43, %p44
      %p46 = scmp.ne.s32.totalorder %s35, %s38
      %p47 = scmp.eq.s32.totalorder %s30, 1
      %p48 = por %p46, %p47
      %p49 = scmp.ne.s32.totalorder %s38, %s39
      %p50 = scmp.eq.s32.totalorder %s30, 0
      %p51 = por %p49, %p50
      %p52 = scmp.ne.s32.totalorder %s38, %s39
      %p53 = scmp.eq.s32.totalorder %s31, 1
      %p54 = por %p52, %p53
      %p56 = scmp.ne.s32.totalorder %s39, %s55
      %p57 = scmp.eq.s32.totalorder %s31, 0
      %p58 = por %p56, %p57
      %s60 = sadd.s32 %s59, 1
      %p63 = scmp.eq.s32.totalorder %s25, 1
      %p64 = scmp.ne.s32.totalorder %s59, %s61
      %p65 = scmp.eq.s32.totalorder %s25, 0
      %p66 = por %p64, %p65
      %p67 = scmp.ne.s32.totalorder %s59, %s61
      %p68 = scmp.eq.s32.totalorder %s30, 1
      %p69 = por %p67, %p68
      %p70 = scmp.ne.s32.totalorder %s61, %s62
      %p71 = scmp.eq.s32.totalorder %s30, 0
      %p72 = por %p70, %p71
      %p73 = scmp.ne.s32.totalorder %s61, %s62
      %p74 = scmp.eq.s32.totalorder %s31, 1
      %p75 = por %p73, %p74
      %p77 = scmp.ne.s32.totalorder %s62, %s76
      %p78 = scmp.eq.s32.totalorder %s31, 0
      %p79 = por %p77, %p78
      %s81 = sadd.s32 %s80, 1
      %p84 = scmp.eq.s32.totalorder %s25, 1
      %p85 = scmp.ne.s32.totalorder %s80, %s82
      %p86 = scmp.eq.s32.totalorder %s25, 0
      %p87 = por %p85, %p86
      %p88 = scmp.ne.s32.totalorder %s80, %s82
      %p89 = scmp.eq.s32.totalorder %s30, 1
      %p90 = por %p88, %p89
      %p91 = scmp.ne.s32.totalorder %s82, %s83
      %p92 = scmp.eq.s32.totalorder %s30, 0
      %p93 = por %p91, %p92
      %p94 = scmp.ne.s32.totalorder %s82, %s83
      %p95 = scmp.eq.s32.totalorder %s31, 1
      %p96 = por %p94, %p95
      %p98 = scmp.ne.s32.totalorder %s83, %s97
      %p99 = scmp.eq.s32.totalorder %s31, 0
      %p100 = por %p98, %p99
      %s102 = sadd.s32 %s101, 1
      %p105 = scmp.eq.s32.totalorder %s25, 1
      %p106 = scmp.ne.s32.totalorder %s101, %s103
      %p107 = scmp.eq.s32.totalorder %s25, 0
      %p108 = por %p106, %p107
      %p109 = scmp.ne.s32.totalorder %s101, %s103
      %p110 = scmp.eq.s32.totalorder %s30, 1
      %p111 = por %p109, %p110
      %p112 = scmp.ne.s32.totalorder %s103, %s104
      %p113 = scmp.eq.s32.totalorder %s30, 0
      %p114 = por %p112, %p113
      %p115 = scmp.ne.s32.totalorder %s103, %s104
      %p116 = scmp.eq.s32.totalorder %s31, 1
      %p117 = por %p115, %p116
      %p119 = scmp.ne.s32.totalorder %s104, %s118
      %p120 = scmp.eq.s32.totalorder %s31, 0
      %p121 = por %p119, %p120
      %s123 = sadd.s32 %s122, 1
      %p126 = scmp.eq.s32.totalorder %s25, 1
      %p127 = scmp.ne.s32.totalorder %s122, %s124
      %p128 = scmp.eq.s32.totalorder %s25, 0
      %p129 = por %p127, %p128
      %p130 = scmp.ne.s32.totalorder %s122, %s124
      %p131 = scmp.eq.s32.totalorder %s30, 1
      %p132 = por %p130, %p131
      %p133 = scmp.ne.s32.totalorder %s124, %s125
      %p134 = scmp.eq.s32.totalorder %s30, 0
      %p135 = por %p133, %p134
      %p136 = scmp.ne.s32.totalorder %s124, %s125
      %p137 = scmp.eq.s32.totalorder %s31, 1
      %p138 = por %p136, %p137
      %p140 = scmp.ne.s32.totalorder %s125, %s139
      %p141 = scmp.eq.s32.totalorder %s31, 0
      %p142 = por %p140, %p141
      %s144 = sadd.s32 %s143, 1
      %p147 = scmp.eq.s32.totalorder %s25, 1
      %p148 = scmp.ne.s32.totalorder %s143, %s145
      %p149 = scmp.eq.s32.totalorder %s25, 0
      %p150 = por %p148, %p149
      %p151 = scmp.ne.s32.totalorder %s143, %s145
      %p152 = scmp.eq.s32.totalorder %s30, 1
      %p153 = por %p151, %p152
      %p154 = scmp.ne.s32.totalorder %s145, %s146
      %p155 = scmp.eq.s32.totalorder %s30, 0
      %p156 = por %p154, %p155
      %p157 = scmp.ne.s32.totalorder %s145, %s146
      %p158 = scmp.eq.s32.totalorder %s31, 1
      %p159 = por %p157, %p158
      %p161 = scmp.ne.s32.totalorder %s146, %s160
      %p162 = scmp.eq.s32.totalorder %s31, 0
      %p163 = por %p161, %p162
      %s165 = sadd.s32 %s164, 1
      %p168 = scmp.eq.s32.totalorder %s25, 1
      %p169 = scmp.ne.s32.totalorder %s164, %s166
      %p170 = scmp.eq.s32.totalorder %s25, 0
      %p171 = por %p169, %p170
      %p172 = scmp.ne.s32.totalorder %s164, %s166
      %p173 = scmp.eq.s32.totalorder %s30, 1
      %p174 = por %p172, %p173
      %p175 = scmp.ne.s32.totalorder %s166, %s167
      %p176 = scmp.eq.s32.totalorder %s30, 0
      %p177 = por %p175, %p176
      %p178 = scmp.ne.s32.totalorder %s166, %s167
      %p179 = scmp.eq.s32.totalorder %s31, 1
      %p180 = por %p178, %p179
      %p182 = scmp.ne.s32.totalorder %s167, %s181
      %p183 = scmp.eq.s32.totalorder %s31, 0
      %p184 = por %p182, %p183
      %s186 = sadd.s32 %s185, 1
      %p189 = scmp.eq.s32.totalorder %s25, 1
      %p190 = scmp.ne.s32.totalorder %s185, %s187
      %p191 = scmp.eq.s32.totalorder %s25, 0
      %p192 = por %p190, %p191
      %p193 = scmp.ne.s32.totalorder %s185, %s187
      %p194 = scmp.eq.s32.totalorder %s30, 1
      %p195 = por %p193, %p194
      %p196 = scmp.ne.s32.totalorder %s187, %s188
      %p197 = scmp.eq.s32.totalorder %s30, 0
      %p198 = por %p196, %p197
      %p199 = scmp.ne.s32.totalorder %s187, %s188
      %p200 = scmp.eq.s32.totalorder %s31, 1
      %p201 = por %p199, %p200
      %p203 = scmp.ne.s32.totalorder %s188, %s202
      %p204 = scmp.eq.s32.totalorder %s31, 0
      %p205 = por %p203, %p204
      %s207 = sadd.s32 %s206, 1
      %p210 = scmp.eq.s32.totalorder %s25, 1
      %p211 = scmp.ne.s32.totalorder %s206, %s208
      %p212 = scmp.eq.s32.totalorder %s25, 0
      %p213 = por %p211, %p212
      %p214 = scmp.ne.s32.totalorder %s206, %s208
      %p215 = scmp.eq.s32.totalorder %s30, 1
      %p216 = por %p214, %p215
      %p217 = scmp.ne.s32.totalorder %s208, %s209
      %p218 = scmp.eq.s32.totalorder %s30, 0
      %p219 = por %p217, %p218
      %p220 = scmp.ne.s32.totalorder %s208, %s209
      %p221 = scmp.eq.s32.totalorder %s31, 1
      %p222 = por %p220, %p221
      %p224 = scmp.ne.s32.totalorder %s209, %s223
      %p225 = scmp.eq.s32.totalorder %s31, 0
      %p226 = por %p224, %p225
      %s228 = sadd.s32 %s227, 1
      %p231 = scmp.eq.s32.totalorder %s25, 1
      %p232 = scmp.ne.s32.totalorder %s227, %s229
      %p233 = scmp.eq.s32.totalorder %s25, 0
      %p234 = por %p232, %p233
      %p235 = scmp.ne.s32.totalorder %s227, %s229
      %p236 = scmp.eq.s32.totalorder %s30, 1
      %p237 = por %p235, %p236
      %p238 = scmp.ne.s32.totalorder %s229, %s230
      %p239 = scmp.eq.s32.totalorder %s30, 0
      %p240 = por %p238, %p239
      %p241 = scmp.ne.s32.totalorder %s229, %s230
      %p242 = scmp.eq.s32.totalorder %s31, 1
      %p243 = por %p241, %p242
      %p245 = scmp.ne.s32.totalorder %s230, %s244
      %p246 = scmp.eq.s32.totalorder %s31, 0
      %p247 = por %p245, %p246
      %s249 = sadd.s32 %s248, 1
      %p252 = scmp.eq.s32.totalorder %s25, 1
      %p253 = scmp.ne.s32.totalorder %s248, %s250
      %p254 = scmp.eq.s32.totalorder %s25, 0
      %p255 = por %p253, %p254
      %p256 = scmp.ne.s32.totalorder %s248, %s250
      %p257 = scmp.eq.s32.totalorder %s30, 1
      %p258 = por %p256, %p257
      %p259 = scmp.ne.s32.totalorder %s250, %s251
      %p260 = scmp.eq.s32.totalorder %s30, 0
      %p261 = por %p259, %p260
      %p262 = scmp.ne.s32.totalorder %s250, %s251
      %p263 = scmp.eq.s32.totalorder %s31, 1
      %p264 = por %p262, %p263
      %p266 = scmp.ne.s32.totalorder %s251, %s265
      %p267 = scmp.eq.s32.totalorder %s31, 0
      %p268 = por %p266, %p267
      %s270 = sadd.s32 %s269, 1
      %p273 = scmp.eq.s32.totalorder %s25, 1
      %p274 = scmp.ne.s32.totalorder %s269, %s271
      %p275 = scmp.eq.s32.totalorder %s25, 0
      %p276 = por %p274, %p275
      %p277 = scmp.ne.s32.totalorder %s269, %s271
      %p278 = scmp.eq.s32.totalorder %s30, 1
      %p279 = por %p277, %p278
      %p280 = scmp.ne.s32.totalorder %s271, %s272
      %p281 = scmp.eq.s32.totalorder %s30, 0
      %p282 = por %p280, %p281
      %p283 = scmp.ne.s32.totalorder %s271, %s272
      %p284 = scmp.eq.s32.totalorder %s31, 1
      %p285 = por %p283, %p284
      %p287 = scmp.ne.s32.totalorder %s272, %s286
      %p288 = scmp.eq.s32.totalorder %s31, 0
      %p289 = por %p287, %p288
      %s290 = ssub.s32 %s25, %s32
      %p291 = scmp.eq.s32.totalorder %s290, 0
      %s293 = sadd.s32 %s292, 1
      %s294 = scalar_select %p291, %s292, %s293
      %p297 = pneg %p291
      %p298 = scmp.eq.s32.totalorder %s25, 1
      %p299 = por %p297, %p298
      %p300 = scmp.ne.s32.totalorder %s292, %s295
      %p301 = scmp.eq.s32.totalorder %s25, 0
      %p302 = por %p300, %p301
      %p303 = scmp.ne.s32.totalorder %s292, %s295
      %p304 = scmp.eq.s32.totalorder %s30, 1
      %p305 = por %p303, %p304
      %p306 = scmp.ne.s32.totalorder %s295, %s296
      %p307 = scmp.eq.s32.totalorder %s30, 0
      %p308 = por %p306, %p307
      %p309 = scmp.ne.s32.totalorder %s295, %s296
      %p310 = scmp.eq.s32.totalorder %s31, 1
      %p311 = por %p309, %p310
      %p313 = scmp.ne.s32.totalorder %s296, %s312
      %p314 = scmp.eq.s32.totalorder %s31, 0
      %p315 = por %p313, %p314
      %p316 = scmp.le.s32.totalorder 1, %s25
      %p317 = scmp.lt.s32.totalorder %s25, 3
      %p318 = pnand %p316, %p317
      %p319 = pneg %p318
      // Predicated region
      $region9: #{tpu_custom_call.1} parent=5 // pred_check
        _
      $region10: #{tpu_custom_call.1} parent=5 // pred_check_branch
        %321 = sbr.rel (%p318) target = $region12
      $region11: #{tpu_custom_call.1} parent=5 // pred_region
        %s322 = ssub.s32 %s25, 1
        // Predicated region
        $region13: #{tpu_custom_call.1} parent=11 // pred_check
          %p323 = pneg %p72
        $region14: #{tpu_custom_call.1} parent=11 // pred_check_branch
          %325 = sbr.rel (%p323) target = $region16
        $region15: #{tpu_custom_call.1} parent=11 // pred_region
          _
        $region16: #{tpu_custom_call.1} parent=11 // pred_fallthru
          _
        // Predicated region
        $region17: #{tpu_custom_call.1} parent=11 // pred_check
          %p326 = pneg %p93
        $region18: #{tpu_custom_call.1} parent=11 // pred_check_branch
          %328 = sbr.rel (%p326) target = $region20
        $region19: #{tpu_custom_call.1} parent=11 // pred_region
          _
        $region20: #{tpu_custom_call.1} parent=11 // pred_fallthru
          _
        // Predicated region
        $region21: #{tpu_custom_call.1} parent=11 // pred_check
          %p329 = pneg %p114
        $region22: #{tpu_custom_call.1} parent=11 // pred_check_branch
          %331 = sbr.rel (%p329) target = $region24
        $region23: #{tpu_custom_call.1} parent=11 // pred_region
          _
        $region24: #{tpu_custom_call.1} parent=11 // pred_fallthru
          _
        // Predicated region
        $region25: #{tpu_custom_call.1} parent=11 // pred_check
          %p332 = pneg %p135
        $region26: #{tpu_custom_call.1} parent=11 // pred_check_branch
          %334 = sbr.rel (%p332) target = $region28
        $region27: #{tpu_custom_call.1} parent=11 // pred_region
          _
        $region28: #{tpu_custom_call.1} parent=11 // pred_fallthru
          _
        // Predicated region
        $region29: #{tpu_custom_call.1} parent=11 // pred_check
          %p335 = pneg %p156
        $region30: #{tpu_custom_call.1} parent=11 // pred_check_branch
          %337 = sbr.rel (%p335) target = $region32
        $region31: #{tpu_custom_call.1} parent=11 // pred_region
          _
        $region32: #{tpu_custom_call.1} parent=11 // pred_fallthru
          _
        // Predicated region
        $region33: #{tpu_custom_call.1} parent=11 // pred_check
          %p338 = pneg %p177
        $region34: #{tpu_custom_call.1} parent=11 // pred_check_branch
          %340 = sbr.rel (%p338) target = $region36
        $region35: #{tpu_custom_call.1} parent=11 // pred_region
          %342 = vsyncadd [#allocation7], 0
          %s343 = sshll.u32 %s6, 4
          %s344 = int_to_ptr.hbm [resolvable:$true] %s343
          %s345 = sshll.u32 [#allocation6], 4
          %s346 = int_to_ptr.vmem [resolvable:$true] %s345
          %351 = dma.hbm_to_vmem [thread:$0]  %s344, 1152, %s346, [#allocation7], 64, 64, 4
        $region36: #{tpu_custom_call.1} parent=11 // pred_fallthru
          _
        // Predicated region
        $region37: #{tpu_custom_call.1} parent=11 // pred_check
          %p352 = pneg %p198
        $region38: #{tpu_custom_call.1} parent=11 // pred_check_branch
          %354 = sbr.rel (%p352) target = $region40
        $region39: #{tpu_custom_call.1} parent=11 // pred_region
          _
        $region40: #{tpu_custom_call.1} parent=11 // pred_fallthru
          _
        // Predicated region
        $region41: #{tpu_custom_call.1} parent=11 // pred_check
          %p355 = pneg %p219
        $region42: #{tpu_custom_call.1} parent=11 // pred_check_branch
          %357 = sbr.rel (%p355) target = $region44
        $region43: #{tpu_custom_call.1} parent=11 // pred_region
          _
        $region44: #{tpu_custom_call.1} parent=11 // pred_fallthru
          _
        // Predicated region
        $region45: #{tpu_custom_call.1} parent=11 // pred_check
          %p358 = pneg %p240
        $region46: #{tpu_custom_call.1} parent=11 // pred_check_branch
          %360 = sbr.rel (%p358) target = $region48
        $region47: #{tpu_custom_call.1} parent=11 // pred_region
          _
        $region48: #{tpu_custom_call.1} parent=11 // pred_fallthru
          _
        // Predicated region
        $region49: #{tpu_custom_call.1} parent=11 // pred_check
          %p361 = pneg %p261
        $region50: #{tpu_custom_call.1} parent=11 // pred_check_branch
          %363 = sbr.rel (%p361) target = $region52
        $region51: #{tpu_custom_call.1} parent=11 // pred_region
          _
        $region52: #{tpu_custom_call.1} parent=11 // pred_fallthru
          _
        // Predicated region
        $region53: #{tpu_custom_call.1} parent=11 // pred_check
          %p364 = pneg %p282
        $region54: #{tpu_custom_call.1} parent=11 // pred_check_branch
          %366 = sbr.rel (%p364) target = $region56
        $region55: #{tpu_custom_call.1} parent=11 // pred_region
          _
        $region56: #{tpu_custom_call.1} parent=11 // pred_fallthru
          _
      $region12: #{tpu_custom_call.1} parent=5 // pred_fallthru
        _
      %p367 = scmp.lt.s32.totalorder %s25, 2
      // Predicated region
      $region57: #{tpu_custom_call.1} parent=5 // pred_check
        %p368 = pneg %p367
      $region58: #{tpu_custom_call.1} parent=5 // pred_check_branch
        %370 = sbr.rel (%p368) target = $region60
      $region59: #{tpu_custom_call.1} parent=5 // pred_region
        // Predicated region
        $region61: #{tpu_custom_call.1} parent=59 // pred_check
          %p371 = pneg %p45
        $region62: #{tpu_custom_call.1} parent=59 // pred_check_branch
          %373 = sbr.rel (%p371) target = $region64
        $region63: #{tpu_custom_call.1} parent=59 // pred_region
          %s374 = sand.u32 %s35, 1
          %s375 = scalar_lea.sflag [#allocation4], %s374
          %s376 = sand.u32 %s35, 1
          %s377 = smul.addr %s376, 128
          %s378 = scalar_lea.vmem [#allocation3], %s377
          %s379 = smul.u32 4, %s25
          %381 = vsyncadd %s375, 0
          %s382 = smul.addr %s379, 8
          %s383 = smul.addr %s382, 4
          %s384 = scalar_lea.hbm %s0, %s383
          %s385 = sshll.u32 %s384, 4
          %s386 = int_to_ptr.hbm [resolvable:$true] %s385
          %s387 = sshll.u32 %s378, 4
          %s388 = int_to_ptr.vmem [resolvable:$true] %s387
          %393 = dma.hbm_to_vmem [thread:$0]  %s386, 2048, %s388, %s375, 64, 64, 4
        $region64: #{tpu_custom_call.1} parent=59 // pred_fallthru
          _
      $region60: #{tpu_custom_call.1} parent=5 // pred_fallthru
        _
      %p394 = scmp.le.s32.totalorder 1, %s25
      %p395 = scmp.lt.s32.totalorder %s25, 3
      %p396 = pnand %p394, %p395
      %p397 = pneg %p396
      // Predicated region
      $region65: #{tpu_custom_call.1} parent=5 // pred_check
        _
      $region66: #{tpu_custom_call.1} parent=5 // pred_check_branch
        %399 = sbr.rel (%p396) target = $region68
      $region67: #{tpu_custom_call.1} parent=5 // pred_region
        %s400 = ssub.s32 %s25, 1
        %s401 = sand.u32 %s38, 1
        %s402 = scalar_lea.sflag [#allocation4], %s401
        %s403 = sand.u32 %s38, 1
        %s404 = smul.addr %s403, 128
        %s405 = scalar_lea.vmem [#allocation3], %s404
        // Predicated region
        $region69: #{tpu_custom_call.1} parent=67 // pred_check
          %p406 = pneg %p51
        $region70: #{tpu_custom_call.1} parent=67 // pred_check_branch
          %408 = sbr.rel (%p406) target = $region72
        $region71: #{tpu_custom_call.1} parent=67 // pred_region
          %410 = dma.done %s402, 2048
        $region72: #{tpu_custom_call.1} parent=67 // pred_fallthru
          _
        // Predicated region
        $region73: #{tpu_custom_call.1} parent=67 // pred_check
          %p411 = pneg %p177
        $region74: #{tpu_custom_call.1} parent=67 // pred_check_branch
          %413 = sbr.rel (%p411) target = $region76
        $region75: #{tpu_custom_call.1} parent=67 // pred_region
          %415 = dma.done [#allocation7], 1152
        $region76: #{tpu_custom_call.1} parent=67 // pred_fallthru
          _
        %s416 = sand.u32 %s38, 1
        %s417 = scalar_lea.sflag [#allocation4], %s416
        %s418 = sand.u32 %s38, 1
        %s419 = smul.addr %s418, 128
        %s420 = scalar_lea.vmem [#allocation3], %s419
        %p421 = pneg %p51
        %p422 = pneg %p48
        %p423 = pneg %p72
        %p424 = pneg %p69
        %p425 = pneg %p93
        %p426 = pneg %p90
        %p427 = pneg %p114
        %p428 = pneg %p111
        %p429 = pneg %p135
        %p430 = pneg %p132
        %p431 = pneg %p156
        %p432 = pneg %p153
        %p433 = pneg %p177
        %p434 = pneg %p174
        %p435 = pneg %p198
        %p436 = pneg %p195
        %p437 = pneg %p219
        %p438 = pneg %p216
        %p439 = pneg %p240
        %p440 = pneg %p237
        %p441 = pneg %p261
        %p442 = pneg %p258
        %p443 = pneg %p282
        %p444 = pneg %p279
        %p445 = pneg %p308
        %p446 = pneg %p305
        %s447 = sand.u32 %s295, 1
        %s448 = scalar_lea.sflag [#allocation5], %s447
        %s449 = sand.u32 %s295, 1
        %s450 = smul.addr %s449, 128
        %s451 = scalar_lea.vmem [#allocation8], %s450
        %s452 = smul.u32 4, %s30
        %s453 = smul.u32 4, %s30
        %v455 = vld [vmem:[%s405] sm:$0xf]
        %v456 = vld [vmem:[%s405 + $0x4] sm:$0xf]
        %v457 = vld [vmem:[%s405 + $0x8] sm:$0xf]
        %v458 = vld [vmem:[%s405 + $0xc] sm:$0xf]
        %v459 = vld [vmem:[%s405 + $0x10] sm:$0xf]
        %v460 = vld [vmem:[%s405 + $0x14] sm:$0xf]
        %v461 = vld [vmem:[%s405 + $0x18] sm:$0xf]
        %v462 = vld [vmem:[%s405 + $0x1c] sm:$0xf]
        %v463 = vld [vmem:[%s405 + $0x20] sm:$0xf]
        %v464 = vld [vmem:[%s405 + $0x24] sm:$0xf]
        %v465 = vld [vmem:[%s405 + $0x28] sm:$0xf]
        %v466 = vld [vmem:[%s405 + $0x2c] sm:$0xf]
        %v467 = vld [vmem:[%s405 + $0x30] sm:$0xf]
        %v468 = vld [vmem:[%s405 + $0x34] sm:$0xf]
        %v469 = vld [vmem:[%s405 + $0x38] sm:$0xf]
        %v470 = vld [vmem:[%s405 + $0x3c] sm:$0xf]
        %v471 = vld [vmem:[%s405 + $0x40] sm:$0xf]
        %v472 = vld [vmem:[%s405 + $0x44] sm:$0xf]
        %v473 = vld [vmem:[%s405 + $0x48] sm:$0xf]
        %v474 = vld [vmem:[%s405 + $0x4c] sm:$0xf]
        %v475 = vld [vmem:[%s405 + $0x50] sm:$0xf]
        %v476 = vld [vmem:[%s405 + $0x54] sm:$0xf]
        %v477 = vld [vmem:[%s405 + $0x58] sm:$0xf]
        %v478 = vld [vmem:[%s405 + $0x5c] sm:$0xf]
        %v479 = vld [vmem:[%s405 + $0x60] sm:$0xf]
        %v480 = vld [vmem:[%s405 + $0x64] sm:$0xf]
        %v481 = vld [vmem:[%s405 + $0x68] sm:$0xf]
        %v482 = vld [vmem:[%s405 + $0x6c] sm:$0xf]
        %v483 = vld [vmem:[%s405 + $0x70] sm:$0xf]
        %v484 = vld [vmem:[%s405 + $0x74] sm:$0xf]
        %v485 = vld [vmem:[%s405 + $0x78] sm:$0xf]
        %v486 = vld [vmem:[%s405 + $0x7c] sm:$0xf]
        %v487 = vld [vmem:[%s3] sm:$0xf]
        %v488 = vld [vmem:[%s3 + $0x4] sm:$0xf]
        %v489 = vld [vmem:[%s3 + $0x8] sm:$0xf]
        %v490 = vld [vmem:[%s3 + $0xc] sm:$0xf]
        %v491 = vld [vmem:[%s3 + $0x10] sm:$0xf]
        %v492 = vld [vmem:[%s3 + $0x14] sm:$0xf]
        %v525 = vunpack.c.l.b16 %v455
        %v526 = vunpack.c.l.b16 %v456
        %v527 = vunpack.c.l.b16 %v457
        %v528 = vunpack.c.l.b16 %v458
        %v529 = vunpack.c.l.b16 %v459
        %v530 = vunpack.c.l.b16 %v460
        %v531 = vunpack.c.l.b16 %v461
        %v532 = vunpack.c.l.b16 %v462
        %v533 = vunpack.c.l.b16 %v463
        %v534 = vunpack.c.l.b16 %v464
        %v535 = vunpack.c.l.b16 %v465
        %v536 = vunpack.c.l.b16 %v466
        %v537 = vunpack.c.l.b16 %v467
        %v538 = vunpack.c.l.b16 %v468
        %v539 = vunpack.c.l.b16 %v469
        %v540 = vunpack.c.l.b16 %v470
        %v541 = vunpack.c.l.b16 %v471
        %v542 = vunpack.c.l.b16 %v472
        %v543 = vunpack.c.l.b16 %v473
        %v544 = vunpack.c.l.b16 %v474
        %v545 = vunpack.c.l.b16 %v475
        %v546 = vunpack.c.l.b16 %v476
        %v547 = vunpack.c.l.b16 %v477
        %v548 = vunpack.c.l.b16 %v478
        %v549 = vunpack.c.l.b16 %v479
        %v550 = vunpack.c.l.b16 %v480
        %v551 = vunpack.c.l.b16 %v481
        %v552 = vunpack.c.l.b16 %v482
        %v553 = vunpack.c.l.b16 %v483
        %v554 = vunpack.c.l.b16 %v484
        %v555 = vunpack.c.l.b16 %v485
        %v556 = vunpack.c.l.b16 %v486
        %v557 = vpack.c.b16 %v526, %v525
        %v558 = vpack.c.b16 %v528, %v527
        %v559 = vpack.c.b16 %v530, %v529
        %v560 = vpack.c.b16 %v532, %v531
        %v561 = vpack.c.b16 %v534, %v533
        %v562 = vpack.c.b16 %v536, %v535
        %v563 = vpack.c.b16 %v538, %v537
        %v564 = vpack.c.b16 %v540, %v539
        %v565 = vpack.c.b16 %v542, %v541
        %v566 = vpack.c.b16 %v544, %v543
        %v567 = vpack.c.b16 %v546, %v545
        %v568 = vpack.c.b16 %v548, %v547
        %v569 = vpack.c.b16 %v550, %v549
        %v570 = vpack.c.b16 %v552, %v551
        %v571 = vpack.c.b16 %v554, %v553
        %v572 = vpack.c.b16 %v556, %v555
        %573 = vrot.lane.b32.xlu0 %v557, 112
        %v574 = vpop.permute.xlu0 %573
        %575 = vrot.lane.b32.xlu0 %v558, 112
        %v576 = vpop.permute.xlu0 %575
        %577 = vrot.lane.b32.xlu0 %v559, 112
        %v578 = vpop.permute.xlu0 %577
        %579 = vrot.lane.b32.xlu0 %v560, 112
        %v580 = vpop.permute.xlu0 %579
        %581 = vrot.lane.b32.xlu0 %v561, 112
        %v582 = vpop.permute.xlu0 %581
        %583 = vrot.lane.b32.xlu0 %v562, 112
        %v584 = vpop.permute.xlu0 %583
        %585 = vrot.lane.b32.xlu0 %v563, 112
        %v586 = vpop.permute.xlu0 %585
        %587 = vrot.lane.b32.xlu0 %v564, 112
        %v588 = vpop.permute.xlu0 %587
        %589 = vrot.lane.b32.xlu0 %v565, 112
        %v590 = vpop.permute.xlu0 %589
        %591 = vrot.lane.b32.xlu0 %v566, 112
        %v592 = vpop.permute.xlu0 %591
        %593 = vrot.lane.b32.xlu0 %v567, 112
        %v594 = vpop.permute.xlu0 %593
        %595 = vrot.lane.b32.xlu0 %v568, 112
        %v596 = vpop.permute.xlu0 %595
        %597 = vrot.lane.b32.xlu0 %v569, 112
        %v598 = vpop.permute.xlu0 %597
        %599 = vrot.lane.b32.xlu0 %v570, 112
        %v600 = vpop.permute.xlu0 %599
        %601 = vrot.lane.b32.xlu0 %v571, 112
        %v602 = vpop.permute.xlu0 %601
        %603 = vrot.lane.b32.xlu0 %v572, 112
        %v604 = vpop.permute.xlu0 %603
        %v611 = vunpack.c.l.b16 %v487
        %v612 = vunpack.c.l.b16 %v488
        %v613 = vunpack.c.l.b16 %v489
        %v614 = vunpack.c.l.b16 %v490
        %v615 = vunpack.c.l.b16 %v491
        %v616 = vunpack.c.l.b16 %v492
        %v617 = vpack.c.b16 %v612, %v611
        %v618 = vpack.c.b16 %v614, %v613
        %v619 = vpack.c.b16 %v616, %v615
        %vm623 = vcmask 392192
        %v625 = vsel %vm623, %v574, 0
        %v628 = vsel %vm623, %v576, 0
        %v631 = vsel %vm623, %v578, 0
        %v634 = vsel %vm623, %v580, 0
        %v637 = vsel %vm623, %v582, 0
        %v640 = vsel %vm623, %v584, 0
        %v643 = vsel %vm623, %v586, 0
        %v646 = vsel %vm623, %v588, 0
        %v649 = vsel %vm623, %v590, 0
        %v652 = vsel %vm623, %v592, 0
        %v655 = vsel %vm623, %v594, 0
        %v658 = vsel %vm623, %v596, 0
        %v661 = vsel %vm623, %v598, 0
        %v664 = vsel %vm623, %v600, 0
        %v667 = vsel %vm623, %v602, 0
        %v670 = vsel %vm623, %v604, 0
        %672 = vmatpush.bf16.msra.mxu0 0
        %673 = vmatpush.bf16.msra.mxu0 0
        %674 = vmatpush.bf16.msra.mxu0 0
        %675 = vmatpush.bf16.msra.mxu0 0
        %676 = vmatpush.bf16.msra.mxu0 0
        %677 = vmatpush.bf16.msra.mxu0 %v619
        %678 = vmatpush.bf16.msra.mxu0 %v618
        %679 = vmatpush.bf16.msra.mxu0 %v617
        %680 = vmatmul.bf16.gmra.mxu0 %v625
        %v681 = vpop.f32.mrf.mxu0
        %v682 = vadd.f32 0.0, %v681
        %v683 = vpop.f32.mrf.mxu0
        %v684 = vadd.f32 0.0, %v683
        %685 = vmatmul.bf16.gmra.mxu0 %v628
        %v686 = vpop.f32.mrf.mxu0
        %v687 = vadd.f32 0.0, %v686
        %v688 = vpop.f32.mrf.mxu0
        %v689 = vadd.f32 0.0, %v688
        %690 = vmatmul.bf16.gmra.mxu0 %v631
        %v691 = vpop.f32.mrf.mxu0
        %v692 = vadd.f32 0.0, %v691
        %v693 = vpop.f32.mrf.mxu0
        %v694 = vadd.f32 0.0, %v693
        %695 = vmatmul.bf16.gmra.mxu0 %v634
        %v696 = vpop.f32.mrf.mxu0
        %v697 = vadd.f32 0.0, %v696
        %v698 = vpop.f32.mrf.mxu0
        %v699 = vadd.f32 0.0, %v698
        %700 = vmatmul.bf16.gmra.mxu0 %v637
        %v701 = vpop.f32.mrf.mxu0
        %v702 = vadd.f32 0.0, %v701
        %v703 = vpop.f32.mrf.mxu0
        %v704 = vadd.f32 0.0, %v703
        %705 = vmatmul.bf16.gmra.mxu0 %v640
        %v706 = vpop.f32.mrf.mxu0
        %v707 = vadd.f32 0.0, %v706
        %v708 = vpop.f32.mrf.mxu0
        %v709 = vadd.f32 0.0, %v708
        %710 = vmatmul.bf16.gmra.mxu0 %v643
        %v711 = vpop.f32.mrf.mxu0
        %v712 = vadd.f32 0.0, %v711
        %v713 = vpop.f32.mrf.mxu0
        %v714 = vadd.f32 0.0, %v713
        %715 = vmatmul.bf16.gmra.mxu0 %v646
        %v716 = vpop.f32.mrf.mxu0
        %v717 = vadd.f32 0.0, %v716
        %v718 = vpop.f32.mrf.mxu0
        %v719 = vadd.f32 0.0, %v718
        %720 = vmatmul.bf16.gmra.mxu0 %v649
        %v721 = vpop.f32.mrf.mxu0
        %v722 = vadd.f32 0.0, %v721
        %v723 = vpop.f32.mrf.mxu0
        %v724 = vadd.f32 0.0, %v723
        %725 = vmatmul.bf16.gmra.mxu0 %v652
        %v726 = vpop.f32.mrf.mxu0
        %v727 = vadd.f32 0.0, %v726
        %v728 = vpop.f32.mrf.mxu0
        %v729 = vadd.f32 0.0, %v728
        %730 = vmatmul.bf16.gmra.mxu0 %v655
        %v731 = vpop.f32.mrf.mxu0
        %v732 = vadd.f32 0.0, %v731
        %v733 = vpop.f32.mrf.mxu0
        %v734 = vadd.f32 0.0, %v733
        %735 = vmatmul.bf16.gmra.mxu0 %v658
        %v736 = vpop.f32.mrf.mxu0
        %v737 = vadd.f32 0.0, %v736
        %v738 = vpop.f32.mrf.mxu0
        %v739 = vadd.f32 0.0, %v738
        %740 = vmatmul.bf16.gmra.mxu0 %v661
        %v741 = vpop.f32.mrf.mxu0
        %v742 = vadd.f32 0.0, %v741
        %v743 = vpop.f32.mrf.mxu0
        %v744 = vadd.f32 0.0, %v743
        %745 = vmatmul.bf16.gmra.mxu0 %v664
        %v746 = vpop.f32.mrf.mxu0
        %v747 = vadd.f32 0.0, %v746
        %v748 = vpop.f32.mrf.mxu0
        %v749 = vadd.f32 0.0, %v748
        %750 = vmatmul.bf16.gmra.mxu0 %v667
        %v751 = vpop.f32.mrf.mxu0
        %v752 = vadd.f32 0.0, %v751
        %v753 = vpop.f32.mrf.mxu0
        %v754 = vadd.f32 0.0, %v753
        %755 = vmatmul.bf16.gmra.mxu0 %v670
        %v756 = vpop.f32.mrf.mxu0
        %v757 = vadd.f32 0.0, %v756
        %v758 = vpop.f32.mrf.mxu0
        %v759 = vadd.f32 0.0, %v758
        %760 = vdwg.mxu0
        %v761 = vld [vmem:[%s1] sm:$0xf]
        %vm762 = vcmask 64512
        %v764 = vsel %vm762, %v557, 0
        %v767 = vsel %vm762, %v558, 0
        %v770 = vsel %vm762, %v559, 0
        %v773 = vsel %vm762, %v560, 0
        %v776 = vsel %vm762, %v561, 0
        %v779 = vsel %vm762, %v562, 0
        %v782 = vsel %vm762, %v563, 0
        %v785 = vsel %vm762, %v564, 0
        %v788 = vsel %vm762, %v565, 0
        %v791 = vsel %vm762, %v566, 0
        %v794 = vsel %vm762, %v567, 0
        %v797 = vsel %vm762, %v568, 0
        %v800 = vsel %vm762, %v569, 0
        %v803 = vsel %vm762, %v570, 0
        %v806 = vsel %vm762, %v571, 0
        %v809 = vsel %vm762, %v572, 0
        %vm811 = vcmask 1043456
        %v813 = vsel %vm811, %v761, 0
        %815 = vmatpush.bf16.msra.mxu0 0
        %816 = vmatpush.bf16.msra.mxu0 0
        %817 = vmatpush.bf16.msra.mxu0 0
        %818 = vmatpush.bf16.msra.mxu0 0
        %819 = vmatpush.bf16.msra.mxu0 0
        %820 = vmatpush.bf16.msra.mxu0 0
        %821 = vmatpush.bf16.msra.mxu0 0
        %822 = vmatpush.bf16.msra.mxu0 %v813
        %823 = vmatmul.bf16.gmra.mxu0 %v764
        %v824 = vpop.f32.mrf.mxu0
        %v825 = vpop.f32.mrf.mxu0
        %826 = vmatmul.bf16.gmra.mxu0 %v767
        %v827 = vpop.f32.mrf.mxu0
        %v828 = vpop.f32.mrf.mxu0
        %829 = vmatmul.bf16.gmra.mxu0 %v770
        %v830 = vpop.f32.mrf.mxu0
        %v831 = vpop.f32.mrf.mxu0
        %832 = vmatmul.bf16.gmra.mxu0 %v773
        %v833 = vpop.f32.mrf.mxu0
        %v834 = vpop.f32.mrf.mxu0
        %835 = vmatmul.bf16.gmra.mxu0 %v776
        %v836 = vpop.f32.mrf.mxu0
        %v837 = vadd.f32 0.0, %v836
        %v838 = vpop.f32.mrf.mxu0
        %v839 = vadd.f32 0.0, %v838
        %840 = vmatmul.bf16.gmra.mxu0 %v779
        %v841 = vpop.f32.mrf.mxu0
        %v842 = vadd.f32 0.0, %v841
        %v843 = vpop.f32.mrf.mxu0
        %v844 = vadd.f32 0.0, %v843
        %845 = vmatmul.bf16.gmra.mxu0 %v782
        %v846 = vpop.f32.mrf.mxu0
        %v847 = vadd.f32 0.0, %v846
        %v848 = vpop.f32.mrf.mxu0
        %v849 = vadd.f32 0.0, %v848
        %850 = vmatmul.bf16.gmra.mxu0 %v785
        %v851 = vpop.f32.mrf.mxu0
        %v852 = vadd.f32 0.0, %v851
        %v853 = vpop.f32.mrf.mxu0
        %v854 = vadd.f32 0.0, %v853
        %855 = vmatmul.bf16.gmra.mxu0 %v788
        %v856 = vpop.f32.mrf.mxu0
        %v857 = vadd.f32 0.0, %v856
        %v858 = vpop.f32.mrf.mxu0
        %v859 = vadd.f32 0.0, %v858
        %860 = vmatmul.bf16.gmra.mxu0 %v791
        %v861 = vpop.f32.mrf.mxu0
        %v862 = vadd.f32 0.0, %v861
        %v863 = vpop.f32.mrf.mxu0
        %v864 = vadd.f32 0.0, %v863
        %865 = vmatmul.bf16.gmra.mxu0 %v794
        %v866 = vpop.f32.mrf.mxu0
        %v867 = vadd.f32 0.0, %v866
        %v868 = vpop.f32.mrf.mxu0
        %v869 = vadd.f32 0.0, %v868
        %870 = vmatmul.bf16.gmra.mxu0 %v797
        %v871 = vpop.f32.mrf.mxu0
        %v872 = vadd.f32 0.0, %v871
        %v873 = vpop.f32.mrf.mxu0
        %v874 = vadd.f32 0.0, %v873
        %875 = vmatmul.bf16.gmra.mxu0 %v800
        %v876 = vpop.f32.mrf.mxu0
        %v877 = vadd.f32 0.0, %v876
        %v878 = vpop.f32.mrf.mxu0
        %v879 = vadd.f32 0.0, %v878
        %880 = vmatmul.bf16.gmra.mxu0 %v803
        %v881 = vpop.f32.mrf.mxu0
        %v882 = vadd.f32 0.0, %v881
        %v883 = vpop.f32.mrf.mxu0
        %v884 = vadd.f32 0.0, %v883
        %885 = vmatmul.bf16.gmra.mxu0 %v806
        %v886 = vpop.f32.mrf.mxu0
        %v887 = vadd.f32 0.0, %v886
        %v888 = vpop.f32.mrf.mxu0
        %v889 = vadd.f32 0.0, %v888
        %890 = vmatmul.bf16.gmra.mxu0 %v809
        %v891 = vpop.f32.mrf.mxu0
        %v892 = vadd.f32 0.0, %v891
        %v893 = vpop.f32.mrf.mxu0
        %v894 = vadd.f32 0.0, %v893
        %895 = vdwg.mxu0
        %v896 = vld [vmem:[%s2] sm:$0xf]
        %897 = vrot.lane.b32.xlu0 %v557, 120
        %v898 = vpop.permute.xlu0 %897
        %899 = vrot.lane.b32.xlu0 %v558, 120
        %v900 = vpop.permute.xlu0 %899
        %901 = vrot.lane.b32.xlu0 %v559, 120
        %v902 = vpop.permute.xlu0 %901
        %903 = vrot.lane.b32.xlu0 %v560, 120
        %v904 = vpop.permute.xlu0 %903
        %905 = vrot.lane.b32.xlu0 %v561, 120
        %v906 = vpop.permute.xlu0 %905
        %907 = vrot.lane.b32.xlu0 %v562, 120
        %v908 = vpop.permute.xlu0 %907
        %909 = vrot.lane.b32.xlu0 %v563, 120
        %v910 = vpop.permute.xlu0 %909
        %911 = vrot.lane.b32.xlu0 %v564, 120
        %v912 = vpop.permute.xlu0 %911
        %913 = vrot.lane.b32.xlu0 %v565, 120
        %v914 = vpop.permute.xlu0 %913
        %915 = vrot.lane.b32.xlu0 %v566, 120
        %v916 = vpop.permute.xlu0 %915
        %917 = vrot.lane.b32.xlu0 %v567, 120
        %v918 = vpop.permute.xlu0 %917
        %919 = vrot.lane.b32.xlu0 %v568, 120
        %v920 = vpop.permute.xlu0 %919
        %921 = vrot.lane.b32.xlu0 %v569, 120
        %v922 = vpop.permute.xlu0 %921
        %923 = vrot.lane.b32.xlu0 %v570, 120
        %v924 = vpop.permute.xlu0 %923
        %925 = vrot.lane.b32.xlu0 %v571, 120
        %v926 = vpop.permute.xlu0 %925
        %927 = vrot.lane.b32.xlu0 %v572, 120
        %v928 = vpop.permute.xlu0 %927
        %v930 = vsel %vm762, %v898, 0
        %v933 = vsel %vm762, %v900, 0
        %v936 = vsel %vm762, %v902, 0
        %v939 = vsel %vm762, %v904, 0
        %v942 = vsel %vm762, %v906, 0
        %v945 = vsel %vm762, %v908, 0
        %v948 = vsel %vm762, %v910, 0
        %v951 = vsel %vm762, %v912, 0
        %v954 = vsel %vm762, %v914, 0
        %v957 = vsel %vm762, %v916, 0
        %v960 = vsel %vm762, %v918, 0
        %v963 = vsel %vm762, %v920, 0
        %v966 = vsel %vm762, %v922, 0
        %v969 = vsel %vm762, %v924, 0
        %v972 = vsel %vm762, %v926, 0
        %v975 = vsel %vm762, %v928, 0
        %v978 = vsel %vm811, %v896, 0
        %980 = vmatpush.bf16.msra.mxu0 0
        %981 = vmatpush.bf16.msra.mxu0 0
        %982 = vmatpush.bf16.msra.mxu0 0
        %983 = vmatpush.bf16.msra.mxu0 0
        %984 = vmatpush.bf16.msra.mxu0 0
        %985 = vmatpush.bf16.msra.mxu0 0
        %986 = vmatpush.bf16.msra.mxu0 0
        %987 = vmatpush.bf16.msra.mxu0 %v978
        %988 = vmatmul.bf16.gmra.mxu0 %v930
        %v989 = vpop.f32.mrf.mxu0
        %v990 = vadd.f32 0.0, %v989
        %v991 = vpop.f32.mrf.mxu0
        %v992 = vadd.f32 0.0, %v991
        %993 = vmatmul.bf16.gmra.mxu0 %v933
        %v994 = vpop.f32.mrf.mxu0
        %v995 = vadd.f32 0.0, %v994
        %v996 = vpop.f32.mrf.mxu0
        %v997 = vadd.f32 0.0, %v996
        %998 = vmatmul.bf16.gmra.mxu0 %v936
        %v999 = vpop.f32.mrf.mxu0
        %v1000 = vadd.f32 0.0, %v999
        %v1001 = vpop.f32.mrf.mxu0
        %v1002 = vadd.f32 0.0, %v1001
        %1003 = vmatmul.bf16.gmra.mxu0 %v939
        %v1004 = vpop.f32.mrf.mxu0
        %v1005 = vadd.f32 0.0, %v1004
        %v1006 = vpop.f32.mrf.mxu0
        %v1007 = vadd.f32 0.0, %v1006
        %1008 = vmatmul.bf16.gmra.mxu0 %v942
        %v1009 = vpop.f32.mrf.mxu0
        %v1010 = vadd.f32 0.0, %v1009
        %v1011 = vpop.f32.mrf.mxu0
        %v1012 = vadd.f32 0.0, %v1011
        %1013 = vmatmul.bf16.gmra.mxu0 %v945
        %v1014 = vpop.f32.mrf.mxu0
        %v1015 = vadd.f32 0.0, %v1014
        %v1016 = vpop.f32.mrf.mxu0
        %v1017 = vadd.f32 0.0, %v1016
        %1018 = vmatmul.bf16.gmra.mxu0 %v948
        %v1019 = vpop.f32.mrf.mxu0
        %v1020 = vadd.f32 0.0, %v1019
        %v1021 = vpop.f32.mrf.mxu0
        %v1022 = vadd.f32 0.0, %v1021
        %1023 = vmatmul.bf16.gmra.mxu0 %v951
        %v1024 = vpop.f32.mrf.mxu0
        %v1025 = vadd.f32 0.0, %v1024
        %v1026 = vpop.f32.mrf.mxu0
        %v1027 = vadd.f32 0.0, %v1026
        %1028 = vmatmul.bf16.gmra.mxu0 %v954
        %v1029 = vpop.f32.mrf.mxu0
        %v1030 = vadd.f32 0.0, %v1029
        %v1031 = vpop.f32.mrf.mxu0
        %v1032 = vadd.f32 0.0, %v1031
        %1033 = vmatmul.bf16.gmra.mxu0 %v957
        %v1034 = vpop.f32.mrf.mxu0
        %v1035 = vadd.f32 0.0, %v1034
        %v1036 = vpop.f32.mrf.mxu0
        %v1037 = vadd.f32 0.0, %v1036
        %1038 = vmatmul.bf16.gmra.mxu0 %v960
        %v1039 = vpop.f32.mrf.mxu0
        %v1040 = vadd.f32 0.0, %v1039
        %v1041 = vpop.f32.mrf.mxu0
        %v1042 = vadd.f32 0.0, %v1041
        %1043 = vmatmul.bf16.gmra.mxu0 %v963
        %v1044 = vpop.f32.mrf.mxu0
        %v1045 = vadd.f32 0.0, %v1044
        %v1046 = vpop.f32.mrf.mxu0
        %v1047 = vadd.f32 0.0, %v1046
        %1048 = vmatmul.bf16.gmra.mxu0 %v966
        %v1049 = vpop.f32.mrf.mxu0
        %v1050 = vpop.f32.mrf.mxu0
        %1051 = vmatmul.bf16.gmra.mxu0 %v969
        %v1052 = vpop.f32.mrf.mxu0
        %v1053 = vpop.f32.mrf.mxu0
        %1054 = vmatmul.bf16.gmra.mxu0 %v972
        %v1055 = vpop.f32.mrf.mxu0
        %v1056 = vpop.f32.mrf.mxu0
        %1057 = vmatmul.bf16.gmra.mxu0 %v975
        %v1058 = vpop.f32.mrf.mxu0
        %v1059 = vpop.f32.mrf.mxu0
        %1060 = vdwg.mxu0
        %v1061 = vadd.f32 %v682, %v837
        %v1062 = vadd.f32 %v684, %v839
        %v1063 = vadd.f32 %v687, %v842
        %v1064 = vadd.f32 %v689, %v844
        %v1065 = vadd.f32 %v692, %v847
        %v1066 = vadd.f32 %v694, %v849
        %v1067 = vadd.f32 %v697, %v852
        %v1068 = vadd.f32 %v699, %v854
        %v1069 = vadd.f32 %v702, %v857
        %v1070 = vadd.f32 %v704, %v859
        %v1071 = vadd.f32 %v707, %v862
        %v1072 = vadd.f32 %v709, %v864
        %v1073 = vadd.f32 %v712, %v867
        %v1074 = vadd.f32 %v714, %v869
        %v1075 = vadd.f32 %v717, %v872
        %v1076 = vadd.f32 %v719, %v874
        %v1077 = vadd.f32 %v722, %v877
        %v1078 = vadd.f32 %v724, %v879
        %v1079 = vadd.f32 %v727, %v882
        %v1080 = vadd.f32 %v729, %v884
        %v1081 = vadd.f32 %v732, %v887
        %v1082 = vadd.f32 %v734, %v889
        %v1083 = vadd.f32 %v737, %v892
        %v1084 = vadd.f32 %v739, %v894
        %v1085 = vadd.f32 %v742, 0.0
        %v1086 = vadd.f32 %v744, 0.0
        %v1087 = vadd.f32 %v747, 0.0
        %v1088 = vadd.f32 %v749, 0.0
        %v1089 = vadd.f32 %v752, 0.0
        %v1090 = vadd.f32 %v754, 0.0
        %v1091 = vadd.f32 %v757, 0.0
        %v1092 = vadd.f32 %v759, 0.0
        %v1093 = vadd.f32 %v1061, 0.0
        %v1094 = vadd.f32 %v1062, 0.0
        %v1095 = vadd.f32 %v1063, 0.0
        %v1096 = vadd.f32 %v1064, 0.0
        %v1097 = vadd.f32 %v1065, 0.0
        %v1098 = vadd.f32 %v1066, 0.0
        %v1099 = vadd.f32 %v1067, 0.0
        %v1100 = vadd.f32 %v1068, 0.0
        %v1101 = vadd.f32 %v1069, %v990
        %v1102 = vadd.f32 %v1070, %v992
        %v1103 = vadd.f32 %v1071, %v995
        %v1104 = vadd.f32 %v1072, %v997
        %v1105 = vadd.f32 %v1073, %v1000
        %v1106 = vadd.f32 %v1074, %v1002
        %v1107 = vadd.f32 %v1075, %v1005
        %v1108 = vadd.f32 %v1076, %v1007
        %v1109 = vadd.f32 %v1077, %v1010
        %v1110 = vadd.f32 %v1078, %v1012
        %v1111 = vadd.f32 %v1079, %v1015
        %v1112 = vadd.f32 %v1080, %v1017
        %v1113 = vadd.f32 %v1081, %v1020
        %v1114 = vadd.f32 %v1082, %v1022
        %v1115 = vadd.f32 %v1083, %v1025
        %v1116 = vadd.f32 %v1084, %v1027
        %v1117 = vadd.f32 %v1085, %v1030
        %v1118 = vadd.f32 %v1086, %v1032
        %v1119 = vadd.f32 %v1087, %v1035
        %v1120 = vadd.f32 %v1088, %v1037
        %v1121 = vadd.f32 %v1089, %v1040
        %v1122 = vadd.f32 %v1090, %v1042
        %v1123 = vadd.f32 %v1091, %v1045
        %v1124 = vadd.f32 %v1092, %v1047
        %v1125 = vld [vmem:[%s4] sm:$0x1]
        %v1127 = vperm.slane %v1125, 0
        %v1129 = vmul.f32 %v1093, %v1127
        %v1130 = vmul.f32 %v1094, %v1127
        %v1131 = vmul.f32 %v1095, %v1127
        %v1132 = vmul.f32 %v1096, %v1127
        %v1133 = vmul.f32 %v1097, %v1127
        %v1134 = vmul.f32 %v1098, %v1127
        %v1135 = vmul.f32 %v1099, %v1127
        %v1136 = vmul.f32 %v1100, %v1127
        %v1137 = vmul.f32 %v1101, %v1127
        %v1138 = vmul.f32 %v1102, %v1127
        %v1139 = vmul.f32 %v1103, %v1127
        %v1140 = vmul.f32 %v1104, %v1127
        %v1141 = vmul.f32 %v1105, %v1127
        %v1142 = vmul.f32 %v1106, %v1127
        %v1143 = vmul.f32 %v1107, %v1127
        %v1144 = vmul.f32 %v1108, %v1127
        %v1145 = vmul.f32 %v1109, %v1127
        %v1146 = vmul.f32 %v1110, %v1127
        %v1147 = vmul.f32 %v1111, %v1127
        %v1148 = vmul.f32 %v1112, %v1127
        %v1149 = vmul.f32 %v1113, %v1127
        %v1150 = vmul.f32 %v1114, %v1127
        %v1151 = vmul.f32 %v1115, %v1127
        %v1152 = vmul.f32 %v1116, %v1127
        %v1153 = vmul.f32 %v1117, %v1127
        %v1154 = vmul.f32 %v1118, %v1127
        %v1155 = vmul.f32 %v1119, %v1127
        %v1156 = vmul.f32 %v1120, %v1127
        %v1157 = vmul.f32 %v1121, %v1127
        %v1158 = vmul.f32 %v1122, %v1127
        %v1159 = vmul.f32 %v1123, %v1127
        %v1160 = vmul.f32 %v1124, %v1127
        %v1161 = vld [vmem:[%s5] sm:$0x1]
        %v1163 = vperm.slane %v1161, 0
        %v1165 = vadd.f32 %v1129, %v1163
        %v1166 = vadd.f32 %v1130, %v1163
        %v1167 = vadd.f32 %v1131, %v1163
        %v1168 = vadd.f32 %v1132, %v1163
        %v1169 = vadd.f32 %v1133, %v1163
        %v1170 = vadd.f32 %v1134, %v1163
        %v1171 = vadd.f32 %v1135, %v1163
        %v1172 = vadd.f32 %v1136, %v1163
        %v1173 = vadd.f32 %v1137, %v1163
        %v1174 = vadd.f32 %v1138, %v1163
        %v1175 = vadd.f32 %v1139, %v1163
        %v1176 = vadd.f32 %v1140, %v1163
        %v1177 = vadd.f32 %v1141, %v1163
        %v1178 = vadd.f32 %v1142, %v1163
        %v1179 = vadd.f32 %v1143, %v1163
        %v1180 = vadd.f32 %v1144, %v1163
        %v1181 = vadd.f32 %v1145, %v1163
        %v1182 = vadd.f32 %v1146, %v1163
        %v1183 = vadd.f32 %v1147, %v1163
        %v1184 = vadd.f32 %v1148, %v1163
        %v1185 = vadd.f32 %v1149, %v1163
        %v1186 = vadd.f32 %v1150, %v1163
        %v1187 = vadd.f32 %v1151, %v1163
        %v1188 = vadd.f32 %v1152, %v1163
        %v1189 = vadd.f32 %v1153, %v1163
        %v1190 = vadd.f32 %v1154, %v1163
        %v1191 = vadd.f32 %v1155, %v1163
        %v1192 = vadd.f32 %v1156, %v1163
        %v1193 = vadd.f32 %v1157, %v1163
        %v1194 = vadd.f32 %v1158, %v1163
        %v1195 = vadd.f32 %v1159, %v1163
        %v1196 = vadd.f32 %v1160, %v1163
        %v1197 = vmax.f32 %v1165, 0.0
        %v1198 = vmax.f32 %v1166, 0.0
        %v1199 = vmax.f32 %v1167, 0.0
        %v1200 = vmax.f32 %v1168, 0.0
        %v1201 = vmax.f32 %v1169, 0.0
        %v1202 = vmax.f32 %v1170, 0.0
        %v1203 = vmax.f32 %v1171, 0.0
        %v1204 = vmax.f32 %v1172, 0.0
        %v1205 = vmax.f32 %v1173, 0.0
        %v1206 = vmax.f32 %v1174, 0.0
        %v1207 = vmax.f32 %v1175, 0.0
        %v1208 = vmax.f32 %v1176, 0.0
        %v1209 = vmax.f32 %v1177, 0.0
        %v1210 = vmax.f32 %v1178, 0.0
        %v1211 = vmax.f32 %v1179, 0.0
        %v1212 = vmax.f32 %v1180, 0.0
        %v1213 = vmax.f32 %v1181, 0.0
        %v1214 = vmax.f32 %v1182, 0.0
        %v1215 = vmax.f32 %v1183, 0.0
        %v1216 = vmax.f32 %v1184, 0.0
        %v1217 = vmax.f32 %v1185, 0.0
        %v1218 = vmax.f32 %v1186, 0.0
        %v1219 = vmax.f32 %v1187, 0.0
        %v1220 = vmax.f32 %v1188, 0.0
        %v1221 = vmax.f32 %v1189, 0.0
        %v1222 = vmax.f32 %v1190, 0.0
        %v1223 = vmax.f32 %v1191, 0.0
        %v1224 = vmax.f32 %v1192, 0.0
        %v1225 = vmax.f32 %v1193, 0.0
        %v1226 = vmax.f32 %v1194, 0.0
        %v1227 = vmax.f32 %v1195, 0.0
        %v1228 = vmax.f32 %v1196, 0.0
        %v1229 = vpack.c.bf16 %v1197, %v1197
        %v1230 = vpack.c.bf16 %v1198, %v1198
        %v1231 = vpack.c.bf16 %v1199, %v1199
        %v1232 = vpack.c.bf16 %v1200, %v1200
        %v1233 = vpack.c.bf16 %v1201, %v1201
        %v1234 = vpack.c.bf16 %v1202, %v1202
        %v1235 = vpack.c.bf16 %v1203, %v1203
        %v1236 = vpack.c.bf16 %v1204, %v1204
        %v1237 = vpack.c.bf16 %v1205, %v1205
        %v1238 = vpack.c.bf16 %v1206, %v1206
        %v1239 = vpack.c.bf16 %v1207, %v1207
        %v1240 = vpack.c.bf16 %v1208, %v1208
        %v1241 = vpack.c.bf16 %v1209, %v1209
        %v1242 = vpack.c.bf16 %v1210, %v1210
        %v1243 = vpack.c.bf16 %v1211, %v1211
        %v1244 = vpack.c.bf16 %v1212, %v1212
        %v1245 = vpack.c.bf16 %v1213, %v1213
        %v1246 = vpack.c.bf16 %v1214, %v1214
        %v1247 = vpack.c.bf16 %v1215, %v1215
        %v1248 = vpack.c.bf16 %v1216, %v1216
        %v1249 = vpack.c.bf16 %v1217, %v1217
        %v1250 = vpack.c.bf16 %v1218, %v1218
        %v1251 = vpack.c.bf16 %v1219, %v1219
        %v1252 = vpack.c.bf16 %v1220, %v1220
        %v1253 = vpack.c.bf16 %v1221, %v1221
        %v1254 = vpack.c.bf16 %v1222, %v1222
        %v1255 = vpack.c.bf16 %v1223, %v1223
        %v1256 = vpack.c.bf16 %v1224, %v1224
        %v1257 = vpack.c.bf16 %v1225, %v1225
        %v1258 = vpack.c.bf16 %v1226, %v1226
        %v1259 = vpack.c.bf16 %v1227, %v1227
        %v1260 = vpack.c.bf16 %v1228, %v1228
        %vm1261 = vcmask 125952
        %1262 = vst.msk [vmem:[#allocation2] sm:$0xf] %vm1261, 0
        %1263 = vst.msk [vmem:[#allocation2 + $0x4] sm:$0xf] %vm1261, 0
        %1264 = vst.msk [vmem:[#allocation2 + $0x8] sm:$0xf] %vm1261, 0
        %vm1265 = vcmask 122880
        %vm1266 = vsmask.f32 256
        %vm1267 = vmand %vm1265, %vm1266
        %v1268 = vld [vmem:[#allocation2 + $0xc] sm:$0x1]
        %v1269 = vsel %vm1267, 0, %v1268
        %1270 = vst [vmem:[#allocation2 + $0xc] sm:$0x1] %v1269
        %1271 = vst.msk [vmem:[#allocation2 + $0xa0] sm:$0xf] %vm1261, 0
        %1272 = vst.msk [vmem:[#allocation2 + $0xa4] sm:$0xf] %vm1261, 0
        %1273 = vst.msk [vmem:[#allocation2 + $0xa8] sm:$0xf] %vm1261, 0
        %v1274 = vld [vmem:[#allocation2 + $0xac] sm:$0x1]
        %v1275 = vsel %vm1267, 0, %v1274
        %1276 = vst [vmem:[#allocation2 + $0xac] sm:$0x1] %v1275
        %1277 = vst.msk [vmem:[#allocation2 + $0x140] sm:$0xf] %vm1261, 0
        %1278 = vst.msk [vmem:[#allocation2 + $0x144] sm:$0xf] %vm1261, 0
        %1279 = vst.msk [vmem:[#allocation2 + $0x148] sm:$0xf] %vm1261, 0
        %v1280 = vld [vmem:[#allocation2 + $0x14c] sm:$0x1]
        %v1281 = vsel %vm1267, 0, %v1280
        %1282 = vst [vmem:[#allocation2 + $0x14c] sm:$0x1] %v1281
        %1283 = vst.msk [vmem:[#allocation2 + $0x1e0] sm:$0xf] %vm1261, 0
        %1284 = vst.msk [vmem:[#allocation2 + $0x1e4] sm:$0xf] %vm1261, 0
        %1285 = vst.msk [vmem:[#allocation2 + $0x1e8] sm:$0xf] %vm1261, 0
        %v1286 = vld [vmem:[#allocation2 + $0x1ec] sm:$0x1]
        %v1287 = vsel %vm1267, 0, %v1286
        %1288 = vst [vmem:[#allocation2 + $0x1ec] sm:$0x1] %v1287
        %s1289 = scalar_lea.vmem [#allocation2], 144
        %1290 = vst.msk [vmem:[%s1289] sm:$0xf] %vm1261, 0
        %1291 = vst.msk [vmem:[%s1289 + $0x4] sm:$0xf] %vm1261, 0
        %1292 = vst.msk [vmem:[%s1289 + $0x8] sm:$0xf] %vm1261, 0
        %v1293 = vld [vmem:[%s1289 + $0xc] sm:$0x1]
        %v1294 = vsel %vm1267, 0, %v1293
        %1295 = vst [vmem:[%s1289 + $0xc] sm:$0x1] %v1294
        %1296 = vst.msk [vmem:[%s1289 + $0xa0] sm:$0xf] %vm1261, 0
        %1297 = vst.msk [vmem:[%s1289 + $0xa4] sm:$0xf] %vm1261, 0
        %1298 = vst.msk [vmem:[%s1289 + $0xa8] sm:$0xf] %vm1261, 0
        %v1299 = vld [vmem:[%s1289 + $0xac] sm:$0x1]
        %v1300 = vsel %vm1267, 0, %v1299
        %1301 = vst [vmem:[%s1289 + $0xac] sm:$0x1] %v1300
        %1302 = vst.msk [vmem:[%s1289 + $0x140] sm:$0xf] %vm1261, 0
        %1303 = vst.msk [vmem:[%s1289 + $0x144] sm:$0xf] %vm1261, 0
        %1304 = vst.msk [vmem:[%s1289 + $0x148] sm:$0xf] %vm1261, 0
        %v1305 = vld [vmem:[%s1289 + $0x14c] sm:$0x1]
        %v1306 = vsel %vm1267, 0, %v1305
        %1307 = vst [vmem:[%s1289 + $0x14c] sm:$0x1] %v1306
        %1308 = vst.msk [vmem:[%s1289 + $0x1e0] sm:$0xf] %vm1261, 0
        %1309 = vst.msk [vmem:[%s1289 + $0x1e4] sm:$0xf] %vm1261, 0
        %1310 = vst.msk [vmem:[%s1289 + $0x1e8] sm:$0xf] %vm1261, 0
        %v1311 = vld [vmem:[%s1289 + $0x1ec] sm:$0x1]
        %v1312 = vsel %vm1267, 0, %v1311
        %1313 = vst [vmem:[%s1289 + $0x1ec] sm:$0x1] %v1312
        %s1314 = scalar_lea.vmem [#allocation2], 16
        %vm1315 = vcmask 125955
        %vm1316 = vsmask.f32 7950
        %vm1317 = vmand %vm1315, %vm1316
        %v1318 = vld [vmem:[%s1314 + $0x4] sm:$0x8]
        %v1319 = vsel %vm1317, 0, %v1318
        %1320 = vst [vmem:[%s1314 + $0x4] sm:$0x8] %v1319
        %v1321 = vld [vmem:[%s1314 + $0x14] sm:$0x8]
        %v1322 = vsel %vm1317, 0, %v1321
        %1323 = vst [vmem:[%s1314 + $0x14] sm:$0x8] %v1322
        %v1324 = vld [vmem:[%s1314 + $0x24] sm:$0x8]
        %v1325 = vsel %vm1317, 0, %v1324
        %1326 = vst [vmem:[%s1314 + $0x24] sm:$0x8] %v1325
        %v1327 = vld [vmem:[%s1314 + $0x34] sm:$0x8]
        %v1328 = vsel %vm1317, 0, %v1327
        %1329 = vst [vmem:[%s1314 + $0x34] sm:$0x8] %v1328
        %v1330 = vld [vmem:[%s1314 + $0x44] sm:$0x8]
        %v1331 = vsel %vm1317, 0, %v1330
        %1332 = vst [vmem:[%s1314 + $0x44] sm:$0x8] %v1331
        %v1333 = vld [vmem:[%s1314 + $0x54] sm:$0x8]
        %v1334 = vsel %vm1317, 0, %v1333
        %1335 = vst [vmem:[%s1314 + $0x54] sm:$0x8] %v1334
        %v1336 = vld [vmem:[%s1314 + $0x64] sm:$0x8]
        %v1337 = vsel %vm1317, 0, %v1336
        %1338 = vst [vmem:[%s1314 + $0x64] sm:$0x8] %v1337
        %v1339 = vld [vmem:[%s1314 + $0x74] sm:$0x8]
        %v1340 = vsel %vm1317, 0, %v1339
        %1341 = vst [vmem:[%s1314 + $0x74] sm:$0x8] %v1340
        %v1342 = vld [vmem:[%s1314 + $0xa4] sm:$0x8]
        %v1343 = vsel %vm1317, 0, %v1342
        %1344 = vst [vmem:[%s1314 + $0xa4] sm:$0x8] %v1343
        %v1345 = vld [vmem:[%s1314 + $0xb4] sm:$0x8]
        %v1346 = vsel %vm1317, 0, %v1345
        %1347 = vst [vmem:[%s1314 + $0xb4] sm:$0x8] %v1346
        %v1348 = vld [vmem:[%s1314 + $0xc4] sm:$0x8]
        %v1349 = vsel %vm1317, 0, %v1348
        %1350 = vst [vmem:[%s1314 + $0xc4] sm:$0x8] %v1349
        %v1351 = vld [vmem:[%s1314 + $0xd4] sm:$0x8]
        %v1352 = vsel %vm1317, 0, %v1351
        %1353 = vst [vmem:[%s1314 + $0xd4] sm:$0x8] %v1352
        %v1354 = vld [vmem:[%s1314 + $0xe4] sm:$0x8]
        %v1355 = vsel %vm1317, 0, %v1354
        %1356 = vst [vmem:[%s1314 + $0xe4] sm:$0x8] %v1355
        %v1357 = vld [vmem:[%s1314 + $0xf4] sm:$0x8]
        %v1358 = vsel %vm1317, 0, %v1357
        %1359 = vst [vmem:[%s1314 + $0xf4] sm:$0x8] %v1358
        %v1360 = vld [vmem:[%s1314 + $0x104] sm:$0x8]
        %v1361 = vsel %vm1317, 0, %v1360
        %1362 = vst [vmem:[%s1314 + $0x104] sm:$0x8] %v1361
        %v1363 = vld [vmem:[%s1314 + $0x114] sm:$0x8]
        %v1364 = vsel %vm1317, 0, %v1363
        %1365 = vst [vmem:[%s1314 + $0x114] sm:$0x8] %v1364
        %v1366 = vld [vmem:[%s1314 + $0x144] sm:$0x8]
        %v1367 = vsel %vm1317, 0, %v1366
        %1368 = vst [vmem:[%s1314 + $0x144] sm:$0x8] %v1367
        %v1369 = vld [vmem:[%s1314 + $0x154] sm:$0x8]
        %v1370 = vsel %vm1317, 0, %v1369
        %1371 = vst [vmem:[%s1314 + $0x154] sm:$0x8] %v1370
        %v1372 = vld [vmem:[%s1314 + $0x164] sm:$0x8]
        %v1373 = vsel %vm1317, 0, %v1372
        %1374 = vst [vmem:[%s1314 + $0x164] sm:$0x8] %v1373
        %v1375 = vld [vmem:[%s1314 + $0x174] sm:$0x8]
        %v1376 = vsel %vm1317, 0, %v1375
        %1377 = vst [vmem:[%s1314 + $0x174] sm:$0x8] %v1376
        %v1378 = vld [vmem:[%s1314 + $0x184] sm:$0x8]
        %v1379 = vsel %vm1317, 0, %v1378
        %1380 = vst [vmem:[%s1314 + $0x184] sm:$0x8] %v1379
        %v1381 = vld [vmem:[%s1314 + $0x194] sm:$0x8]
        %v1382 = vsel %vm1317, 0, %v1381
        %1383 = vst [vmem:[%s1314 + $0x194] sm:$0x8] %v1382
        %v1384 = vld [vmem:[%s1314 + $0x1a4] sm:$0x8]
        %v1385 = vsel %vm1317, 0, %v1384
        %1386 = vst [vmem:[%s1314 + $0x1a4] sm:$0x8] %v1385
        %v1387 = vld [vmem:[%s1314 + $0x1b4] sm:$0x8]
        %v1388 = vsel %vm1317, 0, %v1387
        %1389 = vst [vmem:[%s1314 + $0x1b4] sm:$0x8] %v1388
        %v1390 = vld [vmem:[%s1314 + $0x1e4] sm:$0x8]
        %v1391 = vsel %vm1317, 0, %v1390
        %1392 = vst [vmem:[%s1314 + $0x1e4] sm:$0x8] %v1391
        %v1393 = vld [vmem:[%s1314 + $0x1f4] sm:$0x8]
        %v1394 = vsel %vm1317, 0, %v1393
        %1395 = vst [vmem:[%s1314 + $0x1f4] sm:$0x8] %v1394
        %v1396 = vld [vmem:[%s1314 + $0x204] sm:$0x8]
        %v1397 = vsel %vm1317, 0, %v1396
        %1398 = vst [vmem:[%s1314 + $0x204] sm:$0x8] %v1397
        %v1399 = vld [vmem:[%s1314 + $0x214] sm:$0x8]
        %v1400 = vsel %vm1317, 0, %v1399
        %1401 = vst [vmem:[%s1314 + $0x214] sm:$0x8] %v1400
        %v1402 = vld [vmem:[%s1314 + $0x224] sm:$0x8]
        %v1403 = vsel %vm1317, 0, %v1402
        %1404 = vst [vmem:[%s1314 + $0x224] sm:$0x8] %v1403
        %v1405 = vld [vmem:[%s1314 + $0x234] sm:$0x8]
        %v1406 = vsel %vm1317, 0, %v1405
        %1407 = vst [vmem:[%s1314 + $0x234] sm:$0x8] %v1406
        %v1408 = vld [vmem:[%s1314 + $0x244] sm:$0x8]
        %v1409 = vsel %vm1317, 0, %v1408
        %1410 = vst [vmem:[%s1314 + $0x244] sm:$0x8] %v1409
        %v1411 = vld [vmem:[%s1314 + $0x254] sm:$0x8]
        %v1412 = vsel %vm1317, 0, %v1411
        %1413 = vst [vmem:[%s1314 + $0x254] sm:$0x8] %v1412
        %v1414 = vld [vmem:[%s1314 + $0xc] sm:$0x1]
        %v1415 = vsel %vm1267, 0, %v1414
        %1416 = vst [vmem:[%s1314 + $0xc] sm:$0x1] %v1415
        %v1417 = vld [vmem:[%s1314 + $0x1c] sm:$0x1]
        %v1418 = vsel %vm1267, 0, %v1417
        %1419 = vst [vmem:[%s1314 + $0x1c] sm:$0x1] %v1418
        %v1420 = vld [vmem:[%s1314 + $0x2c] sm:$0x1]
        %v1421 = vsel %vm1267, 0, %v1420
        %1422 = vst [vmem:[%s1314 + $0x2c] sm:$0x1] %v1421
        %v1423 = vld [vmem:[%s1314 + $0x3c] sm:$0x1]
        %v1424 = vsel %vm1267, 0, %v1423
        %1425 = vst [vmem:[%s1314 + $0x3c] sm:$0x1] %v1424
        %v1426 = vld [vmem:[%s1314 + $0x4c] sm:$0x1]
        %v1427 = vsel %vm1267, 0, %v1426
        %1428 = vst [vmem:[%s1314 + $0x4c] sm:$0x1] %v1427
        %v1429 = vld [vmem:[%s1314 + $0x5c] sm:$0x1]
        %v1430 = vsel %vm1267, 0, %v1429
        %1431 = vst [vmem:[%s1314 + $0x5c] sm:$0x1] %v1430
        %v1432 = vld [vmem:[%s1314 + $0x6c] sm:$0x1]
        %v1433 = vsel %vm1267, 0, %v1432
        %1434 = vst [vmem:[%s1314 + $0x6c] sm:$0x1] %v1433
        %v1435 = vld [vmem:[%s1314 + $0x7c] sm:$0x1]
        %v1436 = vsel %vm1267, 0, %v1435
        %1437 = vst [vmem:[%s1314 + $0x7c] sm:$0x1] %v1436
        %v1438 = vld [vmem:[%s1314 + $0xac] sm:$0x1]
        %v1439 = vsel %vm1267, 0, %v1438
        %1440 = vst [vmem:[%s1314 + $0xac] sm:$0x1] %v1439
        %v1441 = vld [vmem:[%s1314 + $0xbc] sm:$0x1]
        %v1442 = vsel %vm1267, 0, %v1441
        %1443 = vst [vmem:[%s1314 + $0xbc] sm:$0x1] %v1442
        %v1444 = vld [vmem:[%s1314 + $0xcc] sm:$0x1]
        %v1445 = vsel %vm1267, 0, %v1444
        %1446 = vst [vmem:[%s1314 + $0xcc] sm:$0x1] %v1445
        %v1447 = vld [vmem:[%s1314 + $0xdc] sm:$0x1]
        %v1448 = vsel %vm1267, 0, %v1447
        %1449 = vst [vmem:[%s1314 + $0xdc] sm:$0x1] %v1448
        %v1450 = vld [vmem:[%s1314 + $0xec] sm:$0x1]
        %v1451 = vsel %vm1267, 0, %v1450
        %1452 = vst [vmem:[%s1314 + $0xec] sm:$0x1] %v1451
        %v1453 = vld [vmem:[%s1314 + $0xfc] sm:$0x1]
        %v1454 = vsel %vm1267, 0, %v1453
        %1455 = vst [vmem:[%s1314 + $0xfc] sm:$0x1] %v1454
        %v1456 = vld [vmem:[%s1314 + $0x10c] sm:$0x1]
        %v1457 = vsel %vm1267, 0, %v1456
        %1458 = vst [vmem:[%s1314 + $0x10c] sm:$0x1] %v1457
        %v1459 = vld [vmem:[%s1314 + $0x11c] sm:$0x1]
        %v1460 = vsel %vm1267, 0, %v1459
        %1461 = vst [vmem:[%s1314 + $0x11c] sm:$0x1] %v1460
        %v1462 = vld [vmem:[%s1314 + $0x14c] sm:$0x1]
        %v1463 = vsel %vm1267, 0, %v1462
        %1464 = vst [vmem:[%s1314 + $0x14c] sm:$0x1] %v1463
        %v1465 = vld [vmem:[%s1314 + $0x15c] sm:$0x1]
        %v1466 = vsel %vm1267, 0, %v1465
        %1467 = vst [vmem:[%s1314 + $0x15c] sm:$0x1] %v1466
        %v1468 = vld [vmem:[%s1314 + $0x16c] sm:$0x1]
        %v1469 = vsel %vm1267, 0, %v1468
        %1470 = vst [vmem:[%s1314 + $0x16c] sm:$0x1] %v1469
        %v1471 = vld [vmem:[%s1314 + $0x17c] sm:$0x1]
        %v1472 = vsel %vm1267, 0, %v1471
        %1473 = vst [vmem:[%s1314 + $0x17c] sm:$0x1] %v1472
        %v1474 = vld [vmem:[%s1314 + $0x18c] sm:$0x1]
        %v1475 = vsel %vm1267, 0, %v1474
        %1476 = vst [vmem:[%s1314 + $0x18c] sm:$0x1] %v1475
        %v1477 = vld [vmem:[%s1314 + $0x19c] sm:$0x1]
        %v1478 = vsel %vm1267, 0, %v1477
        %1479 = vst [vmem:[%s1314 + $0x19c] sm:$0x1] %v1478
        %v1480 = vld [vmem:[%s1314 + $0x1ac] sm:$0x1]
        %v1481 = vsel %vm1267, 0, %v1480
        %1482 = vst [vmem:[%s1314 + $0x1ac] sm:$0x1] %v1481
        %v1483 = vld [vmem:[%s1314 + $0x1bc] sm:$0x1]
        %v1484 = vsel %vm1267, 0, %v1483
        %1485 = vst [vmem:[%s1314 + $0x1bc] sm:$0x1] %v1484
        %v1486 = vld [vmem:[%s1314 + $0x1ec] sm:$0x1]
        %v1487 = vsel %vm1267, 0, %v1486
        %1488 = vst [vmem:[%s1314 + $0x1ec] sm:$0x1] %v1487
        %v1489 = vld [vmem:[%s1314 + $0x1fc] sm:$0x1]
        %v1490 = vsel %vm1267, 0, %v1489
        %1491 = vst [vmem:[%s1314 + $0x1fc] sm:$0x1] %v1490
        %v1492 = vld [vmem:[%s1314 + $0x20c] sm:$0x1]
        %v1493 = vsel %vm1267, 0, %v1492
        %1494 = vst [vmem:[%s1314 + $0x20c] sm:$0x1] %v1493
        %v1495 = vld [vmem:[%s1314 + $0x21c] sm:$0x1]
        %v1496 = vsel %vm1267, 0, %v1495
        %1497 = vst [vmem:[%s1314 + $0x21c] sm:$0x1] %v1496
        %v1498 = vld [vmem:[%s1314 + $0x22c] sm:$0x1]
        %v1499 = vsel %vm1267, 0, %v1498
        %1500 = vst [vmem:[%s1314 + $0x22c] sm:$0x1] %v1499
        %v1501 = vld [vmem:[%s1314 + $0x23c] sm:$0x1]
        %v1502 = vsel %vm1267, 0, %v1501
        %1503 = vst [vmem:[%s1314 + $0x23c] sm:$0x1] %v1502
        %v1504 = vld [vmem:[%s1314 + $0x24c] sm:$0x1]
        %v1505 = vsel %vm1267, 0, %v1504
        %1506 = vst [vmem:[%s1314 + $0x24c] sm:$0x1] %v1505
        %v1507 = vld [vmem:[%s1314 + $0x25c] sm:$0x1]
        %v1508 = vsel %vm1267, 0, %v1507
        %1509 = vst [vmem:[%s1314 + $0x25c] sm:$0x1] %v1508
        %1510 = vst.msk [vmem:[%s1314 + $0x8] sm:$0xf] %vm1261, %v1229
        %1511 = vst.msk [vmem:[%s1314 + $0x18] sm:$0xf] %vm1261, %v1230
        %1512 = vst.msk [vmem:[%s1314 + $0x28] sm:$0xf] %vm1261, %v1231
        %1513 = vst.msk [vmem:[%s1314 + $0x38] sm:$0xf] %vm1261, %v1232
        %1514 = vst.msk [vmem:[%s1314 + $0x48] sm:$0xf] %vm1261, %v1233
        %1515 = vst.msk [vmem:[%s1314 + $0x58] sm:$0xf] %vm1261, %v1234
        %1516 = vst.msk [vmem:[%s1314 + $0x68] sm:$0xf] %vm1261, %v1235
        %1517 = vst.msk [vmem:[%s1314 + $0x78] sm:$0xf] %vm1261, %v1236
        %1518 = vst.msk [vmem:[%s1314 + $0xa8] sm:$0xf] %vm1261, %v1237
        %1519 = vst.msk [vmem:[%s1314 + $0xb8] sm:$0xf] %vm1261, %v1238
        %1520 = vst.msk [vmem:[%s1314 + $0xc8] sm:$0xf] %vm1261, %v1239
        %1521 = vst.msk [vmem:[%s1314 + $0xd8] sm:$0xf] %vm1261, %v1240
        %1522 = vst.msk [vmem:[%s1314 + $0xe8] sm:$0xf] %vm1261, %v1241
        %1523 = vst.msk [vmem:[%s1314 + $0xf8] sm:$0xf] %vm1261, %v1242
        %1524 = vst.msk [vmem:[%s1314 + $0x108] sm:$0xf] %vm1261, %v1243
        %1525 = vst.msk [vmem:[%s1314 + $0x118] sm:$0xf] %vm1261, %v1244
        %1526 = vst.msk [vmem:[%s1314 + $0x148] sm:$0xf] %vm1261, %v1245
        %1527 = vst.msk [vmem:[%s1314 + $0x158] sm:$0xf] %vm1261, %v1246
        %1528 = vst.msk [vmem:[%s1314 + $0x168] sm:$0xf] %vm1261, %v1247
        %1529 = vst.msk [vmem:[%s1314 + $0x178] sm:$0xf] %vm1261, %v1248
        %1530 = vst.msk [vmem:[%s1314 + $0x188] sm:$0xf] %vm1261, %v1249
        %1531 = vst.msk [vmem:[%s1314 + $0x198] sm:$0xf] %vm1261, %v1250
        %1532 = vst.msk [vmem:[%s1314 + $0x1a8] sm:$0xf] %vm1261, %v1251
        %1533 = vst.msk [vmem:[%s1314 + $0x1b8] sm:$0xf] %vm1261, %v1252
        %1534 = vst.msk [vmem:[%s1314 + $0x1e8] sm:$0xf] %vm1261, %v1253
        %1535 = vst.msk [vmem:[%s1314 + $0x1f8] sm:$0xf] %vm1261, %v1254
        %1536 = vst.msk [vmem:[%s1314 + $0x208] sm:$0xf] %vm1261, %v1255
        %1537 = vst.msk [vmem:[%s1314 + $0x218] sm:$0xf] %vm1261, %v1256
        %1538 = vst.msk [vmem:[%s1314 + $0x228] sm:$0xf] %vm1261, %v1257
        %1539 = vst.msk [vmem:[%s1314 + $0x238] sm:$0xf] %vm1261, %v1258
        %1540 = vst.msk [vmem:[%s1314 + $0x248] sm:$0xf] %vm1261, %v1259
        %1541 = vst.msk [vmem:[%s1314 + $0x258] sm:$0xf] %vm1261, %v1260
        %v1542 = vld [vmem:[#allocation2 + $0x4] sm:$0x8]
        %v1543 = vld [vmem:[#allocation2 + $0x8] sm:$0xf]
        %v1544 = vld [vmem:[#allocation2 + $0x14] sm:$0x8]
        %v1545 = vld [vmem:[#allocation2 + $0x18] sm:$0xf]
        %v1546 = vld [vmem:[#allocation2 + $0x24] sm:$0x8]
        %v1547 = vld [vmem:[#allocation2 + $0x28] sm:$0xf]
        %v1548 = vld [vmem:[#allocation2 + $0x34] sm:$0x8]
        %v1549 = vld [vmem:[#allocation2 + $0x38] sm:$0xf]
        %v1550 = vld [vmem:[#allocation2 + $0x44] sm:$0x8]
        %v1551 = vld [vmem:[#allocation2 + $0x48] sm:$0xf]
        %v1552 = vld [vmem:[#allocation2 + $0x54] sm:$0x8]
        %v1553 = vld [vmem:[#allocation2 + $0x58] sm:$0xf]
        %v1554 = vld [vmem:[#allocation2 + $0x64] sm:$0x8]
        %v1555 = vld [vmem:[#allocation2 + $0x68] sm:$0xf]
        %v1556 = vld [vmem:[#allocation2 + $0x74] sm:$0x8]
        %v1557 = vld [vmem:[#allocation2 + $0x78] sm:$0xf]
        %v1558 = vld [vmem:[#allocation2 + $0x84] sm:$0x8]
        %v1559 = vld [vmem:[#allocation2 + $0x88] sm:$0xf]
        %v1560 = vld [vmem:[#allocation2 + $0x94] sm:$0x8]
        %v1561 = vld [vmem:[#allocation2 + $0x98] sm:$0xf]
        %v1562 = vld [vmem:[#allocation2 + $0xa4] sm:$0x8]
        %v1563 = vld [vmem:[#allocation2 + $0xa8] sm:$0xf]
        %v1564 = vld [vmem:[#allocation2 + $0xb4] sm:$0x8]
        %v1565 = vld [vmem:[#allocation2 + $0xb8] sm:$0xf]
        %v1566 = vld [vmem:[#allocation2 + $0xc4] sm:$0x8]
        %v1567 = vld [vmem:[#allocation2 + $0xc8] sm:$0xf]
        %v1568 = vld [vmem:[#allocation2 + $0xd4] sm:$0x8]
        %v1569 = vld [vmem:[#allocation2 + $0xd8] sm:$0xf]
        %v1570 = vld [vmem:[#allocation2 + $0xe4] sm:$0x8]
        %v1571 = vld [vmem:[#allocation2 + $0xe8] sm:$0xf]
        %v1572 = vld [vmem:[#allocation2 + $0xf4] sm:$0x8]
        %v1573 = vld [vmem:[#allocation2 + $0xf8] sm:$0xf]
        %v1574 = vld [vmem:[#allocation2 + $0x104] sm:$0x8]
        %v1575 = vld [vmem:[#allocation2 + $0x108] sm:$0xf]
        %v1576 = vld [vmem:[#allocation2 + $0x114] sm:$0x8]
        %v1577 = vld [vmem:[#allocation2 + $0x118] sm:$0xf]
        %v1578 = vld [vmem:[#allocation2 + $0x124] sm:$0x8]
        %v1579 = vld [vmem:[#allocation2 + $0x128] sm:$0xf]
        %v1580 = vld [vmem:[#allocation2 + $0x134] sm:$0x8]
        %v1581 = vld [vmem:[#allocation2 + $0x138] sm:$0xf]
        %v1582 = vld [vmem:[#allocation2 + $0x144] sm:$0x8]
        %v1583 = vld [vmem:[#allocation2 + $0x148] sm:$0xf]
        %v1584 = vld [vmem:[#allocation2 + $0x154] sm:$0x8]
        %v1585 = vld [vmem:[#allocation2 + $0x158] sm:$0xf]
        %v1586 = vld [vmem:[#allocation2 + $0x164] sm:$0x8]
        %v1587 = vld [vmem:[#allocation2 + $0x168] sm:$0xf]
        %v1588 = vld [vmem:[#allocation2 + $0x174] sm:$0x8]
        %v1589 = vld [vmem:[#allocation2 + $0x178] sm:$0xf]
        %v1590 = vld [vmem:[#allocation2 + $0x184] sm:$0x8]
        %v1591 = vld [vmem:[#allocation2 + $0x188] sm:$0xf]
        %v1592 = vld [vmem:[#allocation2 + $0x194] sm:$0x8]
        %v1593 = vld [vmem:[#allocation2 + $0x198] sm:$0xf]
        %v1594 = vld [vmem:[#allocation2 + $0x1a4] sm:$0x8]
        %v1595 = vld [vmem:[#allocation2 + $0x1a8] sm:$0xf]
        %v1596 = vld [vmem:[#allocation2 + $0x1b4] sm:$0x8]
        %v1597 = vld [vmem:[#allocation2 + $0x1b8] sm:$0xf]
        %v1598 = vld [vmem:[#allocation2 + $0x1c4] sm:$0x8]
        %v1599 = vld [vmem:[#allocation2 + $0x1c8] sm:$0xf]
        %v1600 = vld [vmem:[#allocation2 + $0x1d4] sm:$0x8]
        %v1601 = vld [vmem:[#allocation2 + $0x1d8] sm:$0xf]
        %v1602 = vld [vmem:[#allocation2 + $0x1e4] sm:$0x8]
        %v1603 = vld [vmem:[#allocation2 + $0x1e8] sm:$0xf]
        %v1604 = vld [vmem:[#allocation2 + $0x1f4] sm:$0x8]
        %v1605 = vld [vmem:[#allocation2 + $0x1f8] sm:$0xf]
        %v1606 = vld [vmem:[#allocation2 + $0x204] sm:$0x8]
        %v1607 = vld [vmem:[#allocation2 + $0x208] sm:$0xf]
        %v1608 = vld [vmem:[#allocation2 + $0x214] sm:$0x8]
        %v1609 = vld [vmem:[#allocation2 + $0x218] sm:$0xf]
        %v1610 = vld [vmem:[#allocation2 + $0x224] sm:$0x8]
        %v1611 = vld [vmem:[#allocation2 + $0x228] sm:$0xf]
        %v1612 = vld [vmem:[#allocation2 + $0x234] sm:$0x8]
        %v1613 = vld [vmem:[#allocation2 + $0x238] sm:$0xf]
        %v1614 = vld [vmem:[#allocation2 + $0x244] sm:$0x8]
        %v1615 = vld [vmem:[#allocation2 + $0x248] sm:$0xf]
        %v1616 = vld [vmem:[#allocation2 + $0x254] sm:$0x8]
        %v1617 = vld [vmem:[#allocation2 + $0x258] sm:$0xf]
        %v1618 = vld [vmem:[#allocation2 + $0x264] sm:$0x8]
        %v1619 = vld [vmem:[#allocation2 + $0x268] sm:$0xf]
        %v1620 = vld [vmem:[#allocation2 + $0x274] sm:$0x8]
        %v1621 = vld [vmem:[#allocation2 + $0x278] sm:$0xf]
        %vm1622 = vsmask.f32 4368
        %vm1623 = vmor %vm1266, %vm1622
        %v1625 = vshrl.u32 %v1542, 16
        %v1627 = vrot.slane %v1625, 7
        %v1628 = vrot.slane %v1627, 4
        %v1630 = vshrl.u32 %v1543, 16
        %v1632 = vrot.slane %v1630, 7
        %v1633 = vshll.u32 %v1543, 16
        %v1635 = vor.u32 %v1632, %v1633
        %v1636 = vsel %vm1623, %v1628, %v1635
        %v1638 = vshrl.u32 %v1544, 16
        %v1640 = vrot.slane %v1638, 7
        %v1641 = vrot.slane %v1640, 4
        %v1643 = vshrl.u32 %v1545, 16
        %v1645 = vrot.slane %v1643, 7
        %v1646 = vshll.u32 %v1545, 16
        %v1648 = vor.u32 %v1645, %v1646
        %v1649 = vsel %vm1623, %v1641, %v1648
        %v1651 = vshrl.u32 %v1546, 16
        %v1653 = vrot.slane %v1651, 7
        %v1654 = vrot.slane %v1653, 4
        %v1656 = vshrl.u32 %v1547, 16
        %v1658 = vrot.slane %v1656, 7
        %v1659 = vshll.u32 %v1547, 16
        %v1661 = vor.u32 %v1658, %v1659
        %v1662 = vsel %vm1623, %v1654, %v1661
        %v1664 = vshrl.u32 %v1548, 16
        %v1666 = vrot.slane %v1664, 7
        %v1667 = vrot.slane %v1666, 4
        %v1669 = vshrl.u32 %v1549, 16
        %v1671 = vrot.slane %v1669, 7
        %v1672 = vshll.u32 %v1549, 16
        %v1674 = vor.u32 %v1671, %v1672
        %v1675 = vsel %vm1623, %v1667, %v1674
        %v1677 = vshrl.u32 %v1550, 16
        %v1679 = vrot.slane %v1677, 7
        %v1680 = vrot.slane %v1679, 4
        %v1682 = vshrl.u32 %v1551, 16
        %v1684 = vrot.slane %v1682, 7
        %v1685 = vshll.u32 %v1551, 16
        %v1687 = vor.u32 %v1684, %v1685
        %v1688 = vsel %vm1623, %v1680, %v1687
        %v1690 = vshrl.u32 %v1552, 16
        %v1692 = vrot.slane %v1690, 7
        %v1693 = vrot.slane %v1692, 4
        %v1695 = vshrl.u32 %v1553, 16
        %v1697 = vrot.slane %v1695, 7
        %v1698 = vshll.u32 %v1553, 16
        %v1700 = vor.u32 %v1697, %v1698
        %v1701 = vsel %vm1623, %v1693, %v1700
        %v1703 = vshrl.u32 %v1554, 16
        %v1705 = vrot.slane %v1703, 7
        %v1706 = vrot.slane %v1705, 4
        %v1708 = vshrl.u32 %v1555, 16
        %v1710 = vrot.slane %v1708, 7
        %v1711 = vshll.u32 %v1555, 16
        %v1713 = vor.u32 %v1710, %v1711
        %v1714 = vsel %vm1623, %v1706, %v1713
        %v1716 = vshrl.u32 %v1556, 16
        %v1718 = vrot.slane %v1716, 7
        %v1719 = vrot.slane %v1718, 4
        %v1721 = vshrl.u32 %v1557, 16
        %v1723 = vrot.slane %v1721, 7
        %v1724 = vshll.u32 %v1557, 16
        %v1726 = vor.u32 %v1723, %v1724
        %v1727 = vsel %vm1623, %v1719, %v1726
        %v1729 = vshrl.u32 %v1562, 16
        %v1731 = vrot.slane %v1729, 7
        %v1732 = vrot.slane %v1731, 4
        %v1734 = vshrl.u32 %v1563, 16
        %v1736 = vrot.slane %v1734, 7
        %v1737 = vshll.u32 %v1563, 16
        %v1739 = vor.u32 %v1736, %v1737
        %v1740 = vsel %vm1623, %v1732, %v1739
        %v1742 = vshrl.u32 %v1564, 16
        %v1744 = vrot.slane %v1742, 7
        %v1745 = vrot.slane %v1744, 4
        %v1747 = vshrl.u32 %v1565, 16
        %v1749 = vrot.slane %v1747, 7
        %v1750 = vshll.u32 %v1565, 16
        %v1752 = vor.u32 %v1749, %v1750
        %v1753 = vsel %vm1623, %v1745, %v1752
        %v1755 = vshrl.u32 %v1566, 16
        %v1757 = vrot.slane %v1755, 7
        %v1758 = vrot.slane %v1757, 4
        %v1760 = vshrl.u32 %v1567, 16
        %v1762 = vrot.slane %v1760, 7
        %v1763 = vshll.u32 %v1567, 16
        %v1765 = vor.u32 %v1762, %v1763
        %v1766 = vsel %vm1623, %v1758, %v1765
        %v1768 = vshrl.u32 %v1568, 16
        %v1770 = vrot.slane %v1768, 7
        %v1771 = vrot.slane %v1770, 4
        %v1773 = vshrl.u32 %v1569, 16
        %v1775 = vrot.slane %v1773, 7
        %v1776 = vshll.u32 %v1569, 16
        %v1778 = vor.u32 %v1775, %v1776
        %v1779 = vsel %vm1623, %v1771, %v1778
        %v1781 = vshrl.u32 %v1570, 16
        %v1783 = vrot.slane %v1781, 7
        %v1784 = vrot.slane %v1783, 4
        %v1786 = vshrl.u32 %v1571, 16
        %v1788 = vrot.slane %v1786, 7
        %v1789 = vshll.u32 %v1571, 16
        %v1791 = vor.u32 %v1788, %v1789
        %v1792 = vsel %vm1623, %v1784, %v1791
        %v1794 = vshrl.u32 %v1572, 16
        %v1796 = vrot.slane %v1794, 7
        %v1797 = vrot.slane %v1796, 4
        %v1799 = vshrl.u32 %v1573, 16
        %v1801 = vrot.slane %v1799, 7
        %v1802 = vshll.u32 %v1573, 16
        %v1804 = vor.u32 %v1801, %v1802
        %v1805 = vsel %vm1623, %v1797, %v1804
        %v1807 = vshrl.u32 %v1574, 16
        %v1809 = vrot.slane %v1807, 7
        %v1810 = vrot.slane %v1809, 4
        %v1812 = vshrl.u32 %v1575, 16
        %v1814 = vrot.slane %v1812, 7
        %v1815 = vshll.u32 %v1575, 16
        %v1817 = vor.u32 %v1814, %v1815
        %v1818 = vsel %vm1623, %v1810, %v1817
        %v1820 = vshrl.u32 %v1576, 16
        %v1822 = vrot.slane %v1820, 7
        %v1823 = vrot.slane %v1822, 4
        %v1825 = vshrl.u32 %v1577, 16
        %v1827 = vrot.slane %v1825, 7
        %v1828 = vshll.u32 %v1577, 16
        %v1830 = vor.u32 %v1827, %v1828
        %v1831 = vsel %vm1623, %v1823, %v1830
        %v1833 = vshrl.u32 %v1582, 16
        %v1835 = vrot.slane %v1833, 7
        %v1836 = vrot.slane %v1835, 4
        %v1838 = vshrl.u32 %v1583, 16
        %v1840 = vrot.slane %v1838, 7
        %v1841 = vshll.u32 %v1583, 16
        %v1843 = vor.u32 %v1840, %v1841
        %v1844 = vsel %vm1623, %v1836, %v1843
        %v1846 = vshrl.u32 %v1584, 16
        %v1848 = vrot.slane %v1846, 7
        %v1849 = vrot.slane %v1848, 4
        %v1851 = vshrl.u32 %v1585, 16
        %v1853 = vrot.slane %v1851, 7
        %v1854 = vshll.u32 %v1585, 16
        %v1856 = vor.u32 %v1853, %v1854
        %v1857 = vsel %vm1623, %v1849, %v1856
        %v1859 = vshrl.u32 %v1586, 16
        %v1861 = vrot.slane %v1859, 7
        %v1862 = vrot.slane %v1861, 4
        %v1864 = vshrl.u32 %v1587, 16
        %v1866 = vrot.slane %v1864, 7
        %v1867 = vshll.u32 %v1587, 16
        %v1869 = vor.u32 %v1866, %v1867
        %v1870 = vsel %vm1623, %v1862, %v1869
        %v1872 = vshrl.u32 %v1588, 16
        %v1874 = vrot.slane %v1872, 7
        %v1875 = vrot.slane %v1874, 4
        %v1877 = vshrl.u32 %v1589, 16
        %v1879 = vrot.slane %v1877, 7
        %v1880 = vshll.u32 %v1589, 16
        %v1882 = vor.u32 %v1879, %v1880
        %v1883 = vsel %vm1623, %v1875, %v1882
        %v1885 = vshrl.u32 %v1590, 16
        %v1887 = vrot.slane %v1885, 7
        %v1888 = vrot.slane %v1887, 4
        %v1890 = vshrl.u32 %v1591, 16
        %v1892 = vrot.slane %v1890, 7
        %v1893 = vshll.u32 %v1591, 16
        %v1895 = vor.u32 %v1892, %v1893
        %v1896 = vsel %vm1623, %v1888, %v1895
        %v1898 = vshrl.u32 %v1592, 16
        %v1900 = vrot.slane %v1898, 7
        %v1901 = vrot.slane %v1900, 4
        %v1903 = vshrl.u32 %v1593, 16
        %v1905 = vrot.slane %v1903, 7
        %v1906 = vshll.u32 %v1593, 16
        %v1908 = vor.u32 %v1905, %v1906
        %v1909 = vsel %vm1623, %v1901, %v1908
        %v1911 = vshrl.u32 %v1594, 16
        %v1913 = vrot.slane %v1911, 7
        %v1914 = vrot.slane %v1913, 4
        %v1916 = vshrl.u32 %v1595, 16
        %v1918 = vrot.slane %v1916, 7
        %v1919 = vshll.u32 %v1595, 16
        %v1921 = vor.u32 %v1918, %v1919
        %v1922 = vsel %vm1623, %v1914, %v1921
        %v1924 = vshrl.u32 %v1596, 16
        %v1926 = vrot.slane %v1924, 7
        %v1927 = vrot.slane %v1926, 4
        %v1929 = vshrl.u32 %v1597, 16
        %v1931 = vrot.slane %v1929, 7
        %v1932 = vshll.u32 %v1597, 16
        %v1934 = vor.u32 %v1931, %v1932
        %v1935 = vsel %vm1623, %v1927, %v1934
        %v1937 = vshrl.u32 %v1602, 16
        %v1939 = vrot.slane %v1937, 7
        %v1940 = vrot.slane %v1939, 4
        %v1942 = vshrl.u32 %v1603, 16
        %v1944 = vrot.slane %v1942, 7
        %v1945 = vshll.u32 %v1603, 16
        %v1947 = vor.u32 %v1944, %v1945
        %v1948 = vsel %vm1623, %v1940, %v1947
        %v1950 = vshrl.u32 %v1604, 16
        %v1952 = vrot.slane %v1950, 7
        %v1953 = vrot.slane %v1952, 4
        %v1955 = vshrl.u32 %v1605, 16
        %v1957 = vrot.slane %v1955, 7
        %v1958 = vshll.u32 %v1605, 16
        %v1960 = vor.u32 %v1957, %v1958
        %v1961 = vsel %vm1623, %v1953, %v1960
        %v1963 = vshrl.u32 %v1606, 16
        %v1965 = vrot.slane %v1963, 7
        %v1966 = vrot.slane %v1965, 4
        %v1968 = vshrl.u32 %v1607, 16
        %v1970 = vrot.slane %v1968, 7
        %v1971 = vshll.u32 %v1607, 16
        %v1973 = vor.u32 %v1970, %v1971
        %v1974 = vsel %vm1623, %v1966, %v1973
        %v1976 = vshrl.u32 %v1608, 16
        %v1978 = vrot.slane %v1976, 7
        %v1979 = vrot.slane %v1978, 4
        %v1981 = vshrl.u32 %v1609, 16
        %v1983 = vrot.slane %v1981, 7
        %v1984 = vshll.u32 %v1609, 16
        %v1986 = vor.u32 %v1983, %v1984
        %v1987 = vsel %vm1623, %v1979, %v1986
        %v1989 = vshrl.u32 %v1610, 16
        %v1991 = vrot.slane %v1989, 7
        %v1992 = vrot.slane %v1991, 4
        %v1994 = vshrl.u32 %v1611, 16
        %v1996 = vrot.slane %v1994, 7
        %v1997 = vshll.u32 %v1611, 16
        %v1999 = vor.u32 %v1996, %v1997
        %v2000 = vsel %vm1623, %v1992, %v1999
        %v2002 = vshrl.u32 %v1612, 16
        %v2004 = vrot.slane %v2002, 7
        %v2005 = vrot.slane %v2004, 4
        %v2007 = vshrl.u32 %v1613, 16
        %v2009 = vrot.slane %v2007, 7
        %v2010 = vshll.u32 %v1613, 16
        %v2012 = vor.u32 %v2009, %v2010
        %v2013 = vsel %vm1623, %v2005, %v2012
        %v2015 = vshrl.u32 %v1614, 16
        %v2017 = vrot.slane %v2015, 7
        %v2018 = vrot.slane %v2017, 4
        %v2020 = vshrl.u32 %v1615, 16
        %v2022 = vrot.slane %v2020, 7
        %v2023 = vshll.u32 %v1615, 16
        %v2025 = vor.u32 %v2022, %v2023
        %v2026 = vsel %vm1623, %v2018, %v2025
        %v2028 = vshrl.u32 %v1616, 16
        %v2030 = vrot.slane %v2028, 7
        %v2031 = vrot.slane %v2030, 4
        %v2033 = vshrl.u32 %v1617, 16
        %v2035 = vrot.slane %v2033, 7
        %v2036 = vshll.u32 %v1617, 16
        %v2038 = vor.u32 %v2035, %v2036
        %v2039 = vsel %vm1623, %v2031, %v2038
        %v2040 = vld [vmem:[#allocation6] sm:$0xf]
        %v2041 = vld [vmem:[#allocation6 + $0x4] sm:$0xf]
        %v2043 = vshrl.u32 %v1558, 16
        %v2045 = vrot.slane %v2043, 7
        %v2046 = vrot.slane %v2045, 4
        %v2048 = vshrl.u32 %v1559, 16
        %v2050 = vrot.slane %v2048, 7
        %v2051 = vshll.u32 %v1559, 16
        %v2053 = vor.u32 %v2050, %v2051
        %v2054 = vsel %vm1623, %v2046, %v2053
        %v2056 = vshrl.u32 %v1578, 16
        %v2058 = vrot.slane %v2056, 7
        %v2059 = vrot.slane %v2058, 4
        %v2061 = vshrl.u32 %v1579, 16
        %v2063 = vrot.slane %v2061, 7
        %v2064 = vshll.u32 %v1579, 16
        %v2066 = vor.u32 %v2063, %v2064
        %v2067 = vsel %vm1623, %v2059, %v2066
        %v2069 = vshrl.u32 %v1598, 16
        %v2071 = vrot.slane %v2069, 7
        %v2072 = vrot.slane %v2071, 4
        %v2074 = vshrl.u32 %v1599, 16
        %v2076 = vrot.slane %v2074, 7
        %v2077 = vshll.u32 %v1599, 16
        %v2079 = vor.u32 %v2076, %v2077
        %v2080 = vsel %vm1623, %v2072, %v2079
        %v2082 = vshrl.u32 %v1618, 16
        %v2084 = vrot.slane %v2082, 7
        %v2085 = vrot.slane %v2084, 4
        %v2087 = vshrl.u32 %v1619, 16
        %v2089 = vrot.slane %v2087, 7
        %v2090 = vshll.u32 %v1619, 16
        %v2092 = vor.u32 %v2089, %v2090
        %v2093 = vsel %vm1623, %v2085, %v2092
        %s2094 = scalar_lea.vmem [#allocation6], 24
        %v2095 = vld [vmem:[%s2094] sm:$0xf]
        %v2096 = vld [vmem:[%s2094 + $0x4] sm:$0xf]
        %v2097 = vunpack.c.l.b16 %v1649
        %v2098 = vunpack.c.l.b16 %v1662
        %v2099 = vunpack.c.l.b16 %v1675
        %v2100 = vunpack.c.l.b16 %v1688
        %v2101 = vunpack.c.l.b16 %v1701
        %v2102 = vunpack.c.l.b16 %v1714
        %v2103 = vunpack.c.l.b16 %v1727
        %v2104 = vunpack.c.l.b16 %v2054
        %v2105 = vunpack.c.l.b16 %v1753
        %v2106 = vunpack.c.l.b16 %v1766
        %v2107 = vunpack.c.l.b16 %v1779
        %v2108 = vunpack.c.l.b16 %v1792
        %v2109 = vunpack.c.l.b16 %v1805
        %v2110 = vunpack.c.l.b16 %v1818
        %v2111 = vunpack.c.l.b16 %v1831
        %v2112 = vunpack.c.l.b16 %v2067
        %v2113 = vunpack.c.l.b16 %v1857
        %v2114 = vunpack.c.l.b16 %v1870
        %v2115 = vunpack.c.l.b16 %v1883
        %v2116 = vunpack.c.l.b16 %v1896
        %v2117 = vunpack.c.l.b16 %v1909
        %v2118 = vunpack.c.l.b16 %v1922
        %v2119 = vunpack.c.l.b16 %v1935
        %v2120 = vunpack.c.l.b16 %v2080
        %v2121 = vunpack.c.l.b16 %v1961
        %v2122 = vunpack.c.l.b16 %v1974
        %v2123 = vunpack.c.l.b16 %v1987
        %v2124 = vunpack.c.l.b16 %v2000
        %v2125 = vunpack.c.l.b16 %v2013
        %v2126 = vunpack.c.l.b16 %v2026
        %v2127 = vunpack.c.l.b16 %v2039
        %v2128 = vunpack.c.l.b16 %v2093
        %v2129 = vpack.c.b16 %v2098, %v2097
        %v2130 = vpack.c.b16 %v2100, %v2099
        %v2131 = vpack.c.b16 %v2102, %v2101
        %v2132 = vpack.c.b16 %v2104, %v2103
        %v2133 = vpack.c.b16 %v2106, %v2105
        %v2134 = vpack.c.b16 %v2108, %v2107
        %v2135 = vpack.c.b16 %v2110, %v2109
        %v2136 = vpack.c.b16 %v2112, %v2111
        %v2137 = vpack.c.b16 %v2114, %v2113
        %v2138 = vpack.c.b16 %v2116, %v2115
        %v2139 = vpack.c.b16 %v2118, %v2117
        %v2140 = vpack.c.b16 %v2120, %v2119
        %v2141 = vpack.c.b16 %v2122, %v2121
        %v2142 = vpack.c.b16 %v2124, %v2123
        %v2143 = vpack.c.b16 %v2126, %v2125
        %v2144 = vpack.c.b16 %v2128, %v2127
        %v2147 = vunpack.c.l.b16 %v2095
        %v2148 = vunpack.c.l.b16 %v2096
        %v2149 = vpack.c.b16 %v2148, %v2147
        %vm2151 = vcmask 130048
        %v2153 = vsel %vm2151, %v2129, 0
        %v2156 = vsel %vm2151, %v2130, 0
        %v2159 = vsel %vm2151, %v2131, 0
        %v2162 = vsel %vm2151, %v2132, 0
        %v2165 = vsel %vm2151, %v2133, 0
        %v2168 = vsel %vm2151, %v2134, 0
        %v2171 = vsel %vm2151, %v2135, 0
        %v2174 = vsel %vm2151, %v2136, 0
        %v2177 = vsel %vm2151, %v2137, 0
        %v2180 = vsel %vm2151, %v2138, 0
        %v2183 = vsel %vm2151, %v2139, 0
        %v2186 = vsel %vm2151, %v2140, 0
        %v2189 = vsel %vm2151, %v2141, 0
        %v2192 = vsel %vm2151, %v2142, 0
        %v2195 = vsel %vm2151, %v2143, 0
        %v2198 = vsel %vm2151, %v2144, 0
        %2200 = vmatpush.bf16.msra.mxu0 0
        %2201 = vmatpush.bf16.msra.mxu0 0
        %2202 = vmatpush.bf16.msra.mxu0 0
        %2203 = vmatpush.bf16.msra.mxu0 0
        %2204 = vmatpush.bf16.msra.mxu0 0
        %2205 = vmatpush.bf16.msra.mxu0 0
        %2206 = vmatpush.bf16.msra.mxu0 0
        %2207 = vmatpush.bf16.msra.mxu0 %v2149
        %2208 = vmatmul.bf16.gmra.mxu0 %v2153
        %v2209 = vpop.f32.mrf.mxu0
        %v2210 = vadd.f32 0.0, %v2209
        %v2211 = vpop.f32.mrf.mxu0
        %v2212 = vadd.f32 0.0, %v2211
        %2213 = vmatmul.bf16.gmra.mxu0 %v2156
        %v2214 = vpop.f32.mrf.mxu0
        %v2215 = vadd.f32 0.0, %v2214
        %v2216 = vpop.f32.mrf.mxu0
        %v2217 = vadd.f32 0.0, %v2216
        %2218 = vmatmul.bf16.gmra.mxu0 %v2159
        %v2219 = vpop.f32.mrf.mxu0
        %v2220 = vadd.f32 0.0, %v2219
        %v2221 = vpop.f32.mrf.mxu0
        %v2222 = vadd.f32 0.0, %v2221
        %2223 = vmatmul.bf16.gmra.mxu0 %v2162
        %v2224 = vpop.f32.mrf.mxu0
        %v2225 = vadd.f32 0.0, %v2224
        %v2226 = vpop.f32.mrf.mxu0
        %v2227 = vadd.f32 0.0, %v2226
        %2228 = vmatmul.bf16.gmra.mxu0 %v2165
        %v2229 = vpop.f32.mrf.mxu0
        %v2230 = vadd.f32 0.0, %v2229
        %v2231 = vpop.f32.mrf.mxu0
        %v2232 = vadd.f32 0.0, %v2231
        %2233 = vmatmul.bf16.gmra.mxu0 %v2168
        %v2234 = vpop.f32.mrf.mxu0
        %v2235 = vadd.f32 0.0, %v2234
        %v2236 = vpop.f32.mrf.mxu0
        %v2237 = vadd.f32 0.0, %v2236
        %2238 = vmatmul.bf16.gmra.mxu0 %v2171
        %v2239 = vpop.f32.mrf.mxu0
        %v2240 = vadd.f32 0.0, %v2239
        %v2241 = vpop.f32.mrf.mxu0
        %v2242 = vadd.f32 0.0, %v2241
        %2243 = vmatmul.bf16.gmra.mxu0 %v2174
        %v2244 = vpop.f32.mrf.mxu0
        %v2245 = vadd.f32 0.0, %v2244
        %v2246 = vpop.f32.mrf.mxu0
        %v2247 = vadd.f32 0.0, %v2246
        %2248 = vmatmul.bf16.gmra.mxu0 %v2177
        %v2249 = vpop.f32.mrf.mxu0
        %v2250 = vadd.f32 0.0, %v2249
        %v2251 = vpop.f32.mrf.mxu0
        %v2252 = vadd.f32 0.0, %v2251
        %2253 = vmatmul.bf16.gmra.mxu0 %v2180
        %v2254 = vpop.f32.mrf.mxu0
        %v2255 = vadd.f32 0.0, %v2254
        %v2256 = vpop.f32.mrf.mxu0
        %v2257 = vadd.f32 0.0, %v2256
        %2258 = vmatmul.bf16.gmra.mxu0 %v2183
        %v2259 = vpop.f32.mrf.mxu0
        %v2260 = vadd.f32 0.0, %v2259
        %v2261 = vpop.f32.mrf.mxu0
        %v2262 = vadd.f32 0.0, %v2261
        %2263 = vmatmul.bf16.gmra.mxu0 %v2186
        %v2264 = vpop.f32.mrf.mxu0
        %v2265 = vadd.f32 0.0, %v2264
        %v2266 = vpop.f32.mrf.mxu0
        %v2267 = vadd.f32 0.0, %v2266
        %2268 = vmatmul.bf16.gmra.mxu0 %v2189
        %v2269 = vpop.f32.mrf.mxu0
        %v2270 = vadd.f32 0.0, %v2269
        %v2271 = vpop.f32.mrf.mxu0
        %v2272 = vadd.f32 0.0, %v2271
        %2273 = vmatmul.bf16.gmra.mxu0 %v2192
        %v2274 = vpop.f32.mrf.mxu0
        %v2275 = vadd.f32 0.0, %v2274
        %v2276 = vpop.f32.mrf.mxu0
        %v2277 = vadd.f32 0.0, %v2276
        %2278 = vmatmul.bf16.gmra.mxu0 %v2195
        %v2279 = vpop.f32.mrf.mxu0
        %v2280 = vadd.f32 0.0, %v2279
        %v2281 = vpop.f32.mrf.mxu0
        %v2282 = vadd.f32 0.0, %v2281
        %2283 = vmatmul.bf16.gmra.mxu0 %v2198
        %v2284 = vpop.f32.mrf.mxu0
        %v2285 = vadd.f32 0.0, %v2284
        %v2286 = vpop.f32.mrf.mxu0
        %v2287 = vadd.f32 0.0, %v2286
        %2288 = vdwg.mxu0
        %v2289 = vunpack.c.l.b16 %v1636
        %v2290 = vunpack.c.l.b16 %v1740
        %v2291 = vunpack.c.l.b16 %v1844
        %v2292 = vunpack.c.l.b16 %v1948
        %v2293 = vpack.c.b16 %v2097, %v2289
        %v2294 = vpack.c.b16 %v2099, %v2098
        %v2295 = vpack.c.b16 %v2101, %v2100
        %v2296 = vpack.c.b16 %v2103, %v2102
        %v2297 = vpack.c.b16 %v2105, %v2290
        %v2298 = vpack.c.b16 %v2107, %v2106
        %v2299 = vpack.c.b16 %v2109, %v2108
        %v2300 = vpack.c.b16 %v2111, %v2110
        %v2301 = vpack.c.b16 %v2113, %v2291
        %v2302 = vpack.c.b16 %v2115, %v2114
        %v2303 = vpack.c.b16 %v2117, %v2116
        %v2304 = vpack.c.b16 %v2119, %v2118
        %v2305 = vpack.c.b16 %v2121, %v2292
        %v2306 = vpack.c.b16 %v2123, %v2122
        %v2307 = vpack.c.b16 %v2125, %v2124
        %v2308 = vpack.c.b16 %v2127, %v2126
        %v2311 = vunpack.c.l.b16 %v2040
        %v2312 = vunpack.c.l.b16 %v2041
        %v2313 = vpack.c.b16 %v2312, %v2311
        %v2316 = vsel %vm2151, %v2293, 0
        %v2319 = vsel %vm2151, %v2294, 0
        %v2322 = vsel %vm2151, %v2295, 0
        %v2325 = vsel %vm2151, %v2296, 0
        %v2328 = vsel %vm2151, %v2297, 0
        %v2331 = vsel %vm2151, %v2298, 0
        %v2334 = vsel %vm2151, %v2299, 0
        %v2337 = vsel %vm2151, %v2300, 0
        %v2340 = vsel %vm2151, %v2301, 0
        %v2343 = vsel %vm2151, %v2302, 0
        %v2346 = vsel %vm2151, %v2303, 0
        %v2349 = vsel %vm2151, %v2304, 0
        %v2352 = vsel %vm2151, %v2305, 0
        %v2355 = vsel %vm2151, %v2306, 0
        %v2358 = vsel %vm2151, %v2307, 0
        %v2361 = vsel %vm2151, %v2308, 0
        %2363 = vmatpush.bf16.msra.mxu0 0
        %2364 = vmatpush.bf16.msra.mxu0 0
        %2365 = vmatpush.bf16.msra.mxu0 0
        %2366 = vmatpush.bf16.msra.mxu0 0
        %2367 = vmatpush.bf16.msra.mxu0 0
        %2368 = vmatpush.bf16.msra.mxu0 0
        %2369 = vmatpush.bf16.msra.mxu0 0
        %2370 = vmatpush.bf16.msra.mxu0 %v2313
        %2371 = vmatmul.bf16.gmra.mxu0 %v2316
        %v2372 = vpop.f32.mrf.mxu0
        %v2373 = vadd.f32 %v2210, %v2372
        %v2374 = vpop.f32.mrf.mxu0
        %v2375 = vadd.f32 %v2212, %v2374
        %2376 = vmatmul.bf16.gmra.mxu0 %v2319
        %v2377 = vpop.f32.mrf.mxu0
        %v2378 = vadd.f32 %v2215, %v2377
        %v2379 = vpop.f32.mrf.mxu0
        %v2380 = vadd.f32 %v2217, %v2379
        %2381 = vmatmul.bf16.gmra.mxu0 %v2322
        %v2382 = vpop.f32.mrf.mxu0
        %v2383 = vadd.f32 %v2220, %v2382
        %v2384 = vpop.f32.mrf.mxu0
        %v2385 = vadd.f32 %v2222, %v2384
        %2386 = vmatmul.bf16.gmra.mxu0 %v2325
        %v2387 = vpop.f32.mrf.mxu0
        %v2388 = vadd.f32 %v2225, %v2387
        %v2389 = vpop.f32.mrf.mxu0
        %v2390 = vadd.f32 %v2227, %v2389
        %2391 = vmatmul.bf16.gmra.mxu0 %v2328
        %v2392 = vpop.f32.mrf.mxu0
        %v2393 = vadd.f32 %v2230, %v2392
        %v2394 = vpop.f32.mrf.mxu0
        %v2395 = vadd.f32 %v2232, %v2394
        %2396 = vmatmul.bf16.gmra.mxu0 %v2331
        %v2397 = vpop.f32.mrf.mxu0
        %v2398 = vadd.f32 %v2235, %v2397
        %v2399 = vpop.f32.mrf.mxu0
        %v2400 = vadd.f32 %v2237, %v2399
        %2401 = vmatmul.bf16.gmra.mxu0 %v2334
        %v2402 = vpop.f32.mrf.mxu0
        %v2403 = vadd.f32 %v2240, %v2402
        %v2404 = vpop.f32.mrf.mxu0
        %v2405 = vadd.f32 %v2242, %v2404
        %2406 = vmatmul.bf16.gmra.mxu0 %v2337
        %v2407 = vpop.f32.mrf.mxu0
        %v2408 = vadd.f32 %v2245, %v2407
        %v2409 = vpop.f32.mrf.mxu0
        %v2410 = vadd.f32 %v2247, %v2409
        %2411 = vmatmul.bf16.gmra.mxu0 %v2340
        %v2412 = vpop.f32.mrf.mxu0
        %v2413 = vadd.f32 %v2250, %v2412
        %v2414 = vpop.f32.mrf.mxu0
        %v2415 = vadd.f32 %v2252, %v2414
        %2416 = vmatmul.bf16.gmra.mxu0 %v2343
        %v2417 = vpop.f32.mrf.mxu0
        %v2418 = vadd.f32 %v2255, %v2417
        %v2419 = vpop.f32.mrf.mxu0
        %v2420 = vadd.f32 %v2257, %v2419
        %2421 = vmatmul.bf16.gmra.mxu0 %v2346
        %v2422 = vpop.f32.mrf.mxu0
        %v2423 = vadd.f32 %v2260, %v2422
        %v2424 = vpop.f32.mrf.mxu0
        %v2425 = vadd.f32 %v2262, %v2424
        %2426 = vmatmul.bf16.gmra.mxu0 %v2349
        %v2427 = vpop.f32.mrf.mxu0
        %v2428 = vadd.f32 %v2265, %v2427
        %v2429 = vpop.f32.mrf.mxu0
        %v2430 = vadd.f32 %v2267, %v2429
        %2431 = vmatmul.bf16.gmra.mxu0 %v2352
        %v2432 = vpop.f32.mrf.mxu0
        %v2433 = vadd.f32 %v2270, %v2432
        %v2434 = vpop.f32.mrf.mxu0
        %v2435 = vadd.f32 %v2272, %v2434
        %2436 = vmatmul.bf16.gmra.mxu0 %v2355
        %v2437 = vpop.f32.mrf.mxu0
        %v2438 = vadd.f32 %v2275, %v2437
        %v2439 = vpop.f32.mrf.mxu0
        %v2440 = vadd.f32 %v2277, %v2439
        %2441 = vmatmul.bf16.gmra.mxu0 %v2358
        %v2442 = vpop.f32.mrf.mxu0
        %v2443 = vadd.f32 %v2280, %v2442
        %v2444 = vpop.f32.mrf.mxu0
        %v2445 = vadd.f32 %v2282, %v2444
        %2446 = vmatmul.bf16.gmra.mxu0 %v2361
        %v2447 = vpop.f32.mrf.mxu0
        %v2448 = vadd.f32 %v2285, %v2447
        %v2449 = vpop.f32.mrf.mxu0
        %v2450 = vadd.f32 %v2287, %v2449
        %2451 = vdwg.mxu0
        %v2453 = vshrl.u32 %v1560, 16
        %v2455 = vrot.slane %v2453, 7
        %v2456 = vrot.slane %v2455, 4
        %v2458 = vshrl.u32 %v1561, 16
        %v2460 = vrot.slane %v2458, 7
        %v2461 = vshll.u32 %v1561, 16
        %v2463 = vor.u32 %v2460, %v2461
        %v2464 = vsel %vm1623, %v2456, %v2463
        %v2466 = vshrl.u32 %v1580, 16
        %v2468 = vrot.slane %v2466, 7
        %v2469 = vrot.slane %v2468, 4
        %v2471 = vshrl.u32 %v1581, 16
        %v2473 = vrot.slane %v2471, 7
        %v2474 = vshll.u32 %v1581, 16
        %v2476 = vor.u32 %v2473, %v2474
        %v2477 = vsel %vm1623, %v2469, %v2476
        %v2479 = vshrl.u32 %v1600, 16
        %v2481 = vrot.slane %v2479, 7
        %v2482 = vrot.slane %v2481, 4
        %v2484 = vshrl.u32 %v1601, 16
        %v2486 = vrot.slane %v2484, 7
        %v2487 = vshll.u32 %v1601, 16
        %v2489 = vor.u32 %v2486, %v2487
        %v2490 = vsel %vm1623, %v2482, %v2489
        %v2492 = vshrl.u32 %v1620, 16
        %v2494 = vrot.slane %v2492, 7
        %v2495 = vrot.slane %v2494, 4
        %v2497 = vshrl.u32 %v1621, 16
        %v2499 = vrot.slane %v2497, 7
        %v2500 = vshll.u32 %v1621, 16
        %v2502 = vor.u32 %v2499, %v2500
        %v2503 = vsel %vm1623, %v2495, %v2502
        %s2504 = scalar_lea.vmem [#allocation6], 48
        %v2505 = vld [vmem:[%s2504] sm:$0xf]
        %v2506 = vld [vmem:[%s2504 + $0x4] sm:$0xf]
        %v2507 = vunpack.c.l.b16 %v2464
        %v2508 = vunpack.c.l.b16 %v2477
        %v2509 = vunpack.c.l.b16 %v2490
        %v2510 = vunpack.c.l.b16 %v2503
        %v2511 = vpack.c.b16 %v2507, %v2104
        %v2512 = vpack.c.b16 %v2508, %v2112
        %v2513 = vpack.c.b16 %v2509, %v2120
        %v2514 = vpack.c.b16 %v2510, %v2128
        %v2517 = vunpack.c.l.b16 %v2505
        %v2518 = vunpack.c.l.b16 %v2506
        %v2519 = vpack.c.b16 %v2518, %v2517
        %v2522 = vsel %vm2151, %v2511, 0
        %v2525 = vsel %vm2151, %v2512, 0
        %v2528 = vsel %vm2151, %v2513, 0
        %v2531 = vsel %vm2151, %v2514, 0
        %2533 = vmatpush.bf16.msra.mxu0 0
        %2534 = vmatpush.bf16.msra.mxu0 0
        %2535 = vmatpush.bf16.msra.mxu0 0
        %2536 = vmatpush.bf16.msra.mxu0 0
        %2537 = vmatpush.bf16.msra.mxu0 0
        %2538 = vmatpush.bf16.msra.mxu0 0
        %2539 = vmatpush.bf16.msra.mxu0 0
        %2540 = vmatpush.bf16.msra.mxu0 %v2519
        %2541 = vmatmul.bf16.gmra.mxu0 %v2319
        %v2542 = vpop.f32.mrf.mxu0
        %v2543 = vadd.f32 0.0, %v2542
        %v2544 = vpop.f32.mrf.mxu0
        %v2545 = vadd.f32 0.0, %v2544
        %2546 = vmatmul.bf16.gmra.mxu0 %v2322
        %v2547 = vpop.f32.mrf.mxu0
        %v2548 = vadd.f32 0.0, %v2547
        %v2549 = vpop.f32.mrf.mxu0
        %v2550 = vadd.f32 0.0, %v2549
        %2551 = vmatmul.bf16.gmra.mxu0 %v2325
        %v2552 = vpop.f32.mrf.mxu0
        %v2553 = vadd.f32 0.0, %v2552
        %v2554 = vpop.f32.mrf.mxu0
        %v2555 = vadd.f32 0.0, %v2554
        %2556 = vmatmul.bf16.gmra.mxu0 %v2522
        %v2557 = vpop.f32.mrf.mxu0
        %v2558 = vadd.f32 0.0, %v2557
        %v2559 = vpop.f32.mrf.mxu0
        %v2560 = vadd.f32 0.0, %v2559
        %2561 = vmatmul.bf16.gmra.mxu0 %v2331
        %v2562 = vpop.f32.mrf.mxu0
        %v2563 = vadd.f32 0.0, %v2562
        %v2564 = vpop.f32.mrf.mxu0
        %v2565 = vadd.f32 0.0, %v2564
        %2566 = vmatmul.bf16.gmra.mxu0 %v2334
        %v2567 = vpop.f32.mrf.mxu0
        %v2568 = vadd.f32 0.0, %v2567
        %v2569 = vpop.f32.mrf.mxu0
        %v2570 = vadd.f32 0.0, %v2569
        %2571 = vmatmul.bf16.gmra.mxu0 %v2337
        %v2572 = vpop.f32.mrf.mxu0
        %v2573 = vadd.f32 0.0, %v2572
        %v2574 = vpop.f32.mrf.mxu0
        %v2575 = vadd.f32 0.0, %v2574
        %2576 = vmatmul.bf16.gmra.mxu0 %v2525
        %v2577 = vpop.f32.mrf.mxu0
        %v2578 = vadd.f32 0.0, %v2577
        %v2579 = vpop.f32.mrf.mxu0
        %v2580 = vadd.f32 0.0, %v2579
        %2581 = vmatmul.bf16.gmra.mxu0 %v2343
        %v2582 = vpop.f32.mrf.mxu0
        %v2583 = vadd.f32 0.0, %v2582
        %v2584 = vpop.f32.mrf.mxu0
        %v2585 = vadd.f32 0.0, %v2584
        %2586 = vmatmul.bf16.gmra.mxu0 %v2346
        %v2587 = vpop.f32.mrf.mxu0
        %v2588 = vadd.f32 0.0, %v2587
        %v2589 = vpop.f32.mrf.mxu0
        %v2590 = vadd.f32 0.0, %v2589
        %2591 = vmatmul.bf16.gmra.mxu0 %v2349
        %v2592 = vpop.f32.mrf.mxu0
        %v2593 = vadd.f32 0.0, %v2592
        %v2594 = vpop.f32.mrf.mxu0
        %v2595 = vadd.f32 0.0, %v2594
        %2596 = vmatmul.bf16.gmra.mxu0 %v2528
        %v2597 = vpop.f32.mrf.mxu0
        %v2598 = vadd.f32 0.0, %v2597
        %v2599 = vpop.f32.mrf.mxu0
        %v2600 = vadd.f32 0.0, %v2599
        %2601 = vmatmul.bf16.gmra.mxu0 %v2355
        %v2602 = vpop.f32.mrf.mxu0
        %v2603 = vadd.f32 0.0, %v2602
        %v2604 = vpop.f32.mrf.mxu0
        %v2605 = vadd.f32 0.0, %v2604
        %2606 = vmatmul.bf16.gmra.mxu0 %v2358
        %v2607 = vpop.f32.mrf.mxu0
        %v2608 = vadd.f32 0.0, %v2607
        %v2609 = vpop.f32.mrf.mxu0
        %v2610 = vadd.f32 0.0, %v2609
        %2611 = vmatmul.bf16.gmra.mxu0 %v2361
        %v2612 = vpop.f32.mrf.mxu0
        %v2613 = vadd.f32 0.0, %v2612
        %v2614 = vpop.f32.mrf.mxu0
        %v2615 = vadd.f32 0.0, %v2614
        %2616 = vmatmul.bf16.gmra.mxu0 %v2531
        %v2617 = vpop.f32.mrf.mxu0
        %v2618 = vadd.f32 0.0, %v2617
        %v2619 = vpop.f32.mrf.mxu0
        %v2620 = vadd.f32 0.0, %v2619
        %2621 = vdwg.mxu0
        %v2622 = vadd.f32 %v2373, %v2543
        %v2623 = vadd.f32 %v2375, %v2545
        %v2624 = vadd.f32 %v2378, %v2548
        %v2625 = vadd.f32 %v2380, %v2550
        %v2626 = vadd.f32 %v2383, %v2553
        %v2627 = vadd.f32 %v2385, %v2555
        %v2628 = vadd.f32 %v2388, %v2558
        %v2629 = vadd.f32 %v2390, %v2560
        %v2630 = vadd.f32 %v2393, %v2563
        %v2631 = vadd.f32 %v2395, %v2565
        %v2632 = vadd.f32 %v2398, %v2568
        %v2633 = vadd.f32 %v2400, %v2570
        %v2634 = vadd.f32 %v2403, %v2573
        %v2635 = vadd.f32 %v2405, %v2575
        %v2636 = vadd.f32 %v2408, %v2578
        %v2637 = vadd.f32 %v2410, %v2580
        %v2638 = vadd.f32 %v2413, %v2583
        %v2639 = vadd.f32 %v2415, %v2585
        %v2640 = vadd.f32 %v2418, %v2588
        %v2641 = vadd.f32 %v2420, %v2590
        %v2642 = vadd.f32 %v2423, %v2593
        %v2643 = vadd.f32 %v2425, %v2595
        %v2644 = vadd.f32 %v2428, %v2598
        %v2645 = vadd.f32 %v2430, %v2600
        %v2646 = vadd.f32 %v2433, %v2603
        %v2647 = vadd.f32 %v2435, %v2605
        %v2648 = vadd.f32 %v2438, %v2608
        %v2649 = vadd.f32 %v2440, %v2610
        %v2650 = vadd.f32 %v2443, %v2613
        %v2651 = vadd.f32 %v2445, %v2615
        %v2652 = vadd.f32 %v2448, %v2618
        %v2653 = vadd.f32 %v2450, %v2620
        %s2654 = scalar_lea.vmem [#allocation6], 8
        %v2655 = vld [vmem:[%s2654] sm:$0xf]
        %v2656 = vld [vmem:[%s2654 + $0x4] sm:$0xf]
        %v2689 = vunpack.c.l.b16 %v1543
        %v2690 = vunpack.c.l.b16 %v1545
        %v2691 = vunpack.c.l.b16 %v1547
        %v2692 = vunpack.c.l.b16 %v1549
        %v2693 = vunpack.c.l.b16 %v1551
        %v2694 = vunpack.c.l.b16 %v1553
        %v2695 = vunpack.c.l.b16 %v1555
        %v2696 = vunpack.c.l.b16 %v1557
        %v2697 = vunpack.c.l.b16 %v1563
        %v2698 = vunpack.c.l.b16 %v1565
        %v2699 = vunpack.c.l.b16 %v1567
        %v2700 = vunpack.c.l.b16 %v1569
        %v2701 = vunpack.c.l.b16 %v1571
        %v2702 = vunpack.c.l.b16 %v1573
        %v2703 = vunpack.c.l.b16 %v1575
        %v2704 = vunpack.c.l.b16 %v1577
        %v2705 = vunpack.c.l.b16 %v1583
        %v2706 = vunpack.c.l.b16 %v1585
        %v2707 = vunpack.c.l.b16 %v1587
        %v2708 = vunpack.c.l.b16 %v1589
        %v2709 = vunpack.c.l.b16 %v1591
        %v2710 = vunpack.c.l.b16 %v1593
        %v2711 = vunpack.c.l.b16 %v1595
        %v2712 = vunpack.c.l.b16 %v1597
        %v2713 = vunpack.c.l.b16 %v1603
        %v2714 = vunpack.c.l.b16 %v1605
        %v2715 = vunpack.c.l.b16 %v1607
        %v2716 = vunpack.c.l.b16 %v1609
        %v2717 = vunpack.c.l.b16 %v1611
        %v2718 = vunpack.c.l.b16 %v1613
        %v2719 = vunpack.c.l.b16 %v1615
        %v2720 = vunpack.c.l.b16 %v1617
        %v2721 = vpack.c.b16 %v2690, %v2689
        %v2722 = vpack.c.b16 %v2692, %v2691
        %v2723 = vpack.c.b16 %v2694, %v2693
        %v2724 = vpack.c.b16 %v2696, %v2695
        %v2725 = vpack.c.b16 %v2698, %v2697
        %v2726 = vpack.c.b16 %v2700, %v2699
        %v2727 = vpack.c.b16 %v2702, %v2701
        %v2728 = vpack.c.b16 %v2704, %v2703
        %v2729 = vpack.c.b16 %v2706, %v2705
        %v2730 = vpack.c.b16 %v2708, %v2707
        %v2731 = vpack.c.b16 %v2710, %v2709
        %v2732 = vpack.c.b16 %v2712, %v2711
        %v2733 = vpack.c.b16 %v2714, %v2713
        %v2734 = vpack.c.b16 %v2716, %v2715
        %v2735 = vpack.c.b16 %v2718, %v2717
        %v2736 = vpack.c.b16 %v2720, %v2719
        %v2739 = vunpack.c.l.b16 %v2655
        %v2740 = vunpack.c.l.b16 %v2656
        %v2741 = vpack.c.b16 %v2740, %v2739
        %v2744 = vsel %vm2151, %v2721, 0
        %v2747 = vsel %vm2151, %v2722, 0
        %v2750 = vsel %vm2151, %v2723, 0
        %v2753 = vsel %vm2151, %v2724, 0
        %v2756 = vsel %vm2151, %v2725, 0
        %v2759 = vsel %vm2151, %v2726, 0
        %v2762 = vsel %vm2151, %v2727, 0
        %v2765 = vsel %vm2151, %v2728, 0
        %v2768 = vsel %vm2151, %v2729, 0
        %v2771 = vsel %vm2151, %v2730, 0
        %v2774 = vsel %vm2151, %v2731, 0
        %v2777 = vsel %vm2151, %v2732, 0
        %v2780 = vsel %vm2151, %v2733, 0
        %v2783 = vsel %vm2151, %v2734, 0
        %v2786 = vsel %vm2151, %v2735, 0
        %v2789 = vsel %vm2151, %v2736, 0
        %2791 = vmatpush.bf16.msra.mxu0 0
        %2792 = vmatpush.bf16.msra.mxu0 0
        %2793 = vmatpush.bf16.msra.mxu0 0
        %2794 = vmatpush.bf16.msra.mxu0 0
        %2795 = vmatpush.bf16.msra.mxu0 0
        %2796 = vmatpush.bf16.msra.mxu0 0
        %2797 = vmatpush.bf16.msra.mxu0 0
        %2798 = vmatpush.bf16.msra.mxu0 %v2741
        %2799 = vmatmul.bf16.gmra.mxu0 %v2744
        %v2800 = vpop.f32.mrf.mxu0
        %v2801 = vadd.f32 0.0, %v2800
        %v2802 = vpop.f32.mrf.mxu0
        %v2803 = vadd.f32 0.0, %v2802
        %2804 = vmatmul.bf16.gmra.mxu0 %v2747
        %v2805 = vpop.f32.mrf.mxu0
        %v2806 = vadd.f32 0.0, %v2805
        %v2807 = vpop.f32.mrf.mxu0
        %v2808 = vadd.f32 0.0, %v2807
        %2809 = vmatmul.bf16.gmra.mxu0 %v2750
        %v2810 = vpop.f32.mrf.mxu0
        %v2811 = vadd.f32 0.0, %v2810
        %v2812 = vpop.f32.mrf.mxu0
        %v2813 = vadd.f32 0.0, %v2812
        %2814 = vmatmul.bf16.gmra.mxu0 %v2753
        %v2815 = vpop.f32.mrf.mxu0
        %v2816 = vadd.f32 0.0, %v2815
        %v2817 = vpop.f32.mrf.mxu0
        %v2818 = vadd.f32 0.0, %v2817
        %2819 = vmatmul.bf16.gmra.mxu0 %v2756
        %v2820 = vpop.f32.mrf.mxu0
        %v2821 = vadd.f32 0.0, %v2820
        %v2822 = vpop.f32.mrf.mxu0
        %v2823 = vadd.f32 0.0, %v2822
        %2824 = vmatmul.bf16.gmra.mxu0 %v2759
        %v2825 = vpop.f32.mrf.mxu0
        %v2826 = vadd.f32 0.0, %v2825
        %v2827 = vpop.f32.mrf.mxu0
        %v2828 = vadd.f32 0.0, %v2827
        %2829 = vmatmul.bf16.gmra.mxu0 %v2762
        %v2830 = vpop.f32.mrf.mxu0
        %v2831 = vadd.f32 0.0, %v2830
        %v2832 = vpop.f32.mrf.mxu0
        %v2833 = vadd.f32 0.0, %v2832
        %2834 = vmatmul.bf16.gmra.mxu0 %v2765
        %v2835 = vpop.f32.mrf.mxu0
        %v2836 = vadd.f32 0.0, %v2835
        %v2837 = vpop.f32.mrf.mxu0
        %v2838 = vadd.f32 0.0, %v2837
        %2839 = vmatmul.bf16.gmra.mxu0 %v2768
        %v2840 = vpop.f32.mrf.mxu0
        %v2841 = vadd.f32 0.0, %v2840
        %v2842 = vpop.f32.mrf.mxu0
        %v2843 = vadd.f32 0.0, %v2842
        %2844 = vmatmul.bf16.gmra.mxu0 %v2771
        %v2845 = vpop.f32.mrf.mxu0
        %v2846 = vadd.f32 0.0, %v2845
        %v2847 = vpop.f32.mrf.mxu0
        %v2848 = vadd.f32 0.0, %v2847
        %2849 = vmatmul.bf16.gmra.mxu0 %v2774
        %v2850 = vpop.f32.mrf.mxu0
        %v2851 = vadd.f32 0.0, %v2850
        %v2852 = vpop.f32.mrf.mxu0
        %v2853 = vadd.f32 0.0, %v2852
        %2854 = vmatmul.bf16.gmra.mxu0 %v2777
        %v2855 = vpop.f32.mrf.mxu0
        %v2856 = vadd.f32 0.0, %v2855
        %v2857 = vpop.f32.mrf.mxu0
        %v2858 = vadd.f32 0.0, %v2857
        %2859 = vmatmul.bf16.gmra.mxu0 %v2780
        %v2860 = vpop.f32.mrf.mxu0
        %v2861 = vadd.f32 0.0, %v2860
        %v2862 = vpop.f32.mrf.mxu0
        %v2863 = vadd.f32 0.0, %v2862
        %2864 = vmatmul.bf16.gmra.mxu0 %v2783
        %v2865 = vpop.f32.mrf.mxu0
        %v2866 = vadd.f32 0.0, %v2865
        %v2867 = vpop.f32.mrf.mxu0
        %v2868 = vadd.f32 0.0, %v2867
        %2869 = vmatmul.bf16.gmra.mxu0 %v2786
        %v2870 = vpop.f32.mrf.mxu0
        %v2871 = vadd.f32 0.0, %v2870
        %v2872 = vpop.f32.mrf.mxu0
        %v2873 = vadd.f32 0.0, %v2872
        %2874 = vmatmul.bf16.gmra.mxu0 %v2789
        %v2875 = vpop.f32.mrf.mxu0
        %v2876 = vadd.f32 0.0, %v2875
        %v2877 = vpop.f32.mrf.mxu0
        %v2878 = vadd.f32 0.0, %v2877
        %2879 = vdwg.mxu0
        %v2880 = vadd.f32 %v2622, %v2801
        %v2881 = vadd.f32 %v2623, %v2803
        %v2882 = vadd.f32 %v2624, %v2806
        %v2883 = vadd.f32 %v2625, %v2808
        %v2884 = vadd.f32 %v2626, %v2811
        %v2885 = vadd.f32 %v2627, %v2813
        %v2886 = vadd.f32 %v2628, %v2816
        %v2887 = vadd.f32 %v2629, %v2818
        %v2888 = vadd.f32 %v2630, %v2821
        %v2889 = vadd.f32 %v2631, %v2823
        %v2890 = vadd.f32 %v2632, %v2826
        %v2891 = vadd.f32 %v2633, %v2828
        %v2892 = vadd.f32 %v2634, %v2831
        %v2893 = vadd.f32 %v2635, %v2833
        %v2894 = vadd.f32 %v2636, %v2836
        %v2895 = vadd.f32 %v2637, %v2838
        %v2896 = vadd.f32 %v2638, %v2841
        %v2897 = vadd.f32 %v2639, %v2843
        %v2898 = vadd.f32 %v2640, %v2846
        %v2899 = vadd.f32 %v2641, %v2848
        %v2900 = vadd.f32 %v2642, %v2851
        %v2901 = vadd.f32 %v2643, %v2853
        %v2902 = vadd.f32 %v2644, %v2856
        %v2903 = vadd.f32 %v2645, %v2858
        %v2904 = vadd.f32 %v2646, %v2861
        %v2905 = vadd.f32 %v2647, %v2863
        %v2906 = vadd.f32 %v2648, %v2866
        %v2907 = vadd.f32 %v2649, %v2868
        %v2908 = vadd.f32 %v2650, %v2871
        %v2909 = vadd.f32 %v2651, %v2873
        %v2910 = vadd.f32 %v2652, %v2876
        %v2911 = vadd.f32 %v2653, %v2878
        %s2912 = scalar_lea.vmem [#allocation6], 32
        %v2913 = vld [vmem:[%s2912] sm:$0xf]
        %v2914 = vld [vmem:[%s2912 + $0x4] sm:$0xf]
        %v2919 = vunpack.c.l.b16 %v1559
        %v2920 = vunpack.c.l.b16 %v1579
        %v2921 = vunpack.c.l.b16 %v1599
        %v2922 = vunpack.c.l.b16 %v1619
        %v2923 = vpack.c.b16 %v2691, %v2690
        %v2924 = vpack.c.b16 %v2693, %v2692
        %v2925 = vpack.c.b16 %v2695, %v2694
        %v2926 = vpack.c.b16 %v2919, %v2696
        %v2927 = vpack.c.b16 %v2699, %v2698
        %v2928 = vpack.c.b16 %v2701, %v2700
        %v2929 = vpack.c.b16 %v2703, %v2702
        %v2930 = vpack.c.b16 %v2920, %v2704
        %v2931 = vpack.c.b16 %v2707, %v2706
        %v2932 = vpack.c.b16 %v2709, %v2708
        %v2933 = vpack.c.b16 %v2711, %v2710
        %v2934 = vpack.c.b16 %v2921, %v2712
        %v2935 = vpack.c.b16 %v2715, %v2714
        %v2936 = vpack.c.b16 %v2717, %v2716
        %v2937 = vpack.c.b16 %v2719, %v2718
        %v2938 = vpack.c.b16 %v2922, %v2720
        %v2941 = vunpack.c.l.b16 %v2913
        %v2942 = vunpack.c.l.b16 %v2914
        %v2943 = vpack.c.b16 %v2942, %v2941
        %v2946 = vsel %vm2151, %v2923, 0
        %v2949 = vsel %vm2151, %v2924, 0
        %v2952 = vsel %vm2151, %v2925, 0
        %v2955 = vsel %vm2151, %v2926, 0
        %v2958 = vsel %vm2151, %v2927, 0
        %v2961 = vsel %vm2151, %v2928, 0
        %v2964 = vsel %vm2151, %v2929, 0
        %v2967 = vsel %vm2151, %v2930, 0
        %v2970 = vsel %vm2151, %v2931, 0
        %v2973 = vsel %vm2151, %v2932, 0
        %v2976 = vsel %vm2151, %v2933, 0
        %v2979 = vsel %vm2151, %v2934, 0
        %v2982 = vsel %vm2151, %v2935, 0
        %v2985 = vsel %vm2151, %v2936, 0
        %v2988 = vsel %vm2151, %v2937, 0
        %v2991 = vsel %vm2151, %v2938, 0
        %2993 = vmatpush.bf16.msra.mxu0 0
        %2994 = vmatpush.bf16.msra.mxu0 0
        %2995 = vmatpush.bf16.msra.mxu0 0
        %2996 = vmatpush.bf16.msra.mxu0 0
        %2997 = vmatpush.bf16.msra.mxu0 0
        %2998 = vmatpush.bf16.msra.mxu0 0
        %2999 = vmatpush.bf16.msra.mxu0 0
        %3000 = vmatpush.bf16.msra.mxu0 %v2943
        %3001 = vmatmul.bf16.gmra.mxu0 %v2946
        %v3002 = vpop.f32.mrf.mxu0
        %v3003 = vadd.f32 0.0, %v3002
        %v3004 = vpop.f32.mrf.mxu0
        %v3005 = vadd.f32 0.0, %v3004
        %3006 = vmatmul.bf16.gmra.mxu0 %v2949
        %v3007 = vpop.f32.mrf.mxu0
        %v3008 = vadd.f32 0.0, %v3007
        %v3009 = vpop.f32.mrf.mxu0
        %v3010 = vadd.f32 0.0, %v3009
        %3011 = vmatmul.bf16.gmra.mxu0 %v2952
        %v3012 = vpop.f32.mrf.mxu0
        %v3013 = vadd.f32 0.0, %v3012
        %v3014 = vpop.f32.mrf.mxu0
        %v3015 = vadd.f32 0.0, %v3014
        %3016 = vmatmul.bf16.gmra.mxu0 %v2955
        %v3017 = vpop.f32.mrf.mxu0
        %v3018 = vadd.f32 0.0, %v3017
        %v3019 = vpop.f32.mrf.mxu0
        %v3020 = vadd.f32 0.0, %v3019
        %3021 = vmatmul.bf16.gmra.mxu0 %v2958
        %v3022 = vpop.f32.mrf.mxu0
        %v3023 = vadd.f32 0.0, %v3022
        %v3024 = vpop.f32.mrf.mxu0
        %v3025 = vadd.f32 0.0, %v3024
        %3026 = vmatmul.bf16.gmra.mxu0 %v2961
        %v3027 = vpop.f32.mrf.mxu0
        %v3028 = vadd.f32 0.0, %v3027
        %v3029 = vpop.f32.mrf.mxu0
        %v3030 = vadd.f32 0.0, %v3029
        %3031 = vmatmul.bf16.gmra.mxu0 %v2964
        %v3032 = vpop.f32.mrf.mxu0
        %v3033 = vadd.f32 0.0, %v3032
        %v3034 = vpop.f32.mrf.mxu0
        %v3035 = vadd.f32 0.0, %v3034
        %3036 = vmatmul.bf16.gmra.mxu0 %v2967
        %v3037 = vpop.f32.mrf.mxu0
        %v3038 = vadd.f32 0.0, %v3037
        %v3039 = vpop.f32.mrf.mxu0
        %v3040 = vadd.f32 0.0, %v3039
        %3041 = vmatmul.bf16.gmra.mxu0 %v2970
        %v3042 = vpop.f32.mrf.mxu0
        %v3043 = vadd.f32 0.0, %v3042
        %v3044 = vpop.f32.mrf.mxu0
        %v3045 = vadd.f32 0.0, %v3044
        %3046 = vmatmul.bf16.gmra.mxu0 %v2973
        %v3047 = vpop.f32.mrf.mxu0
        %v3048 = vadd.f32 0.0, %v3047
        %v3049 = vpop.f32.mrf.mxu0
        %v3050 = vadd.f32 0.0, %v3049
        %3051 = vmatmul.bf16.gmra.mxu0 %v2976
        %v3052 = vpop.f32.mrf.mxu0
        %v3053 = vadd.f32 0.0, %v3052
        %v3054 = vpop.f32.mrf.mxu0
        %v3055 = vadd.f32 0.0, %v3054
        %3056 = vmatmul.bf16.gmra.mxu0 %v2979
        %v3057 = vpop.f32.mrf.mxu0
        %v3058 = vadd.f32 0.0, %v3057
        %v3059 = vpop.f32.mrf.mxu0
        %v3060 = vadd.f32 0.0, %v3059
        %3061 = vmatmul.bf16.gmra.mxu0 %v2982
        %v3062 = vpop.f32.mrf.mxu0
        %v3063 = vadd.f32 0.0, %v3062
        %v3064 = vpop.f32.mrf.mxu0
        %v3065 = vadd.f32 0.0, %v3064
        %3066 = vmatmul.bf16.gmra.mxu0 %v2985
        %v3067 = vpop.f32.mrf.mxu0
        %v3068 = vadd.f32 0.0, %v3067
        %v3069 = vpop.f32.mrf.mxu0
        %v3070 = vadd.f32 0.0, %v3069
        %3071 = vmatmul.bf16.gmra.mxu0 %v2988
        %v3072 = vpop.f32.mrf.mxu0
        %v3073 = vadd.f32 0.0, %v3072
        %v3074 = vpop.f32.mrf.mxu0
        %v3075 = vadd.f32 0.0, %v3074
        %3076 = vmatmul.bf16.gmra.mxu0 %v2991
        %v3077 = vpop.f32.mrf.mxu0
        %v3078 = vadd.f32 0.0, %v3077
        %v3079 = vpop.f32.mrf.mxu0
        %v3080 = vadd.f32 0.0, %v3079
        %3081 = vdwg.mxu0
        %v3082 = vadd.f32 %v2880, %v3003
        %v3083 = vadd.f32 %v2881, %v3005
        %v3084 = vadd.f32 %v2882, %v3008
        %v3085 = vadd.f32 %v2883, %v3010
        %v3086 = vadd.f32 %v2884, %v3013
        %v3087 = vadd.f32 %v2885, %v3015
        %v3088 = vadd.f32 %v2886, %v3018
        %v3089 = vadd.f32 %v2887, %v3020
        %v3090 = vadd.f32 %v2888, %v3023
        %v3091 = vadd.f32 %v2889, %v3025
        %v3092 = vadd.f32 %v2890, %v3028
        %v3093 = vadd.f32 %v2891, %v3030
        %v3094 = vadd.f32 %v2892, %v3033
        %v3095 = vadd.f32 %v2893, %v3035
        %v3096 = vadd.f32 %v2894, %v3038
        %v3097 = vadd.f32 %v2895, %v3040
        %v3098 = vadd.f32 %v2896, %v3043
        %v3099 = vadd.f32 %v2897, %v3045
        %v3100 = vadd.f32 %v2898, %v3048
        %v3101 = vadd.f32 %v2899, %v3050
        %v3102 = vadd.f32 %v2900, %v3053
        %v3103 = vadd.f32 %v2901, %v3055
        %v3104 = vadd.f32 %v2902, %v3058
        %v3105 = vadd.f32 %v2903, %v3060
        %v3106 = vadd.f32 %v2904, %v3063
        %v3107 = vadd.f32 %v2905, %v3065
        %v3108 = vadd.f32 %v2906, %v3068
        %v3109 = vadd.f32 %v2907, %v3070
        %v3110 = vadd.f32 %v2908, %v3073
        %v3111 = vadd.f32 %v2909, %v3075
        %v3112 = vadd.f32 %v2910, %v3078
        %v3113 = vadd.f32 %v2911, %v3080
        %s3114 = scalar_lea.vmem [#allocation6], 56
        %v3115 = vld [vmem:[%s3114] sm:$0xf]
        %v3116 = vld [vmem:[%s3114 + $0x4] sm:$0xf]
        %v3121 = vunpack.c.l.b16 %v1561
        %v3122 = vunpack.c.l.b16 %v1581
        %v3123 = vunpack.c.l.b16 %v1601
        %v3124 = vunpack.c.l.b16 %v1621
        %v3125 = vpack.c.b16 %v3121, %v2919
        %v3126 = vpack.c.b16 %v3122, %v2920
        %v3127 = vpack.c.b16 %v3123, %v2921
        %v3128 = vpack.c.b16 %v3124, %v2922
        %v3131 = vunpack.c.l.b16 %v3115
        %v3132 = vunpack.c.l.b16 %v3116
        %v3133 = vpack.c.b16 %v3132, %v3131
        %v3136 = vsel %vm2151, %v3125, 0
        %v3139 = vsel %vm2151, %v3126, 0
        %v3142 = vsel %vm2151, %v3127, 0
        %v3145 = vsel %vm2151, %v3128, 0
        %3147 = vmatpush.bf16.msra.mxu0 0
        %3148 = vmatpush.bf16.msra.mxu0 0
        %3149 = vmatpush.bf16.msra.mxu0 0
        %3150 = vmatpush.bf16.msra.mxu0 0
        %3151 = vmatpush.bf16.msra.mxu0 0
        %3152 = vmatpush.bf16.msra.mxu0 0
        %3153 = vmatpush.bf16.msra.mxu0 0
        %3154 = vmatpush.bf16.msra.mxu0 %v3133
        %3155 = vmatmul.bf16.gmra.mxu0 %v2747
        %v3156 = vpop.f32.mrf.mxu0
        %v3157 = vadd.f32 0.0, %v3156
        %v3158 = vpop.f32.mrf.mxu0
        %v3159 = vadd.f32 0.0, %v3158
        %3160 = vmatmul.bf16.gmra.mxu0 %v2750
        %v3161 = vpop.f32.mrf.mxu0
        %v3162 = vadd.f32 0.0, %v3161
        %v3163 = vpop.f32.mrf.mxu0
        %v3164 = vadd.f32 0.0, %v3163
        %3165 = vmatmul.bf16.gmra.mxu0 %v2753
        %v3166 = vpop.f32.mrf.mxu0
        %v3167 = vadd.f32 0.0, %v3166
        %v3168 = vpop.f32.mrf.mxu0
        %v3169 = vadd.f32 0.0, %v3168
        %3170 = vmatmul.bf16.gmra.mxu0 %v3136
        %v3171 = vpop.f32.mrf.mxu0
        %v3172 = vadd.f32 0.0, %v3171
        %v3173 = vpop.f32.mrf.mxu0
        %v3174 = vadd.f32 0.0, %v3173
        %3175 = vmatmul.bf16.gmra.mxu0 %v2759
        %v3176 = vpop.f32.mrf.mxu0
        %v3177 = vadd.f32 0.0, %v3176
        %v3178 = vpop.f32.mrf.mxu0
        %v3179 = vadd.f32 0.0, %v3178
        %3180 = vmatmul.bf16.gmra.mxu0 %v2762
        %v3181 = vpop.f32.mrf.mxu0
        %v3182 = vadd.f32 0.0, %v3181
        %v3183 = vpop.f32.mrf.mxu0
        %v3184 = vadd.f32 0.0, %v3183
        %3185 = vmatmul.bf16.gmra.mxu0 %v2765
        %v3186 = vpop.f32.mrf.mxu0
        %v3187 = vadd.f32 0.0, %v3186
        %v3188 = vpop.f32.mrf.mxu0
        %v3189 = vadd.f32 0.0, %v3188
        %3190 = vmatmul.bf16.gmra.mxu0 %v3139
        %v3191 = vpop.f32.mrf.mxu0
        %v3192 = vadd.f32 0.0, %v3191
        %v3193 = vpop.f32.mrf.mxu0
        %v3194 = vadd.f32 0.0, %v3193
        %3195 = vmatmul.bf16.gmra.mxu0 %v2771
        %v3196 = vpop.f32.mrf.mxu0
        %v3197 = vadd.f32 0.0, %v3196
        %v3198 = vpop.f32.mrf.mxu0
        %v3199 = vadd.f32 0.0, %v3198
        %3200 = vmatmul.bf16.gmra.mxu0 %v2774
        %v3201 = vpop.f32.mrf.mxu0
        %v3202 = vadd.f32 0.0, %v3201
        %v3203 = vpop.f32.mrf.mxu0
        %v3204 = vadd.f32 0.0, %v3203
        %3205 = vmatmul.bf16.gmra.mxu0 %v2777
        %v3206 = vpop.f32.mrf.mxu0
        %v3207 = vadd.f32 0.0, %v3206
        %v3208 = vpop.f32.mrf.mxu0
        %v3209 = vadd.f32 0.0, %v3208
        %3210 = vmatmul.bf16.gmra.mxu0 %v3142
        %v3211 = vpop.f32.mrf.mxu0
        %v3212 = vadd.f32 0.0, %v3211
        %v3213 = vpop.f32.mrf.mxu0
        %v3214 = vadd.f32 0.0, %v3213
        %3215 = vmatmul.bf16.gmra.mxu0 %v2783
        %v3216 = vpop.f32.mrf.mxu0
        %v3217 = vadd.f32 0.0, %v3216
        %v3218 = vpop.f32.mrf.mxu0
        %v3219 = vadd.f32 0.0, %v3218
        %3220 = vmatmul.bf16.gmra.mxu0 %v2786
        %v3221 = vpop.f32.mrf.mxu0
        %v3222 = vadd.f32 0.0, %v3221
        %v3223 = vpop.f32.mrf.mxu0
        %v3224 = vadd.f32 0.0, %v3223
        %3225 = vmatmul.bf16.gmra.mxu0 %v2789
        %v3226 = vpop.f32.mrf.mxu0
        %v3227 = vadd.f32 0.0, %v3226
        %v3228 = vpop.f32.mrf.mxu0
        %v3229 = vadd.f32 0.0, %v3228
        %3230 = vmatmul.bf16.gmra.mxu0 %v3145
        %v3231 = vpop.f32.mrf.mxu0
        %v3232 = vadd.f32 0.0, %v3231
        %v3233 = vpop.f32.mrf.mxu0
        %v3234 = vadd.f32 0.0, %v3233
        %3235 = vdwg.mxu0
        %v3236 = vadd.f32 %v3082, %v3157
        %v3237 = vadd.f32 %v3083, %v3159
        %v3238 = vadd.f32 %v3084, %v3162
        %v3239 = vadd.f32 %v3085, %v3164
        %v3240 = vadd.f32 %v3086, %v3167
        %v3241 = vadd.f32 %v3087, %v3169
        %v3242 = vadd.f32 %v3088, %v3172
        %v3243 = vadd.f32 %v3089, %v3174
        %v3244 = vadd.f32 %v3090, %v3177
        %v3245 = vadd.f32 %v3091, %v3179
        %v3246 = vadd.f32 %v3092, %v3182
        %v3247 = vadd.f32 %v3093, %v3184
        %v3248 = vadd.f32 %v3094, %v3187
        %v3249 = vadd.f32 %v3095, %v3189
        %v3250 = vadd.f32 %v3096, %v3192
        %v3251 = vadd.f32 %v3097, %v3194
        %v3252 = vadd.f32 %v3098, %v3197
        %v3253 = vadd.f32 %v3099, %v3199
        %v3254 = vadd.f32 %v3100, %v3202
        %v3255 = vadd.f32 %v3101, %v3204
        %v3256 = vadd.f32 %v3102, %v3207
        %v3257 = vadd.f32 %v3103, %v3209
        %v3258 = vadd.f32 %v3104, %v3212
        %v3259 = vadd.f32 %v3105, %v3214
        %v3260 = vadd.f32 %v3106, %v3217
        %v3261 = vadd.f32 %v3107, %v3219
        %v3262 = vadd.f32 %v3108, %v3222
        %v3263 = vadd.f32 %v3109, %v3224
        %v3264 = vadd.f32 %v3110, %v3227
        %v3265 = vadd.f32 %v3111, %v3229
        %v3266 = vadd.f32 %v3112, %v3232
        %v3267 = vadd.f32 %v3113, %v3234
        %v3268 = vld [vmem:[#allocation2 + $0x8] sm:$0xf]
        %v3269 = vld [vmem:[#allocation2 + $0xc] sm:$0x1]
        %v3270 = vld [vmem:[#allocation2 + $0x18] sm:$0xf]
        %v3271 = vld [vmem:[#allocation2 + $0x1c] sm:$0x1]
        %v3272 = vld [vmem:[#allocation2 + $0x28] sm:$0xf]
        %v3273 = vld [vmem:[#allocation2 + $0x2c] sm:$0x1]
        %v3274 = vld [vmem:[#allocation2 + $0x38] sm:$0xf]
        %v3275 = vld [vmem:[#allocation2 + $0x3c] sm:$0x1]
        %v3276 = vld [vmem:[#allocation2 + $0x48] sm:$0xf]
        %v3277 = vld [vmem:[#allocation2 + $0x4c] sm:$0x1]
        %v3278 = vld [vmem:[#allocation2 + $0x58] sm:$0xf]
        %v3279 = vld [vmem:[#allocation2 + $0x5c] sm:$0x1]
        %v3280 = vld [vmem:[#allocation2 + $0x68] sm:$0xf]
        %v3281 = vld [vmem:[#allocation2 + $0x6c] sm:$0x1]
        %v3282 = vld [vmem:[#allocation2 + $0x78] sm:$0xf]
        %v3283 = vld [vmem:[#allocation2 + $0x7c] sm:$0x1]
        %v3284 = vld [vmem:[#allocation2 + $0x88] sm:$0xf]
        %v3285 = vld [vmem:[#allocation2 + $0x8c] sm:$0x1]
        %v3286 = vld [vmem:[#allocation2 + $0x98] sm:$0xf]
        %v3287 = vld [vmem:[#allocation2 + $0x9c] sm:$0x1]
        %v3288 = vld [vmem:[#allocation2 + $0xa8] sm:$0xf]
        %v3289 = vld [vmem:[#allocation2 + $0xac] sm:$0x1]
        %v3290 = vld [vmem:[#allocation2 + $0xb8] sm:$0xf]
        %v3291 = vld [vmem:[#allocation2 + $0xbc] sm:$0x1]
        %v3292 = vld [vmem:[#allocation2 + $0xc8] sm:$0xf]
        %v3293 = vld [vmem:[#allocation2 + $0xcc] sm:$0x1]
        %v3294 = vld [vmem:[#allocation2 + $0xd8] sm:$0xf]
        %v3295 = vld [vmem:[#allocation2 + $0xdc] sm:$0x1]
        %v3296 = vld [vmem:[#allocation2 + $0xe8] sm:$0xf]
        %v3297 = vld [vmem:[#allocation2 + $0xec] sm:$0x1]
        %v3298 = vld [vmem:[#allocation2 + $0xf8] sm:$0xf]
        %v3299 = vld [vmem:[#allocation2 + $0xfc] sm:$0x1]
        %v3300 = vld [vmem:[#allocation2 + $0x108] sm:$0xf]
        %v3301 = vld [vmem:[#allocation2 + $0x10c] sm:$0x1]
        %v3302 = vld [vmem:[#allocation2 + $0x118] sm:$0xf]
        %v3303 = vld [vmem:[#allocation2 + $0x11c] sm:$0x1]
        %v3304 = vld [vmem:[#allocation2 + $0x128] sm:$0xf]
        %v3305 = vld [vmem:[#allocation2 + $0x12c] sm:$0x1]
        %v3306 = vld [vmem:[#allocation2 + $0x138] sm:$0xf]
        %v3307 = vld [vmem:[#allocation2 + $0x13c] sm:$0x1]
        %v3308 = vld [vmem:[#allocation2 + $0x148] sm:$0xf]
        %v3309 = vld [vmem:[#allocation2 + $0x14c] sm:$0x1]
        %v3310 = vld [vmem:[#allocation2 + $0x158] sm:$0xf]
        %v3311 = vld [vmem:[#allocation2 + $0x15c] sm:$0x1]
        %v3312 = vld [vmem:[#allocation2 + $0x168] sm:$0xf]
        %v3313 = vld [vmem:[#allocation2 + $0x16c] sm:$0x1]
        %v3314 = vld [vmem:[#allocation2 + $0x178] sm:$0xf]
        %v3315 = vld [vmem:[#allocation2 + $0x17c] sm:$0x1]
        %v3316 = vld [vmem:[#allocation2 + $0x188] sm:$0xf]
        %v3317 = vld [vmem:[#allocation2 + $0x18c] sm:$0x1]
        %v3318 = vld [vmem:[#allocation2 + $0x198] sm:$0xf]
        %v3319 = vld [vmem:[#allocation2 + $0x19c] sm:$0x1]
        %v3320 = vld [vmem:[#allocation2 + $0x1a8] sm:$0xf]
        %v3321 = vld [vmem:[#allocation2 + $0x1ac] sm:$0x1]
        %v3322 = vld [vmem:[#allocation2 + $0x1b8] sm:$0xf]
        %v3323 = vld [vmem:[#allocation2 + $0x1bc] sm:$0x1]
        %v3324 = vld [vmem:[#allocation2 + $0x1c8] sm:$0xf]
        %v3325 = vld [vmem:[#allocation2 + $0x1cc] sm:$0x1]
        %v3326 = vld [vmem:[#allocation2 + $0x1d8] sm:$0xf]
        %v3327 = vld [vmem:[#allocation2 + $0x1dc] sm:$0x1]
        %v3328 = vld [vmem:[#allocation2 + $0x1e8] sm:$0xf]
        %v3329 = vld [vmem:[#allocation2 + $0x1ec] sm:$0x1]
        %v3330 = vld [vmem:[#allocation2 + $0x1f8] sm:$0xf]
        %v3331 = vld [vmem:[#allocation2 + $0x1fc] sm:$0x1]
        %v3332 = vld [vmem:[#allocation2 + $0x208] sm:$0xf]
        %v3333 = vld [vmem:[#allocation2 + $0x20c] sm:$0x1]
        %v3334 = vld [vmem:[#allocation2 + $0x218] sm:$0xf]
        %v3335 = vld [vmem:[#allocation2 + $0x21c] sm:$0x1]
        %v3336 = vld [vmem:[#allocation2 + $0x228] sm:$0xf]
        %v3337 = vld [vmem:[#allocation2 + $0x22c] sm:$0x1]
        %v3338 = vld [vmem:[#allocation2 + $0x238] sm:$0xf]
        %v3339 = vld [vmem:[#allocation2 + $0x23c] sm:$0x1]
        %v3340 = vld [vmem:[#allocation2 + $0x248] sm:$0xf]
        %v3341 = vld [vmem:[#allocation2 + $0x24c] sm:$0x1]
        %v3342 = vld [vmem:[#allocation2 + $0x258] sm:$0xf]
        %v3343 = vld [vmem:[#allocation2 + $0x25c] sm:$0x1]
        %v3344 = vld [vmem:[#allocation2 + $0x268] sm:$0xf]
        %v3345 = vld [vmem:[#allocation2 + $0x26c] sm:$0x1]
        %v3346 = vld [vmem:[#allocation2 + $0x278] sm:$0xf]
        %v3347 = vld [vmem:[#allocation2 + $0x27c] sm:$0x1]
        %vm3348 = vsmask.f32 3328
        %vm3349 = vsmask.f32 7440
        %vm3350 = vmor %vm3348, %vm3349
        %v3352 = vshrl.u32 %v3268, 16
        %v3354 = vrot.slane %v3352, 4
        %v3355 = vshll.u32 %v3268, 16
        %v3357 = vrot.slane %v3355, 5
        %v3358 = vor.u32 %v3354, %v3357
        %v3359 = vrot.slane %v3358, 4
        %v3361 = vshll.u32 %v3269, 16
        %v3363 = vrot.slane %v3361, 5
        %v3364 = vsel %vm3350, %v3359, %v3363
        %v3366 = vshrl.u32 %v3270, 16
        %v3368 = vrot.slane %v3366, 4
        %v3369 = vshll.u32 %v3270, 16
        %v3371 = vrot.slane %v3369, 5
        %v3372 = vor.u32 %v3368, %v3371
        %v3373 = vrot.slane %v3372, 4
        %v3375 = vshll.u32 %v3271, 16
        %v3377 = vrot.slane %v3375, 5
        %v3378 = vsel %vm3350, %v3373, %v3377
        %v3380 = vshrl.u32 %v3272, 16
        %v3382 = vrot.slane %v3380, 4
        %v3383 = vshll.u32 %v3272, 16
        %v3385 = vrot.slane %v3383, 5
        %v3386 = vor.u32 %v3382, %v3385
        %v3387 = vrot.slane %v3386, 4
        %v3389 = vshll.u32 %v3273, 16
        %v3391 = vrot.slane %v3389, 5
        %v3392 = vsel %vm3350, %v3387, %v3391
        %v3394 = vshrl.u32 %v3274, 16
        %v3396 = vrot.slane %v3394, 4
        %v3397 = vshll.u32 %v3274, 16
        %v3399 = vrot.slane %v3397, 5
        %v3400 = vor.u32 %v3396, %v3399
        %v3401 = vrot.slane %v3400, 4
        %v3403 = vshll.u32 %v3275, 16
        %v3405 = vrot.slane %v3403, 5
        %v3406 = vsel %vm3350, %v3401, %v3405
        %v3408 = vshrl.u32 %v3276, 16
        %v3410 = vrot.slane %v3408, 4
        %v3411 = vshll.u32 %v3276, 16
        %v3413 = vrot.slane %v3411, 5
        %v3414 = vor.u32 %v3410, %v3413
        %v3415 = vrot.slane %v3414, 4
        %v3417 = vshll.u32 %v3277, 16
        %v3419 = vrot.slane %v3417, 5
        %v3420 = vsel %vm3350, %v3415, %v3419
        %v3422 = vshrl.u32 %v3278, 16
        %v3424 = vrot.slane %v3422, 4
        %v3425 = vshll.u32 %v3278, 16
        %v3427 = vrot.slane %v3425, 5
        %v3428 = vor.u32 %v3424, %v3427
        %v3429 = vrot.slane %v3428, 4
        %v3431 = vshll.u32 %v3279, 16
        %v3433 = vrot.slane %v3431, 5
        %v3434 = vsel %vm3350, %v3429, %v3433
        %v3436 = vshrl.u32 %v3280, 16
        %v3438 = vrot.slane %v3436, 4
        %v3439 = vshll.u32 %v3280, 16
        %v3441 = vrot.slane %v3439, 5
        %v3442 = vor.u32 %v3438, %v3441
        %v3443 = vrot.slane %v3442, 4
        %v3445 = vshll.u32 %v3281, 16
        %v3447 = vrot.slane %v3445, 5
        %v3448 = vsel %vm3350, %v3443, %v3447
        %v3450 = vshrl.u32 %v3282, 16
        %v3452 = vrot.slane %v3450, 4
        %v3453 = vshll.u32 %v3282, 16
        %v3455 = vrot.slane %v3453, 5
        %v3456 = vor.u32 %v3452, %v3455
        %v3457 = vrot.slane %v3456, 4
        %v3459 = vshll.u32 %v3283, 16
        %v3461 = vrot.slane %v3459, 5
        %v3462 = vsel %vm3350, %v3457, %v3461
        %v3464 = vshrl.u32 %v3288, 16
        %v3466 = vrot.slane %v3464, 4
        %v3467 = vshll.u32 %v3288, 16
        %v3469 = vrot.slane %v3467, 5
        %v3470 = vor.u32 %v3466, %v3469
        %v3471 = vrot.slane %v3470, 4
        %v3473 = vshll.u32 %v3289, 16
        %v3475 = vrot.slane %v3473, 5
        %v3476 = vsel %vm3350, %v3471, %v3475
        %v3478 = vshrl.u32 %v3290, 16
        %v3480 = vrot.slane %v3478, 4
        %v3481 = vshll.u32 %v3290, 16
        %v3483 = vrot.slane %v3481, 5
        %v3484 = vor.u32 %v3480, %v3483
        %v3485 = vrot.slane %v3484, 4
        %v3487 = vshll.u32 %v3291, 16
        %v3489 = vrot.slane %v3487, 5
        %v3490 = vsel %vm3350, %v3485, %v3489
        %v3492 = vshrl.u32 %v3292, 16
        %v3494 = vrot.slane %v3492, 4
        %v3495 = vshll.u32 %v3292, 16
        %v3497 = vrot.slane %v3495, 5
        %v3498 = vor.u32 %v3494, %v3497
        %v3499 = vrot.slane %v3498, 4
        %v3501 = vshll.u32 %v3293, 16
        %v3503 = vrot.slane %v3501, 5
        %v3504 = vsel %vm3350, %v3499, %v3503
        %v3506 = vshrl.u32 %v3294, 16
        %v3508 = vrot.slane %v3506, 4
        %v3509 = vshll.u32 %v3294, 16
        %v3511 = vrot.slane %v3509, 5
        %v3512 = vor.u32 %v3508, %v3511
        %v3513 = vrot.slane %v3512, 4
        %v3515 = vshll.u32 %v3295, 16
        %v3517 = vrot.slane %v3515, 5
        %v3518 = vsel %vm3350, %v3513, %v3517
        %v3520 = vshrl.u32 %v3296, 16
        %v3522 = vrot.slane %v3520, 4
        %v3523 = vshll.u32 %v3296, 16
        %v3525 = vrot.slane %v3523, 5
        %v3526 = vor.u32 %v3522, %v3525
        %v3527 = vrot.slane %v3526, 4
        %v3529 = vshll.u32 %v3297, 16
        %v3531 = vrot.slane %v3529, 5
        %v3532 = vsel %vm3350, %v3527, %v3531
        %v3534 = vshrl.u32 %v3298, 16
        %v3536 = vrot.slane %v3534, 4
        %v3537 = vshll.u32 %v3298, 16
        %v3539 = vrot.slane %v3537, 5
        %v3540 = vor.u32 %v3536, %v3539
        %v3541 = vrot.slane %v3540, 4
        %v3543 = vshll.u32 %v3299, 16
        %v3545 = vrot.slane %v3543, 5
        %v3546 = vsel %vm3350, %v3541, %v3545
        %v3548 = vshrl.u32 %v3300, 16
        %v3550 = vrot.slane %v3548, 4
        %v3551 = vshll.u32 %v3300, 16
        %v3553 = vrot.slane %v3551, 5
        %v3554 = vor.u32 %v3550, %v3553
        %v3555 = vrot.slane %v3554, 4
        %v3557 = vshll.u32 %v3301, 16
        %v3559 = vrot.slane %v3557, 5
        %v3560 = vsel %vm3350, %v3555, %v3559
        %v3562 = vshrl.u32 %v3302, 16
        %v3564 = vrot.slane %v3562, 4
        %v3565 = vshll.u32 %v3302, 16
        %v3567 = vrot.slane %v3565, 5
        %v3568 = vor.u32 %v3564, %v3567
        %v3569 = vrot.slane %v3568, 4
        %v3571 = vshll.u32 %v3303, 16
        %v3573 = vrot.slane %v3571, 5
        %v3574 = vsel %vm3350, %v3569, %v3573
        %v3576 = vshrl.u32 %v3308, 16
        %v3578 = vrot.slane %v3576, 4
        %v3579 = vshll.u32 %v3308, 16
        %v3581 = vrot.slane %v3579, 5
        %v3582 = vor.u32 %v3578, %v3581
        %v3583 = vrot.slane %v3582, 4
        %v3585 = vshll.u32 %v3309, 16
        %v3587 = vrot.slane %v3585, 5
        %v3588 = vsel %vm3350, %v3583, %v3587
        %v3590 = vshrl.u32 %v3310, 16
        %v3592 = vrot.slane %v3590, 4
        %v3593 = vshll.u32 %v3310, 16
        %v3595 = vrot.slane %v3593, 5
        %v3596 = vor.u32 %v3592, %v3595
        %v3597 = vrot.slane %v3596, 4
        %v3599 = vshll.u32 %v3311, 16
        %v3601 = vrot.slane %v3599, 5
        %v3602 = vsel %vm3350, %v3597, %v3601
        %v3604 = vshrl.u32 %v3312, 16
        %v3606 = vrot.slane %v3604, 4
        %v3607 = vshll.u32 %v3312, 16
        %v3609 = vrot.slane %v3607, 5
        %v3610 = vor.u32 %v3606, %v3609
        %v3611 = vrot.slane %v3610, 4
        %v3613 = vshll.u32 %v3313, 16
        %v3615 = vrot.slane %v3613, 5
        %v3616 = vsel %vm3350, %v3611, %v3615
        %v3618 = vshrl.u32 %v3314, 16
        %v3620 = vrot.slane %v3618, 4
        %v3621 = vshll.u32 %v3314, 16
        %v3623 = vrot.slane %v3621, 5
        %v3624 = vor.u32 %v3620, %v3623
        %v3625 = vrot.slane %v3624, 4
        %v3627 = vshll.u32 %v3315, 16
        %v3629 = vrot.slane %v3627, 5
        %v3630 = vsel %vm3350, %v3625, %v3629
        %v3632 = vshrl.u32 %v3316, 16
        %v3634 = vrot.slane %v3632, 4
        %v3635 = vshll.u32 %v3316, 16
        %v3637 = vrot.slane %v3635, 5
        %v3638 = vor.u32 %v3634, %v3637
        %v3639 = vrot.slane %v3638, 4
        %v3641 = vshll.u32 %v3317, 16
        %v3643 = vrot.slane %v3641, 5
        %v3644 = vsel %vm3350, %v3639, %v3643
        %v3646 = vshrl.u32 %v3318, 16
        %v3648 = vrot.slane %v3646, 4
        %v3649 = vshll.u32 %v3318, 16
        %v3651 = vrot.slane %v3649, 5
        %v3652 = vor.u32 %v3648, %v3651
        %v3653 = vrot.slane %v3652, 4
        %v3655 = vshll.u32 %v3319, 16
        %v3657 = vrot.slane %v3655, 5
        %v3658 = vsel %vm3350, %v3653, %v3657
        %v3660 = vshrl.u32 %v3320, 16
        %v3662 = vrot.slane %v3660, 4
        %v3663 = vshll.u32 %v3320, 16
        %v3665 = vrot.slane %v3663, 5
        %v3666 = vor.u32 %v3662, %v3665
        %v3667 = vrot.slane %v3666, 4
        %v3669 = vshll.u32 %v3321, 16
        %v3671 = vrot.slane %v3669, 5
        %v3672 = vsel %vm3350, %v3667, %v3671
        %v3674 = vshrl.u32 %v3322, 16
        %v3676 = vrot.slane %v3674, 4
        %v3677 = vshll.u32 %v3322, 16
        %v3679 = vrot.slane %v3677, 5
        %v3680 = vor.u32 %v3676, %v3679
        %v3681 = vrot.slane %v3680, 4
        %v3683 = vshll.u32 %v3323, 16
        %v3685 = vrot.slane %v3683, 5
        %v3686 = vsel %vm3350, %v3681, %v3685
        %v3688 = vshrl.u32 %v3328, 16
        %v3690 = vrot.slane %v3688, 4
        %v3691 = vshll.u32 %v3328, 16
        %v3693 = vrot.slane %v3691, 5
        %v3694 = vor.u32 %v3690, %v3693
        %v3695 = vrot.slane %v3694, 4
        %v3697 = vshll.u32 %v3329, 16
        %v3699 = vrot.slane %v3697, 5
        %v3700 = vsel %vm3350, %v3695, %v3699
        %v3702 = vshrl.u32 %v3330, 16
        %v3704 = vrot.slane %v3702, 4
        %v3705 = vshll.u32 %v3330, 16
        %v3707 = vrot.slane %v3705, 5
        %v3708 = vor.u32 %v3704, %v3707
        %v3709 = vrot.slane %v3708, 4
        %v3711 = vshll.u32 %v3331, 16
        %v3713 = vrot.slane %v3711, 5
        %v3714 = vsel %vm3350, %v3709, %v3713
        %v3716 = vshrl.u32 %v3332, 16
        %v3718 = vrot.slane %v3716, 4
        %v3719 = vshll.u32 %v3332, 16
        %v3721 = vrot.slane %v3719, 5
        %v3722 = vor.u32 %v3718, %v3721
        %v3723 = vrot.slane %v3722, 4
        %v3725 = vshll.u32 %v3333, 16
        %v3727 = vrot.slane %v3725, 5
        %v3728 = vsel %vm3350, %v3723, %v3727
        %v3730 = vshrl.u32 %v3334, 16
        %v3732 = vrot.slane %v3730, 4
        %v3733 = vshll.u32 %v3334, 16
        %v3735 = vrot.slane %v3733, 5
        %v3736 = vor.u32 %v3732, %v3735
        %v3737 = vrot.slane %v3736, 4
        %v3739 = vshll.u32 %v3335, 16
        %v3741 = vrot.slane %v3739, 5
        %v3742 = vsel %vm3350, %v3737, %v3741
        %v3744 = vshrl.u32 %v3336, 16
        %v3746 = vrot.slane %v3744, 4
        %v3747 = vshll.u32 %v3336, 16
        %v3749 = vrot.slane %v3747, 5
        %v3750 = vor.u32 %v3746, %v3749
        %v3751 = vrot.slane %v3750, 4
        %v3753 = vshll.u32 %v3337, 16
        %v3755 = vrot.slane %v3753, 5
        %v3756 = vsel %vm3350, %v3751, %v3755
        %v3758 = vshrl.u32 %v3338, 16
        %v3760 = vrot.slane %v3758, 4
        %v3761 = vshll.u32 %v3338, 16
        %v3763 = vrot.slane %v3761, 5
        %v3764 = vor.u32 %v3760, %v3763
        %v3765 = vrot.slane %v3764, 4
        %v3767 = vshll.u32 %v3339, 16
        %v3769 = vrot.slane %v3767, 5
        %v3770 = vsel %vm3350, %v3765, %v3769
        %v3772 = vshrl.u32 %v3340, 16
        %v3774 = vrot.slane %v3772, 4
        %v3775 = vshll.u32 %v3340, 16
        %v3777 = vrot.slane %v3775, 5
        %v3778 = vor.u32 %v3774, %v3777
        %v3779 = vrot.slane %v3778, 4
        %v3781 = vshll.u32 %v3341, 16
        %v3783 = vrot.slane %v3781, 5
        %v3784 = vsel %vm3350, %v3779, %v3783
        %v3786 = vshrl.u32 %v3342, 16
        %v3788 = vrot.slane %v3786, 4
        %v3789 = vshll.u32 %v3342, 16
        %v3791 = vrot.slane %v3789, 5
        %v3792 = vor.u32 %v3788, %v3791
        %v3793 = vrot.slane %v3792, 4
        %v3795 = vshll.u32 %v3343, 16
        %v3797 = vrot.slane %v3795, 5
        %v3798 = vsel %vm3350, %v3793, %v3797
        %s3799 = scalar_lea.vmem [#allocation6], 16
        %v3800 = vld [vmem:[%s3799] sm:$0xf]
        %v3801 = vld [vmem:[%s3799 + $0x4] sm:$0xf]
        %v3802 = vunpack.c.l.b16 %v3364
        %v3803 = vunpack.c.l.b16 %v3378
        %v3804 = vunpack.c.l.b16 %v3392
        %v3805 = vunpack.c.l.b16 %v3406
        %v3806 = vunpack.c.l.b16 %v3420
        %v3807 = vunpack.c.l.b16 %v3434
        %v3808 = vunpack.c.l.b16 %v3448
        %v3809 = vunpack.c.l.b16 %v3462
        %v3810 = vunpack.c.l.b16 %v3476
        %v3811 = vunpack.c.l.b16 %v3490
        %v3812 = vunpack.c.l.b16 %v3504
        %v3813 = vunpack.c.l.b16 %v3518
        %v3814 = vunpack.c.l.b16 %v3532
        %v3815 = vunpack.c.l.b16 %v3546
        %v3816 = vunpack.c.l.b16 %v3560
        %v3817 = vunpack.c.l.b16 %v3574
        %v3818 = vunpack.c.l.b16 %v3588
        %v3819 = vunpack.c.l.b16 %v3602
        %v3820 = vunpack.c.l.b16 %v3616
        %v3821 = vunpack.c.l.b16 %v3630
        %v3822 = vunpack.c.l.b16 %v3644
        %v3823 = vunpack.c.l.b16 %v3658
        %v3824 = vunpack.c.l.b16 %v3672
        %v3825 = vunpack.c.l.b16 %v3686
        %v3826 = vunpack.c.l.b16 %v3700
        %v3827 = vunpack.c.l.b16 %v3714
        %v3828 = vunpack.c.l.b16 %v3728
        %v3829 = vunpack.c.l.b16 %v3742
        %v3830 = vunpack.c.l.b16 %v3756
        %v3831 = vunpack.c.l.b16 %v3770
        %v3832 = vunpack.c.l.b16 %v3784
        %v3833 = vunpack.c.l.b16 %v3798
        %v3834 = vpack.c.b16 %v3803, %v3802
        %v3835 = vpack.c.b16 %v3805, %v3804
        %v3836 = vpack.c.b16 %v3807, %v3806
        %v3837 = vpack.c.b16 %v3809, %v3808
        %v3838 = vpack.c.b16 %v3811, %v3810
        %v3839 = vpack.c.b16 %v3813, %v3812
        %v3840 = vpack.c.b16 %v3815, %v3814
        %v3841 = vpack.c.b16 %v3817, %v3816
        %v3842 = vpack.c.b16 %v3819, %v3818
        %v3843 = vpack.c.b16 %v3821, %v3820
        %v3844 = vpack.c.b16 %v3823, %v3822
        %v3845 = vpack.c.b16 %v3825, %v3824
        %v3846 = vpack.c.b16 %v3827, %v3826
        %v3847 = vpack.c.b16 %v3829, %v3828
        %v3848 = vpack.c.b16 %v3831, %v3830
        %v3849 = vpack.c.b16 %v3833, %v3832
        %v3852 = vunpack.c.l.b16 %v3800
        %v3853 = vunpack.c.l.b16 %v3801
        %v3854 = vpack.c.b16 %v3853, %v3852
        %v3857 = vsel %vm2151, %v3834, 0
        %v3860 = vsel %vm2151, %v3835, 0
        %v3863 = vsel %vm2151, %v3836, 0
        %v3866 = vsel %vm2151, %v3837, 0
        %v3869 = vsel %vm2151, %v3838, 0
        %v3872 = vsel %vm2151, %v3839, 0
        %v3875 = vsel %vm2151, %v3840, 0
        %v3878 = vsel %vm2151, %v3841, 0
        %v3881 = vsel %vm2151, %v3842, 0
        %v3884 = vsel %vm2151, %v3843, 0
        %v3887 = vsel %vm2151, %v3844, 0
        %v3890 = vsel %vm2151, %v3845, 0
        %v3893 = vsel %vm2151, %v3846, 0
        %v3896 = vsel %vm2151, %v3847, 0
        %v3899 = vsel %vm2151, %v3848, 0
        %v3902 = vsel %vm2151, %v3849, 0
        %3904 = vmatpush.bf16.msra.mxu0 0
        %3905 = vmatpush.bf16.msra.mxu0 0
        %3906 = vmatpush.bf16.msra.mxu0 0
        %3907 = vmatpush.bf16.msra.mxu0 0
        %3908 = vmatpush.bf16.msra.mxu0 0
        %3909 = vmatpush.bf16.msra.mxu0 0
        %3910 = vmatpush.bf16.msra.mxu0 0
        %3911 = vmatpush.bf16.msra.mxu0 %v3854
        %3912 = vmatmul.bf16.gmra.mxu0 %v3857
        %v3913 = vpop.f32.mrf.mxu0
        %v3914 = vadd.f32 0.0, %v3913
        %v3915 = vpop.f32.mrf.mxu0
        %v3916 = vadd.f32 0.0, %v3915
        %3917 = vmatmul.bf16.gmra.mxu0 %v3860
        %v3918 = vpop.f32.mrf.mxu0
        %v3919 = vadd.f32 0.0, %v3918
        %v3920 = vpop.f32.mrf.mxu0
        %v3921 = vadd.f32 0.0, %v3920
        %3922 = vmatmul.bf16.gmra.mxu0 %v3863
        %v3923 = vpop.f32.mrf.mxu0
        %v3924 = vadd.f32 0.0, %v3923
        %v3925 = vpop.f32.mrf.mxu0
        %v3926 = vadd.f32 0.0, %v3925
        %3927 = vmatmul.bf16.gmra.mxu0 %v3866
        %v3928 = vpop.f32.mrf.mxu0
        %v3929 = vadd.f32 0.0, %v3928
        %v3930 = vpop.f32.mrf.mxu0
        %v3931 = vadd.f32 0.0, %v3930
        %3932 = vmatmul.bf16.gmra.mxu0 %v3869
        %v3933 = vpop.f32.mrf.mxu0
        %v3934 = vadd.f32 0.0, %v3933
        %v3935 = vpop.f32.mrf.mxu0
        %v3936 = vadd.f32 0.0, %v3935
        %3937 = vmatmul.bf16.gmra.mxu0 %v3872
        %v3938 = vpop.f32.mrf.mxu0
        %v3939 = vadd.f32 0.0, %v3938
        %v3940 = vpop.f32.mrf.mxu0
        %v3941 = vadd.f32 0.0, %v3940
        %3942 = vmatmul.bf16.gmra.mxu0 %v3875
        %v3943 = vpop.f32.mrf.mxu0
        %v3944 = vadd.f32 0.0, %v3943
        %v3945 = vpop.f32.mrf.mxu0
        %v3946 = vadd.f32 0.0, %v3945
        %3947 = vmatmul.bf16.gmra.mxu0 %v3878
        %v3948 = vpop.f32.mrf.mxu0
        %v3949 = vadd.f32 0.0, %v3948
        %v3950 = vpop.f32.mrf.mxu0
        %v3951 = vadd.f32 0.0, %v3950
        %3952 = vmatmul.bf16.gmra.mxu0 %v3881
        %v3953 = vpop.f32.mrf.mxu0
        %v3954 = vadd.f32 0.0, %v3953
        %v3955 = vpop.f32.mrf.mxu0
        %v3956 = vadd.f32 0.0, %v3955
        %3957 = vmatmul.bf16.gmra.mxu0 %v3884
        %v3958 = vpop.f32.mrf.mxu0
        %v3959 = vadd.f32 0.0, %v3958
        %v3960 = vpop.f32.mrf.mxu0
        %v3961 = vadd.f32 0.0, %v3960
        %3962 = vmatmul.bf16.gmra.mxu0 %v3887
        %v3963 = vpop.f32.mrf.mxu0
        %v3964 = vadd.f32 0.0, %v3963
        %v3965 = vpop.f32.mrf.mxu0
        %v3966 = vadd.f32 0.0, %v3965
        %3967 = vmatmul.bf16.gmra.mxu0 %v3890
        %v3968 = vpop.f32.mrf.mxu0
        %v3969 = vadd.f32 0.0, %v3968
        %v3970 = vpop.f32.mrf.mxu0
        %v3971 = vadd.f32 0.0, %v3970
        %3972 = vmatmul.bf16.gmra.mxu0 %v3893
        %v3973 = vpop.f32.mrf.mxu0
        %v3974 = vadd.f32 0.0, %v3973
        %v3975 = vpop.f32.mrf.mxu0
        %v3976 = vadd.f32 0.0, %v3975
        %3977 = vmatmul.bf16.gmra.mxu0 %v3896
        %v3978 = vpop.f32.mrf.mxu0
        %v3979 = vadd.f32 0.0, %v3978
        %v3980 = vpop.f32.mrf.mxu0
        %v3981 = vadd.f32 0.0, %v3980
        %3982 = vmatmul.bf16.gmra.mxu0 %v3899
        %v3983 = vpop.f32.mrf.mxu0
        %v3984 = vadd.f32 0.0, %v3983
        %v3985 = vpop.f32.mrf.mxu0
        %v3986 = vadd.f32 0.0, %v3985
        %3987 = vmatmul.bf16.gmra.mxu0 %v3902
        %v3988 = vpop.f32.mrf.mxu0
        %v3989 = vadd.f32 0.0, %v3988
        %v3990 = vpop.f32.mrf.mxu0
        %v3991 = vadd.f32 0.0, %v3990
        %3992 = vdwg.mxu0
        %v3993 = vadd.f32 %v3236, %v3914
        %v3994 = vadd.f32 %v3237, %v3916
        %v3995 = vadd.f32 %v3238, %v3919
        %v3996 = vadd.f32 %v3239, %v3921
        %v3997 = vadd.f32 %v3240, %v3924
        %v3998 = vadd.f32 %v3241, %v3926
        %v3999 = vadd.f32 %v3242, %v3929
        %v4000 = vadd.f32 %v3243, %v3931
        %v4001 = vadd.f32 %v3244, %v3934
        %v4002 = vadd.f32 %v3245, %v3936
        %v4003 = vadd.f32 %v3246, %v3939
        %v4004 = vadd.f32 %v3247, %v3941
        %v4005 = vadd.f32 %v3248, %v3944
        %v4006 = vadd.f32 %v3249, %v3946
        %v4007 = vadd.f32 %v3250, %v3949
        %v4008 = vadd.f32 %v3251, %v3951
        %v4009 = vadd.f32 %v3252, %v3954
        %v4010 = vadd.f32 %v3253, %v3956
        %v4011 = vadd.f32 %v3254, %v3959
        %v4012 = vadd.f32 %v3255, %v3961
        %v4013 = vadd.f32 %v3256, %v3964
        %v4014 = vadd.f32 %v3257, %v3966
        %v4015 = vadd.f32 %v3258, %v3969
        %v4016 = vadd.f32 %v3259, %v3971
        %v4017 = vadd.f32 %v3260, %v3974
        %v4018 = vadd.f32 %v3261, %v3976
        %v4019 = vadd.f32 %v3262, %v3979
        %v4020 = vadd.f32 %v3263, %v3981
        %v4021 = vadd.f32 %v3264, %v3984
        %v4022 = vadd.f32 %v3265, %v3986
        %v4023 = vadd.f32 %v3266, %v3989
        %v4024 = vadd.f32 %v3267, %v3991
        %v4026 = vshrl.u32 %v3284, 16
        %v4028 = vrot.slane %v4026, 4
        %v4029 = vshll.u32 %v3284, 16
        %v4031 = vrot.slane %v4029, 5
        %v4032 = vor.u32 %v4028, %v4031
        %v4033 = vrot.slane %v4032, 4
        %v4035 = vshll.u32 %v3285, 16
        %v4037 = vrot.slane %v4035, 5
        %v4038 = vsel %vm3350, %v4033, %v4037
        %v4040 = vshrl.u32 %v3304, 16
        %v4042 = vrot.slane %v4040, 4
        %v4043 = vshll.u32 %v3304, 16
        %v4045 = vrot.slane %v4043, 5
        %v4046 = vor.u32 %v4042, %v4045
        %v4047 = vrot.slane %v4046, 4
        %v4049 = vshll.u32 %v3305, 16
        %v4051 = vrot.slane %v4049, 5
        %v4052 = vsel %vm3350, %v4047, %v4051
        %v4054 = vshrl.u32 %v3324, 16
        %v4056 = vrot.slane %v4054, 4
        %v4057 = vshll.u32 %v3324, 16
        %v4059 = vrot.slane %v4057, 5
        %v4060 = vor.u32 %v4056, %v4059
        %v4061 = vrot.slane %v4060, 4
        %v4063 = vshll.u32 %v3325, 16
        %v4065 = vrot.slane %v4063, 5
        %v4066 = vsel %vm3350, %v4061, %v4065
        %v4068 = vshrl.u32 %v3344, 16
        %v4070 = vrot.slane %v4068, 4
        %v4071 = vshll.u32 %v3344, 16
        %v4073 = vrot.slane %v4071, 5
        %v4074 = vor.u32 %v4070, %v4073
        %v4075 = vrot.slane %v4074, 4
        %v4077 = vshll.u32 %v3345, 16
        %v4079 = vrot.slane %v4077, 5
        %v4080 = vsel %vm3350, %v4075, %v4079
        %s4081 = scalar_lea.vmem [#allocation6], 40
        %v4082 = vld [vmem:[%s4081] sm:$0xf]
        %v4083 = vld [vmem:[%s4081 + $0x4] sm:$0xf]
        %v4084 = vunpack.c.l.b16 %v4038
        %v4085 = vunpack.c.l.b16 %v4052
        %v4086 = vunpack.c.l.b16 %v4066
        %v4087 = vunpack.c.l.b16 %v4080
        %v4088 = vpack.c.b16 %v3804, %v3803
        %v4089 = vpack.c.b16 %v3806, %v3805
        %v4090 = vpack.c.b16 %v3808, %v3807
        %v4091 = vpack.c.b16 %v4084, %v3809
        %v4092 = vpack.c.b16 %v3812, %v3811
        %v4093 = vpack.c.b16 %v3814, %v3813
        %v4094 = vpack.c.b16 %v3816, %v3815
        %v4095 = vpack.c.b16 %v4085, %v3817
        %v4096 = vpack.c.b16 %v3820, %v3819
        %v4097 = vpack.c.b16 %v3822, %v3821
        %v4098 = vpack.c.b16 %v3824, %v3823
        %v4099 = vpack.c.b16 %v4086, %v3825
        %v4100 = vpack.c.b16 %v3828, %v3827
        %v4101 = vpack.c.b16 %v3830, %v3829
        %v4102 = vpack.c.b16 %v3832, %v3831
        %v4103 = vpack.c.b16 %v4087, %v3833
        %v4106 = vunpack.c.l.b16 %v4082
        %v4107 = vunpack.c.l.b16 %v4083
        %v4108 = vpack.c.b16 %v4107, %v4106
        %v4111 = vsel %vm2151, %v4088, 0
        %v4114 = vsel %vm2151, %v4089, 0
        %v4117 = vsel %vm2151, %v4090, 0
        %v4120 = vsel %vm2151, %v4091, 0
        %v4123 = vsel %vm2151, %v4092, 0
        %v4126 = vsel %vm2151, %v4093, 0
        %v4129 = vsel %vm2151, %v4094, 0
        %v4132 = vsel %vm2151, %v4095, 0
        %v4135 = vsel %vm2151, %v4096, 0
        %v4138 = vsel %vm2151, %v4097, 0
        %v4141 = vsel %vm2151, %v4098, 0
        %v4144 = vsel %vm2151, %v4099, 0
        %v4147 = vsel %vm2151, %v4100, 0
        %v4150 = vsel %vm2151, %v4101, 0
        %v4153 = vsel %vm2151, %v4102, 0
        %v4156 = vsel %vm2151, %v4103, 0
        %4158 = vmatpush.bf16.msra.mxu0 0
        %4159 = vmatpush.bf16.msra.mxu0 0
        %4160 = vmatpush.bf16.msra.mxu0 0
        %4161 = vmatpush.bf16.msra.mxu0 0
        %4162 = vmatpush.bf16.msra.mxu0 0
        %4163 = vmatpush.bf16.msra.mxu0 0
        %4164 = vmatpush.bf16.msra.mxu0 0
        %4165 = vmatpush.bf16.msra.mxu0 %v4108
        %4166 = vmatmul.bf16.gmra.mxu0 %v4111
        %v4167 = vpop.f32.mrf.mxu0
        %v4168 = vadd.f32 0.0, %v4167
        %v4169 = vpop.f32.mrf.mxu0
        %v4170 = vadd.f32 0.0, %v4169
        %4171 = vmatmul.bf16.gmra.mxu0 %v4114
        %v4172 = vpop.f32.mrf.mxu0
        %v4173 = vadd.f32 0.0, %v4172
        %v4174 = vpop.f32.mrf.mxu0
        %v4175 = vadd.f32 0.0, %v4174
        %4176 = vmatmul.bf16.gmra.mxu0 %v4117
        %v4177 = vpop.f32.mrf.mxu0
        %v4178 = vadd.f32 0.0, %v4177
        %v4179 = vpop.f32.mrf.mxu0
        %v4180 = vadd.f32 0.0, %v4179
        %4181 = vmatmul.bf16.gmra.mxu0 %v4120
        %v4182 = vpop.f32.mrf.mxu0
        %v4183 = vadd.f32 0.0, %v4182
        %v4184 = vpop.f32.mrf.mxu0
        %v4185 = vadd.f32 0.0, %v4184
        %4186 = vmatmul.bf16.gmra.mxu0 %v4123
        %v4187 = vpop.f32.mrf.mxu0
        %v4188 = vadd.f32 0.0, %v4187
        %v4189 = vpop.f32.mrf.mxu0
        %v4190 = vadd.f32 0.0, %v4189
        %4191 = vmatmul.bf16.gmra.mxu0 %v4126
        %v4192 = vpop.f32.mrf.mxu0
        %v4193 = vadd.f32 0.0, %v4192
        %v4194 = vpop.f32.mrf.mxu0
        %v4195 = vadd.f32 0.0, %v4194
        %4196 = vmatmul.bf16.gmra.mxu0 %v4129
        %v4197 = vpop.f32.mrf.mxu0
        %v4198 = vadd.f32 0.0, %v4197
        %v4199 = vpop.f32.mrf.mxu0
        %v4200 = vadd.f32 0.0, %v4199
        %4201 = vmatmul.bf16.gmra.mxu0 %v4132
        %v4202 = vpop.f32.mrf.mxu0
        %v4203 = vadd.f32 0.0, %v4202
        %v4204 = vpop.f32.mrf.mxu0
        %v4205 = vadd.f32 0.0, %v4204
        %4206 = vmatmul.bf16.gmra.mxu0 %v4135
        %v4207 = vpop.f32.mrf.mxu0
        %v4208 = vadd.f32 0.0, %v4207
        %v4209 = vpop.f32.mrf.mxu0
        %v4210 = vadd.f32 0.0, %v4209
        %4211 = vmatmul.bf16.gmra.mxu0 %v4138
        %v4212 = vpop.f32.mrf.mxu0
        %v4213 = vadd.f32 0.0, %v4212
        %v4214 = vpop.f32.mrf.mxu0
        %v4215 = vadd.f32 0.0, %v4214
        %4216 = vmatmul.bf16.gmra.mxu0 %v4141
        %v4217 = vpop.f32.mrf.mxu0
        %v4218 = vadd.f32 0.0, %v4217
        %v4219 = vpop.f32.mrf.mxu0
        %v4220 = vadd.f32 0.0, %v4219
        %4221 = vmatmul.bf16.gmra.mxu0 %v4144
        %v4222 = vpop.f32.mrf.mxu0
        %v4223 = vadd.f32 0.0, %v4222
        %v4224 = vpop.f32.mrf.mxu0
        %v4225 = vadd.f32 0.0, %v4224
        %4226 = vmatmul.bf16.gmra.mxu0 %v4147
        %v4227 = vpop.f32.mrf.mxu0
        %v4228 = vadd.f32 0.0, %v4227
        %v4229 = vpop.f32.mrf.mxu0
        %v4230 = vadd.f32 0.0, %v4229
        %4231 = vmatmul.bf16.gmra.mxu0 %v4150
        %v4232 = vpop.f32.mrf.mxu0
        %v4233 = vadd.f32 0.0, %v4232
        %v4234 = vpop.f32.mrf.mxu0
        %v4235 = vadd.f32 0.0, %v4234
        %4236 = vmatmul.bf16.gmra.mxu0 %v4153
        %v4237 = vpop.f32.mrf.mxu0
        %v4238 = vadd.f32 0.0, %v4237
        %v4239 = vpop.f32.mrf.mxu0
        %v4240 = vadd.f32 0.0, %v4239
        %4241 = vmatmul.bf16.gmra.mxu0 %v4156
        %v4242 = vpop.f32.mrf.mxu0
        %v4243 = vadd.f32 0.0, %v4242
        %v4244 = vpop.f32.mrf.mxu0
        %v4245 = vadd.f32 0.0, %v4244
        %4246 = vdwg.mxu0
        %v4247 = vadd.f32 %v3993, %v4168
        %v4248 = vadd.f32 %v3994, %v4170
        %v4249 = vadd.f32 %v3995, %v4173
        %v4250 = vadd.f32 %v3996, %v4175
        %v4251 = vadd.f32 %v3997, %v4178
        %v4252 = vadd.f32 %v3998, %v4180
        %v4253 = vadd.f32 %v3999, %v4183
        %v4254 = vadd.f32 %v4000, %v4185
        %v4255 = vadd.f32 %v4001, %v4188
        %v4256 = vadd.f32 %v4002, %v4190
        %v4257 = vadd.f32 %v4003, %v4193
        %v4258 = vadd.f32 %v4004, %v4195
        %v4259 = vadd.f32 %v4005, %v4198
        %v4260 = vadd.f32 %v4006, %v4200
        %v4261 = vadd.f32 %v4007, %v4203
        %v4262 = vadd.f32 %v4008, %v4205
        %v4263 = vadd.f32 %v4009, %v4208
        %v4264 = vadd.f32 %v4010, %v4210
        %v4265 = vadd.f32 %v4011, %v4213
        %v4266 = vadd.f32 %v4012, %v4215
        %v4267 = vadd.f32 %v4013, %v4218
        %v4268 = vadd.f32 %v4014, %v4220
        %v4269 = vadd.f32 %v4015, %v4223
        %v4270 = vadd.f32 %v4016, %v4225
        %v4271 = vadd.f32 %v4017, %v4228
        %v4272 = vadd.f32 %v4018, %v4230
        %v4273 = vadd.f32 %v4019, %v4233
        %v4274 = vadd.f32 %v4020, %v4235
        %v4275 = vadd.f32 %v4021, %v4238
        %v4276 = vadd.f32 %v4022, %v4240
        %v4277 = vadd.f32 %v4023, %v4243
        %v4278 = vadd.f32 %v4024, %v4245
        %v4280 = vshrl.u32 %v3286, 16
        %v4282 = vrot.slane %v4280, 4
        %v4283 = vshll.u32 %v3286, 16
        %v4285 = vrot.slane %v4283, 5
        %v4286 = vor.u32 %v4282, %v4285
        %v4287 = vrot.slane %v4286, 4
        %v4289 = vshll.u32 %v3287, 16
        %v4291 = vrot.slane %v4289, 5
        %v4292 = vsel %vm3350, %v4287, %v4291
        %v4294 = vshrl.u32 %v3306, 16
        %v4296 = vrot.slane %v4294, 4
        %v4297 = vshll.u32 %v3306, 16
        %v4299 = vrot.slane %v4297, 5
        %v4300 = vor.u32 %v4296, %v4299
        %v4301 = vrot.slane %v4300, 4
        %v4303 = vshll.u32 %v3307, 16
        %v4305 = vrot.slane %v4303, 5
        %v4306 = vsel %vm3350, %v4301, %v4305
        %v4308 = vshrl.u32 %v3326, 16
        %v4310 = vrot.slane %v4308, 4
        %v4311 = vshll.u32 %v3326, 16
        %v4313 = vrot.slane %v4311, 5
        %v4314 = vor.u32 %v4310, %v4313
        %v4315 = vrot.slane %v4314, 4
        %v4317 = vshll.u32 %v3327, 16
        %v4319 = vrot.slane %v4317, 5
        %v4320 = vsel %vm3350, %v4315, %v4319
        %v4322 = vshrl.u32 %v3346, 16
        %v4324 = vrot.slane %v4322, 4
        %v4325 = vshll.u32 %v3346, 16
        %v4327 = vrot.slane %v4325, 5
        %v4328 = vor.u32 %v4324, %v4327
        %v4329 = vrot.slane %v4328, 4
        %v4331 = vshll.u32 %v3347, 16
        %v4333 = vrot.slane %v4331, 5
        %v4334 = vsel %vm3350, %v4329, %v4333
        %s4335 = scalar_lea.vmem [#allocation6], 64
        %v4336 = vld [vmem:[%s4335] sm:$0xf]
        %v4337 = vld [vmem:[%s4335 + $0x4] sm:$0xf]
        %v4338 = vunpack.c.l.b16 %v4292
        %v4339 = vunpack.c.l.b16 %v4306
        %v4340 = vunpack.c.l.b16 %v4320
        %v4341 = vunpack.c.l.b16 %v4334
        %v4342 = vpack.c.b16 %v4338, %v4084
        %v4343 = vpack.c.b16 %v4339, %v4085
        %v4344 = vpack.c.b16 %v4340, %v4086
        %v4345 = vpack.c.b16 %v4341, %v4087
        %v4348 = vunpack.c.l.b16 %v4336
        %v4349 = vunpack.c.l.b16 %v4337
        %v4350 = vpack.c.b16 %v4349, %v4348
        %v4353 = vsel %vm2151, %v4342, 0
        %v4356 = vsel %vm2151, %v4343, 0
        %v4359 = vsel %vm2151, %v4344, 0
        %v4362 = vsel %vm2151, %v4345, 0
        %4364 = vmatpush.bf16.msra.mxu0 0
        %4365 = vmatpush.bf16.msra.mxu0 0
        %4366 = vmatpush.bf16.msra.mxu0 0
        %4367 = vmatpush.bf16.msra.mxu0 0
        %4368 = vmatpush.bf16.msra.mxu0 0
        %4369 = vmatpush.bf16.msra.mxu0 0
        %4370 = vmatpush.bf16.msra.mxu0 0
        %4371 = vmatpush.bf16.msra.mxu0 %v4350
        %4372 = vmatmul.bf16.gmra.mxu0 %v3860
        %v4373 = vpop.f32.mrf.mxu0
        %v4374 = vadd.f32 0.0, %v4373
        %v4375 = vpop.f32.mrf.mxu0
        %v4376 = vadd.f32 0.0, %v4375
        %4377 = vmatmul.bf16.gmra.mxu0 %v3863
        %v4378 = vpop.f32.mrf.mxu0
        %v4379 = vadd.f32 0.0, %v4378
        %v4380 = vpop.f32.mrf.mxu0
        %v4381 = vadd.f32 0.0, %v4380
        %4382 = vmatmul.bf16.gmra.mxu0 %v3866
        %v4383 = vpop.f32.mrf.mxu0
        %v4384 = vadd.f32 0.0, %v4383
        %v4385 = vpop.f32.mrf.mxu0
        %v4386 = vadd.f32 0.0, %v4385
        %4387 = vmatmul.bf16.gmra.mxu0 %v4353
        %v4388 = vpop.f32.mrf.mxu0
        %v4389 = vadd.f32 0.0, %v4388
        %v4390 = vpop.f32.mrf.mxu0
        %v4391 = vadd.f32 0.0, %v4390
        %4392 = vmatmul.bf16.gmra.mxu0 %v3872
        %v4393 = vpop.f32.mrf.mxu0
        %v4394 = vadd.f32 0.0, %v4393
        %v4395 = vpop.f32.mrf.mxu0
        %v4396 = vadd.f32 0.0, %v4395
        %4397 = vmatmul.bf16.gmra.mxu0 %v3875
        %v4398 = vpop.f32.mrf.mxu0
        %v4399 = vadd.f32 0.0, %v4398
        %v4400 = vpop.f32.mrf.mxu0
        %v4401 = vadd.f32 0.0, %v4400
        %4402 = vmatmul.bf16.gmra.mxu0 %v3878
        %v4403 = vpop.f32.mrf.mxu0
        %v4404 = vadd.f32 0.0, %v4403
        %v4405 = vpop.f32.mrf.mxu0
        %v4406 = vadd.f32 0.0, %v4405
        %4407 = vmatmul.bf16.gmra.mxu0 %v4356
        %v4408 = vpop.f32.mrf.mxu0
        %v4409 = vadd.f32 0.0, %v4408
        %v4410 = vpop.f32.mrf.mxu0
        %v4411 = vadd.f32 0.0, %v4410
        %4412 = vmatmul.bf16.gmra.mxu0 %v3884
        %v4413 = vpop.f32.mrf.mxu0
        %v4414 = vadd.f32 0.0, %v4413
        %v4415 = vpop.f32.mrf.mxu0
        %v4416 = vadd.f32 0.0, %v4415
        %4417 = vmatmul.bf16.gmra.mxu0 %v3887
        %v4418 = vpop.f32.mrf.mxu0
        %v4419 = vadd.f32 0.0, %v4418
        %v4420 = vpop.f32.mrf.mxu0
        %v4421 = vadd.f32 0.0, %v4420
        %4422 = vmatmul.bf16.gmra.mxu0 %v3890
        %v4423 = vpop.f32.mrf.mxu0
        %v4424 = vadd.f32 0.0, %v4423
        %v4425 = vpop.f32.mrf.mxu0
        %v4426 = vadd.f32 0.0, %v4425
        %4427 = vmatmul.bf16.gmra.mxu0 %v4359
        %v4428 = vpop.f32.mrf.mxu0
        %v4429 = vadd.f32 0.0, %v4428
        %v4430 = vpop.f32.mrf.mxu0
        %v4431 = vadd.f32 0.0, %v4430
        %4432 = vmatmul.bf16.gmra.mxu0 %v3896
        %v4433 = vpop.f32.mrf.mxu0
        %v4434 = vadd.f32 0.0, %v4433
        %v4435 = vpop.f32.mrf.mxu0
        %v4436 = vadd.f32 0.0, %v4435
        %4437 = vmatmul.bf16.gmra.mxu0 %v3899
        %v4438 = vpop.f32.mrf.mxu0
        %v4439 = vadd.f32 0.0, %v4438
        %v4440 = vpop.f32.mrf.mxu0
        %v4441 = vadd.f32 0.0, %v4440
        %4442 = vmatmul.bf16.gmra.mxu0 %v3902
        %v4443 = vpop.f32.mrf.mxu0
        %v4444 = vadd.f32 0.0, %v4443
        %v4445 = vpop.f32.mrf.mxu0
        %v4446 = vadd.f32 0.0, %v4445
        %4447 = vmatmul.bf16.gmra.mxu0 %v4362
        %v4448 = vpop.f32.mrf.mxu0
        %v4449 = vadd.f32 0.0, %v4448
        %v4450 = vpop.f32.mrf.mxu0
        %v4451 = vadd.f32 0.0, %v4450
        %4452 = vdwg.mxu0
        %v4453 = vadd.f32 %v4247, %v4374
        %v4454 = vadd.f32 %v4248, %v4376
        %v4455 = vadd.f32 %v4249, %v4379
        %v4456 = vadd.f32 %v4250, %v4381
        %v4457 = vadd.f32 %v4251, %v4384
        %v4458 = vadd.f32 %v4252, %v4386
        %v4459 = vadd.f32 %v4253, %v4389
        %v4460 = vadd.f32 %v4254, %v4391
        %v4461 = vadd.f32 %v4255, %v4394
        %v4462 = vadd.f32 %v4256, %v4396
        %v4463 = vadd.f32 %v4257, %v4399
        %v4464 = vadd.f32 %v4258, %v4401
        %v4465 = vadd.f32 %v4259, %v4404
        %v4466 = vadd.f32 %v4260, %v4406
        %v4467 = vadd.f32 %v4261, %v4409
        %v4468 = vadd.f32 %v4262, %v4411
        %v4469 = vadd.f32 %v4263, %v4414
        %v4470 = vadd.f32 %v4264, %v4416
        %v4471 = vadd.f32 %v4265, %v4419
        %v4472 = vadd.f32 %v4266, %v4421
        %v4473 = vadd.f32 %v4267, %v4424
        %v4474 = vadd.f32 %v4268, %v4426
        %v4475 = vadd.f32 %v4269, %v4429
        %v4476 = vadd.f32 %v4270, %v4431
        %v4477 = vadd.f32 %v4271, %v4434
        %v4478 = vadd.f32 %v4272, %v4436
        %v4479 = vadd.f32 %v4273, %v4439
        %v4480 = vadd.f32 %v4274, %v4441
        %v4481 = vadd.f32 %v4275, %v4444
        %v4482 = vadd.f32 %v4276, %v4446
        %v4483 = vadd.f32 %v4277, %v4449
        %v4484 = vadd.f32 %v4278, %v4451
        %v4485 = vld [vmem:[%s7] sm:$0x1]
        %v4487 = vperm.slane %v4485, 0
        %v4489 = vmul.f32 %v4453, %v4487
        %v4490 = vmul.f32 %v4454, %v4487
        %v4491 = vmul.f32 %v4455, %v4487
        %v4492 = vmul.f32 %v4456, %v4487
        %v4493 = vmul.f32 %v4457, %v4487
        %v4494 = vmul.f32 %v4458, %v4487
        %v4495 = vmul.f32 %v4459, %v4487
        %v4496 = vmul.f32 %v4460, %v4487
        %v4497 = vmul.f32 %v4461, %v4487
        %v4498 = vmul.f32 %v4462, %v4487
        %v4499 = vmul.f32 %v4463, %v4487
        %v4500 = vmul.f32 %v4464, %v4487
        %v4501 = vmul.f32 %v4465, %v4487
        %v4502 = vmul.f32 %v4466, %v4487
        %v4503 = vmul.f32 %v4467, %v4487
        %v4504 = vmul.f32 %v4468, %v4487
        %v4505 = vmul.f32 %v4469, %v4487
        %v4506 = vmul.f32 %v4470, %v4487
        %v4507 = vmul.f32 %v4471, %v4487
        %v4508 = vmul.f32 %v4472, %v4487
        %v4509 = vmul.f32 %v4473, %v4487
        %v4510 = vmul.f32 %v4474, %v4487
        %v4511 = vmul.f32 %v4475, %v4487
        %v4512 = vmul.f32 %v4476, %v4487
        %v4513 = vmul.f32 %v4477, %v4487
        %v4514 = vmul.f32 %v4478, %v4487
        %v4515 = vmul.f32 %v4479, %v4487
        %v4516 = vmul.f32 %v4480, %v4487
        %v4517 = vmul.f32 %v4481, %v4487
        %v4518 = vmul.f32 %v4482, %v4487
        %v4519 = vmul.f32 %v4483, %v4487
        %v4520 = vmul.f32 %v4484, %v4487
        %v4521 = vld [vmem:[%s8] sm:$0x1]
        %v4523 = vperm.slane %v4521, 0
        %v4525 = vadd.f32 %v4489, %v4523
        %v4526 = vadd.f32 %v4490, %v4523
        %v4527 = vadd.f32 %v4491, %v4523
        %v4528 = vadd.f32 %v4492, %v4523
        %v4529 = vadd.f32 %v4493, %v4523
        %v4530 = vadd.f32 %v4494, %v4523
        %v4531 = vadd.f32 %v4495, %v4523
        %v4532 = vadd.f32 %v4496, %v4523
        %v4533 = vadd.f32 %v4497, %v4523
        %v4534 = vadd.f32 %v4498, %v4523
        %v4535 = vadd.f32 %v4499, %v4523
        %v4536 = vadd.f32 %v4500, %v4523
        %v4537 = vadd.f32 %v4501, %v4523
        %v4538 = vadd.f32 %v4502, %v4523
        %v4539 = vadd.f32 %v4503, %v4523
        %v4540 = vadd.f32 %v4504, %v4523
        %v4541 = vadd.f32 %v4505, %v4523
        %v4542 = vadd.f32 %v4506, %v4523
        %v4543 = vadd.f32 %v4507, %v4523
        %v4544 = vadd.f32 %v4508, %v4523
        %v4545 = vadd.f32 %v4509, %v4523
        %v4546 = vadd.f32 %v4510, %v4523
        %v4547 = vadd.f32 %v4511, %v4523
        %v4548 = vadd.f32 %v4512, %v4523
        %v4549 = vadd.f32 %v4513, %v4523
        %v4550 = vadd.f32 %v4514, %v4523
        %v4551 = vadd.f32 %v4515, %v4523
        %v4552 = vadd.f32 %v4516, %v4523
        %v4553 = vadd.f32 %v4517, %v4523
        %v4554 = vadd.f32 %v4518, %v4523
        %v4555 = vadd.f32 %v4519, %v4523
        %v4556 = vadd.f32 %v4520, %v4523
        %v4557 = vmax.f32 %v4525, 0.0
        %v4558 = vmax.f32 %v4526, 0.0
        %v4559 = vmax.f32 %v4527, 0.0
        %v4560 = vmax.f32 %v4528, 0.0
        %v4561 = vmax.f32 %v4529, 0.0
        %v4562 = vmax.f32 %v4530, 0.0
        %v4563 = vmax.f32 %v4531, 0.0
        %v4564 = vmax.f32 %v4532, 0.0
        %v4565 = vmax.f32 %v4533, 0.0
        %v4566 = vmax.f32 %v4534, 0.0
        %v4567 = vmax.f32 %v4535, 0.0
        %v4568 = vmax.f32 %v4536, 0.0
        %v4569 = vmax.f32 %v4537, 0.0
        %v4570 = vmax.f32 %v4538, 0.0
        %v4571 = vmax.f32 %v4539, 0.0
        %v4572 = vmax.f32 %v4540, 0.0
        %v4573 = vmax.f32 %v4541, 0.0
        %v4574 = vmax.f32 %v4542, 0.0
        %v4575 = vmax.f32 %v4543, 0.0
        %v4576 = vmax.f32 %v4544, 0.0
        %v4577 = vmax.f32 %v4545, 0.0
        %v4578 = vmax.f32 %v4546, 0.0
        %v4579 = vmax.f32 %v4547, 0.0
        %v4580 = vmax.f32 %v4548, 0.0
        %v4581 = vmax.f32 %v4549, 0.0
        %v4582 = vmax.f32 %v4550, 0.0
        %v4583 = vmax.f32 %v4551, 0.0
        %v4584 = vmax.f32 %v4552, 0.0
        %v4585 = vmax.f32 %v4553, 0.0
        %v4586 = vmax.f32 %v4554, 0.0
        %v4587 = vmax.f32 %v4555, 0.0
        %v4588 = vmax.f32 %v4556, 0.0
        %v4589 = vpack.c.bf16 %v4558, %v4557
        %v4590 = vpack.c.bf16 %v4560, %v4559
        %v4591 = vpack.c.bf16 %v4562, %v4561
        %v4592 = vpack.c.bf16 %v4564, %v4563
        %v4593 = vpack.c.bf16 %v4566, %v4565
        %v4594 = vpack.c.bf16 %v4568, %v4567
        %v4595 = vpack.c.bf16 %v4570, %v4569
        %v4596 = vpack.c.bf16 %v4572, %v4571
        %v4597 = vpack.c.bf16 %v4574, %v4573
        %v4598 = vpack.c.bf16 %v4576, %v4575
        %v4599 = vpack.c.bf16 %v4578, %v4577
        %v4600 = vpack.c.bf16 %v4580, %v4579
        %v4601 = vpack.c.bf16 %v4582, %v4581
        %v4602 = vpack.c.bf16 %v4584, %v4583
        %v4603 = vpack.c.bf16 %v4586, %v4585
        %v4604 = vpack.c.bf16 %v4588, %v4587
        %v4605 = vld [vmem:[%s9] sm:$0xf]
        %v4606 = vld [vmem:[%s9 + $0x4] sm:$0xf]
        %v4609 = vunpack.c.l.b16 %v4605
        %v4610 = vunpack.c.l.b16 %v4606
        %v4611 = vpack.c.b16 %v4610, %v4609
        %v4614 = vsel %vm2151, %v4589, 0
        %v4617 = vsel %vm2151, %v4590, 0
        %v4620 = vsel %vm2151, %v4591, 0
        %v4623 = vsel %vm2151, %v4592, 0
        %v4626 = vsel %vm2151, %v4593, 0
        %v4629 = vsel %vm2151, %v4594, 0
        %v4632 = vsel %vm2151, %v4595, 0
        %v4635 = vsel %vm2151, %v4596, 0
        %v4638 = vsel %vm2151, %v4597, 0
        %v4641 = vsel %vm2151, %v4598, 0
        %v4644 = vsel %vm2151, %v4599, 0
        %v4647 = vsel %vm2151, %v4600, 0
        %v4650 = vsel %vm2151, %v4601, 0
        %v4653 = vsel %vm2151, %v4602, 0
        %v4656 = vsel %vm2151, %v4603, 0
        %v4659 = vsel %vm2151, %v4604, 0
        %4661 = vmatpush.bf16.msra.mxu0 0
        %4662 = vmatpush.bf16.msra.mxu0 0
        %4663 = vmatpush.bf16.msra.mxu0 0
        %4664 = vmatpush.bf16.msra.mxu0 0
        %4665 = vmatpush.bf16.msra.mxu0 0
        %4666 = vmatpush.bf16.msra.mxu0 0
        %4667 = vmatpush.bf16.msra.mxu0 0
        %4668 = vmatpush.bf16.msra.mxu0 %v4611
        %4669 = vmatmul.bf16.gmra.mxu0 %v4614
        %v4670 = vpop.f32.mrf.mxu0
        %v4671 = vadd.f32 0.0, %v4670
        %v4672 = vpop.f32.mrf.mxu0
        %v4673 = vadd.f32 0.0, %v4672
        %4674 = vmatmul.bf16.gmra.mxu0 %v4617
        %v4675 = vpop.f32.mrf.mxu0
        %v4676 = vadd.f32 0.0, %v4675
        %v4677 = vpop.f32.mrf.mxu0
        %v4678 = vadd.f32 0.0, %v4677
        %4679 = vmatmul.bf16.gmra.mxu0 %v4620
        %v4680 = vpop.f32.mrf.mxu0
        %v4681 = vadd.f32 0.0, %v4680
        %v4682 = vpop.f32.mrf.mxu0
        %v4683 = vadd.f32 0.0, %v4682
        %4684 = vmatmul.bf16.gmra.mxu0 %v4623
        %v4685 = vpop.f32.mrf.mxu0
        %v4686 = vadd.f32 0.0, %v4685
        %v4687 = vpop.f32.mrf.mxu0
        %v4688 = vadd.f32 0.0, %v4687
        %4689 = vmatmul.bf16.gmra.mxu0 %v4626
        %v4690 = vpop.f32.mrf.mxu0
        %v4691 = vadd.f32 0.0, %v4690
        %v4692 = vpop.f32.mrf.mxu0
        %v4693 = vadd.f32 0.0, %v4692
        %4694 = vmatmul.bf16.gmra.mxu0 %v4629
        %v4695 = vpop.f32.mrf.mxu0
        %v4696 = vadd.f32 0.0, %v4695
        %v4697 = vpop.f32.mrf.mxu0
        %v4698 = vadd.f32 0.0, %v4697
        %4699 = vmatmul.bf16.gmra.mxu0 %v4632
        %v4700 = vpop.f32.mrf.mxu0
        %v4701 = vadd.f32 0.0, %v4700
        %v4702 = vpop.f32.mrf.mxu0
        %v4703 = vadd.f32 0.0, %v4702
        %4704 = vmatmul.bf16.gmra.mxu0 %v4635
        %v4705 = vpop.f32.mrf.mxu0
        %v4706 = vadd.f32 0.0, %v4705
        %v4707 = vpop.f32.mrf.mxu0
        %v4708 = vadd.f32 0.0, %v4707
        %4709 = vmatmul.bf16.gmra.mxu0 %v4638
        %v4710 = vpop.f32.mrf.mxu0
        %v4711 = vadd.f32 0.0, %v4710
        %v4712 = vpop.f32.mrf.mxu0
        %v4713 = vadd.f32 0.0, %v4712
        %4714 = vmatmul.bf16.gmra.mxu0 %v4641
        %v4715 = vpop.f32.mrf.mxu0
        %v4716 = vadd.f32 0.0, %v4715
        %v4717 = vpop.f32.mrf.mxu0
        %v4718 = vadd.f32 0.0, %v4717
        %4719 = vmatmul.bf16.gmra.mxu0 %v4644
        %v4720 = vpop.f32.mrf.mxu0
        %v4721 = vadd.f32 0.0, %v4720
        %v4722 = vpop.f32.mrf.mxu0
        %v4723 = vadd.f32 0.0, %v4722
        %4724 = vmatmul.bf16.gmra.mxu0 %v4647
        %v4725 = vpop.f32.mrf.mxu0
        %v4726 = vadd.f32 0.0, %v4725
        %v4727 = vpop.f32.mrf.mxu0
        %v4728 = vadd.f32 0.0, %v4727
        %4729 = vmatmul.bf16.gmra.mxu0 %v4650
        %v4730 = vpop.f32.mrf.mxu0
        %v4731 = vadd.f32 0.0, %v4730
        %v4732 = vpop.f32.mrf.mxu0
        %v4733 = vadd.f32 0.0, %v4732
        %4734 = vmatmul.bf16.gmra.mxu0 %v4653
        %v4735 = vpop.f32.mrf.mxu0
        %v4736 = vadd.f32 0.0, %v4735
        %v4737 = vpop.f32.mrf.mxu0
        %v4738 = vadd.f32 0.0, %v4737
        %4739 = vmatmul.bf16.gmra.mxu0 %v4656
        %v4740 = vpop.f32.mrf.mxu0
        %v4741 = vadd.f32 0.0, %v4740
        %v4742 = vpop.f32.mrf.mxu0
        %v4743 = vadd.f32 0.0, %v4742
        %4744 = vmatmul.bf16.gmra.mxu0 %v4659
        %v4745 = vpop.f32.mrf.mxu0
        %v4746 = vadd.f32 0.0, %v4745
        %v4747 = vpop.f32.mrf.mxu0
        %v4748 = vadd.f32 0.0, %v4747
        %4749 = vdwg.mxu0
        %v4750 = vld [vmem:[%s10] sm:$0x1]
        %v4752 = vperm.slane %v4750, 0
        %v4754 = vmul.f32 %v4671, %v4752
        %v4755 = vmul.f32 %v4673, %v4752
        %v4756 = vmul.f32 %v4676, %v4752
        %v4757 = vmul.f32 %v4678, %v4752
        %v4758 = vmul.f32 %v4681, %v4752
        %v4759 = vmul.f32 %v4683, %v4752
        %v4760 = vmul.f32 %v4686, %v4752
        %v4761 = vmul.f32 %v4688, %v4752
        %v4762 = vmul.f32 %v4691, %v4752
        %v4763 = vmul.f32 %v4693, %v4752
        %v4764 = vmul.f32 %v4696, %v4752
        %v4765 = vmul.f32 %v4698, %v4752
        %v4766 = vmul.f32 %v4701, %v4752
        %v4767 = vmul.f32 %v4703, %v4752
        %v4768 = vmul.f32 %v4706, %v4752
        %v4769 = vmul.f32 %v4708, %v4752
        %v4770 = vmul.f32 %v4711, %v4752
        %v4771 = vmul.f32 %v4713, %v4752
        %v4772 = vmul.f32 %v4716, %v4752
        %v4773 = vmul.f32 %v4718, %v4752
        %v4774 = vmul.f32 %v4721, %v4752
        %v4775 = vmul.f32 %v4723, %v4752
        %v4776 = vmul.f32 %v4726, %v4752
        %v4777 = vmul.f32 %v4728, %v4752
        %v4778 = vmul.f32 %v4731, %v4752
        %v4779 = vmul.f32 %v4733, %v4752
        %v4780 = vmul.f32 %v4736, %v4752
        %v4781 = vmul.f32 %v4738, %v4752
        %v4782 = vmul.f32 %v4741, %v4752
        %v4783 = vmul.f32 %v4743, %v4752
        %v4784 = vmul.f32 %v4746, %v4752
        %v4785 = vmul.f32 %v4748, %v4752
        %v4786 = vld [vmem:[%s11] sm:$0x1]
        %v4788 = vperm.slane %v4786, 0
        %v4790 = vadd.f32 %v4754, %v4788
        %v4791 = vadd.f32 %v4755, %v4788
        %v4792 = vadd.f32 %v4756, %v4788
        %v4793 = vadd.f32 %v4757, %v4788
        %v4794 = vadd.f32 %v4758, %v4788
        %v4795 = vadd.f32 %v4759, %v4788
        %v4796 = vadd.f32 %v4760, %v4788
        %v4797 = vadd.f32 %v4761, %v4788
        %v4798 = vadd.f32 %v4762, %v4788
        %v4799 = vadd.f32 %v4763, %v4788
        %v4800 = vadd.f32 %v4764, %v4788
        %v4801 = vadd.f32 %v4765, %v4788
        %v4802 = vadd.f32 %v4766, %v4788
        %v4803 = vadd.f32 %v4767, %v4788
        %v4804 = vadd.f32 %v4768, %v4788
        %v4805 = vadd.f32 %v4769, %v4788
        %v4806 = vadd.f32 %v4770, %v4788
        %v4807 = vadd.f32 %v4771, %v4788
        %v4808 = vadd.f32 %v4772, %v4788
        %v4809 = vadd.f32 %v4773, %v4788
        %v4810 = vadd.f32 %v4774, %v4788
        %v4811 = vadd.f32 %v4775, %v4788
        %v4812 = vadd.f32 %v4776, %v4788
        %v4813 = vadd.f32 %v4777, %v4788
        %v4814 = vadd.f32 %v4778, %v4788
        %v4815 = vadd.f32 %v4779, %v4788
        %v4816 = vadd.f32 %v4780, %v4788
        %v4817 = vadd.f32 %v4781, %v4788
        %v4818 = vadd.f32 %v4782, %v4788
        %v4819 = vadd.f32 %v4783, %v4788
        %v4820 = vadd.f32 %v4784, %v4788
        %v4821 = vadd.f32 %v4785, %v4788
        %v4822 = vunpack.c.l.bf16 %v455
        %v4823 = vunpack.c.l.bf16 %v456
        %v4824 = vunpack.c.l.bf16 %v457
        %v4825 = vunpack.c.l.bf16 %v458
        %v4826 = vunpack.c.l.bf16 %v459
        %v4827 = vunpack.c.l.bf16 %v460
        %v4828 = vunpack.c.l.bf16 %v461
        %v4829 = vunpack.c.l.bf16 %v462
        %v4830 = vunpack.c.l.bf16 %v463
        %v4831 = vunpack.c.l.bf16 %v464
        %v4832 = vunpack.c.l.bf16 %v465
        %v4833 = vunpack.c.l.bf16 %v466
        %v4834 = vunpack.c.l.bf16 %v467
        %v4835 = vunpack.c.l.bf16 %v468
        %v4836 = vunpack.c.l.bf16 %v469
        %v4837 = vunpack.c.l.bf16 %v470
        %v4838 = vunpack.c.l.bf16 %v471
        %v4839 = vunpack.c.l.bf16 %v472
        %v4840 = vunpack.c.l.bf16 %v473
        %v4841 = vunpack.c.l.bf16 %v474
        %v4842 = vunpack.c.l.bf16 %v475
        %v4843 = vunpack.c.l.bf16 %v476
        %v4844 = vunpack.c.l.bf16 %v477
        %v4845 = vunpack.c.l.bf16 %v478
        %v4846 = vunpack.c.l.bf16 %v479
        %v4847 = vunpack.c.l.bf16 %v480
        %v4848 = vunpack.c.l.bf16 %v481
        %v4849 = vunpack.c.l.bf16 %v482
        %v4850 = vunpack.c.l.bf16 %v483
        %v4851 = vunpack.c.l.bf16 %v484
        %v4852 = vunpack.c.l.bf16 %v485
        %v4853 = vunpack.c.l.bf16 %v486
        %v4854 = vadd.f32 %v4790, %v4822
        %v4855 = vadd.f32 %v4791, %v4823
        %v4856 = vadd.f32 %v4792, %v4824
        %v4857 = vadd.f32 %v4793, %v4825
        %v4858 = vadd.f32 %v4794, %v4826
        %v4859 = vadd.f32 %v4795, %v4827
        %v4860 = vadd.f32 %v4796, %v4828
        %v4861 = vadd.f32 %v4797, %v4829
        %v4862 = vadd.f32 %v4798, %v4830
        %v4863 = vadd.f32 %v4799, %v4831
        %v4864 = vadd.f32 %v4800, %v4832
        %v4865 = vadd.f32 %v4801, %v4833
        %v4866 = vadd.f32 %v4802, %v4834
        %v4867 = vadd.f32 %v4803, %v4835
        %v4868 = vadd.f32 %v4804, %v4836
        %v4869 = vadd.f32 %v4805, %v4837
        %v4870 = vadd.f32 %v4806, %v4838
        %v4871 = vadd.f32 %v4807, %v4839
        %v4872 = vadd.f32 %v4808, %v4840
        %v4873 = vadd.f32 %v4809, %v4841
        %v4874 = vadd.f32 %v4810, %v4842
        %v4875 = vadd.f32 %v4811, %v4843
        %v4876 = vadd.f32 %v4812, %v4844
        %v4877 = vadd.f32 %v4813, %v4845
        %v4878 = vadd.f32 %v4814, %v4846
        %v4879 = vadd.f32 %v4815, %v4847
        %v4880 = vadd.f32 %v4816, %v4848
        %v4881 = vadd.f32 %v4817, %v4849
        %v4882 = vadd.f32 %v4818, %v4850
        %v4883 = vadd.f32 %v4819, %v4851
        %v4884 = vadd.f32 %v4820, %v4852
        %v4885 = vadd.f32 %v4821, %v4853
        %v4886 = vmax.f32 %v4854, 0.0
        %v4887 = vmax.f32 %v4855, 0.0
        %v4888 = vmax.f32 %v4856, 0.0
        %v4889 = vmax.f32 %v4857, 0.0
        %v4890 = vmax.f32 %v4858, 0.0
        %v4891 = vmax.f32 %v4859, 0.0
        %v4892 = vmax.f32 %v4860, 0.0
        %v4893 = vmax.f32 %v4861, 0.0
        %v4894 = vmax.f32 %v4862, 0.0
        %v4895 = vmax.f32 %v4863, 0.0
        %v4896 = vmax.f32 %v4864, 0.0
        %v4897 = vmax.f32 %v4865, 0.0
        %v4898 = vmax.f32 %v4866, 0.0
        %v4899 = vmax.f32 %v4867, 0.0
        %v4900 = vmax.f32 %v4868, 0.0
        %v4901 = vmax.f32 %v4869, 0.0
        %v4902 = vmax.f32 %v4870, 0.0
        %v4903 = vmax.f32 %v4871, 0.0
        %v4904 = vmax.f32 %v4872, 0.0
        %v4905 = vmax.f32 %v4873, 0.0
        %v4906 = vmax.f32 %v4874, 0.0
        %v4907 = vmax.f32 %v4875, 0.0
        %v4908 = vmax.f32 %v4876, 0.0
        %v4909 = vmax.f32 %v4877, 0.0
        %v4910 = vmax.f32 %v4878, 0.0
        %v4911 = vmax.f32 %v4879, 0.0
        %v4912 = vmax.f32 %v4880, 0.0
        %v4913 = vmax.f32 %v4881, 0.0
        %v4914 = vmax.f32 %v4882, 0.0
        %v4915 = vmax.f32 %v4883, 0.0
        %v4916 = vmax.f32 %v4884, 0.0
        %v4917 = vmax.f32 %v4885, 0.0
        %v4918 = vpack.c.bf16 %v4886, %v4886
        %v4919 = vpack.c.bf16 %v4887, %v4887
        %v4920 = vpack.c.bf16 %v4888, %v4888
        %v4921 = vpack.c.bf16 %v4889, %v4889
        %v4922 = vpack.c.bf16 %v4890, %v4890
        %v4923 = vpack.c.bf16 %v4891, %v4891
        %v4924 = vpack.c.bf16 %v4892, %v4892
        %v4925 = vpack.c.bf16 %v4893, %v4893
        %v4926 = vpack.c.bf16 %v4894, %v4894
        %v4927 = vpack.c.bf16 %v4895, %v4895
        %v4928 = vpack.c.bf16 %v4896, %v4896
        %v4929 = vpack.c.bf16 %v4897, %v4897
        %v4930 = vpack.c.bf16 %v4898, %v4898
        %v4931 = vpack.c.bf16 %v4899, %v4899
        %v4932 = vpack.c.bf16 %v4900, %v4900
        %v4933 = vpack.c.bf16 %v4901, %v4901
        %v4934 = vpack.c.bf16 %v4902, %v4902
        %v4935 = vpack.c.bf16 %v4903, %v4903
        %v4936 = vpack.c.bf16 %v4904, %v4904
        %v4937 = vpack.c.bf16 %v4905, %v4905
        %v4938 = vpack.c.bf16 %v4906, %v4906
        %v4939 = vpack.c.bf16 %v4907, %v4907
        %v4940 = vpack.c.bf16 %v4908, %v4908
        %v4941 = vpack.c.bf16 %v4909, %v4909
        %v4942 = vpack.c.bf16 %v4910, %v4910
        %v4943 = vpack.c.bf16 %v4911, %v4911
        %v4944 = vpack.c.bf16 %v4912, %v4912
        %v4945 = vpack.c.bf16 %v4913, %v4913
        %v4946 = vpack.c.bf16 %v4914, %v4914
        %v4947 = vpack.c.bf16 %v4915, %v4915
        %v4948 = vpack.c.bf16 %v4916, %v4916
        %v4949 = vpack.c.bf16 %v4917, %v4917
        %vm4950 = vcmask 519168
        %4951 = vst.msk [vmem:[%s451] sm:$0xf] %vm4950, %v4918
        %4952 = vst.msk [vmem:[%s451 + $0x4] sm:$0xf] %vm4950, %v4919
        %4953 = vst.msk [vmem:[%s451 + $0x8] sm:$0xf] %vm4950, %v4920
        %4954 = vst.msk [vmem:[%s451 + $0xc] sm:$0xf] %vm4950, %v4921
        %4955 = vst.msk [vmem:[%s451 + $0x10] sm:$0xf] %vm4950, %v4922
        %4956 = vst.msk [vmem:[%s451 + $0x14] sm:$0xf] %vm4950, %v4923
        %4957 = vst.msk [vmem:[%s451 + $0x18] sm:$0xf] %vm4950, %v4924
        %4958 = vst.msk [vmem:[%s451 + $0x1c] sm:$0xf] %vm4950, %v4925
        %4959 = vst.msk [vmem:[%s451 + $0x20] sm:$0xf] %vm4950, %v4926
        %4960 = vst.msk [vmem:[%s451 + $0x24] sm:$0xf] %vm4950, %v4927
        %4961 = vst.msk [vmem:[%s451 + $0x28] sm:$0xf] %vm4950, %v4928
        %4962 = vst.msk [vmem:[%s451 + $0x2c] sm:$0xf] %vm4950, %v4929
        %4963 = vst.msk [vmem:[%s451 + $0x30] sm:$0xf] %vm4950, %v4930
        %4964 = vst.msk [vmem:[%s451 + $0x34] sm:$0xf] %vm4950, %v4931
        %4965 = vst.msk [vmem:[%s451 + $0x38] sm:$0xf] %vm4950, %v4932
        %4966 = vst.msk [vmem:[%s451 + $0x3c] sm:$0xf] %vm4950, %v4933
        %4967 = vst.msk [vmem:[%s451 + $0x40] sm:$0xf] %vm4950, %v4934
        %4968 = vst.msk [vmem:[%s451 + $0x44] sm:$0xf] %vm4950, %v4935
        %4969 = vst.msk [vmem:[%s451 + $0x48] sm:$0xf] %vm4950, %v4936
        %4970 = vst.msk [vmem:[%s451 + $0x4c] sm:$0xf] %vm4950, %v4937
        %4971 = vst.msk [vmem:[%s451 + $0x50] sm:$0xf] %vm4950, %v4938
        %4972 = vst.msk [vmem:[%s451 + $0x54] sm:$0xf] %vm4950, %v4939
        %4973 = vst.msk [vmem:[%s451 + $0x58] sm:$0xf] %vm4950, %v4940
        %4974 = vst.msk [vmem:[%s451 + $0x5c] sm:$0xf] %vm4950, %v4941
        %4975 = vst.msk [vmem:[%s451 + $0x60] sm:$0xf] %vm4950, %v4942
        %4976 = vst.msk [vmem:[%s451 + $0x64] sm:$0xf] %vm4950, %v4943
        %4977 = vst.msk [vmem:[%s451 + $0x68] sm:$0xf] %vm4950, %v4944
        %4978 = vst.msk [vmem:[%s451 + $0x6c] sm:$0xf] %vm4950, %v4945
        %4979 = vst.msk [vmem:[%s451 + $0x70] sm:$0xf] %vm4950, %v4946
        %4980 = vst.msk [vmem:[%s451 + $0x74] sm:$0xf] %vm4950, %v4947
        %4981 = vst.msk [vmem:[%s451 + $0x78] sm:$0xf] %vm4950, %v4948
        %4982 = vst.msk [vmem:[%s451 + $0x7c] sm:$0xf] %vm4950, %v4949
        %s4983 = sand.u32 %s295, 1
        %s4984 = scalar_lea.sflag [#allocation5], %s4983
        %s4985 = sand.u32 %s295, 1
        %s4986 = smul.addr %s4985, 128
        %s4987 = scalar_lea.vmem [#allocation8], %s4986
        // Predicated region
        $region77: #{tpu_custom_call.1} parent=67 // pred_check
          %p4988 = pneg %p305
        $region78: #{tpu_custom_call.1} parent=67 // pred_check_branch
          %4990 = sbr.rel (%p4988) target = $region80
        $region79: #{tpu_custom_call.1} parent=67 // pred_region
          %s4991 = smul.u32 4, %s30
          %4993 = vsyncadd %s4984, 0
          %s4994 = smul.addr %s4991, 8
          %s4995 = smul.addr %s4994, 4
          %s4996 = scalar_lea.hbm %s12, %s4995
          %s4997 = sshll.u32 %s4987, 4
          %s4998 = int_to_ptr.vmem [resolvable:$true] %s4997
          %s4999 = sshll.u32 %s4996, 4
          %s5000 = int_to_ptr.hbm [resolvable:$true] %s4999
          %5005 = dma.vmem_to_hbm [thread:$0]  %s4998, 2048, %s5000, %s4984, 64, 64, 4
        $region80: #{tpu_custom_call.1} parent=67 // pred_fallthru
          _
      $region68: #{tpu_custom_call.1} parent=5 // pred_fallthru
        _
      %p5006 = scmp.le.s32.totalorder 2, %s25
      // Predicated region
      $region81: #{tpu_custom_call.1} parent=5 // pred_check
        %p5007 = pneg %p5006
      $region82: #{tpu_custom_call.1} parent=5 // pred_check_branch
        %5009 = sbr.rel (%p5007) target = $region84
      $region83: #{tpu_custom_call.1} parent=5 // pred_region
        %s5010 = ssub.s32 %s25, 2
        // Predicated region
        $region85: #{tpu_custom_call.1} parent=83 // pred_check
          %p5011 = pneg %p311
        $region86: #{tpu_custom_call.1} parent=83 // pred_check_branch
          %5013 = sbr.rel (%p5011) target = $region88
        $region87: #{tpu_custom_call.1} parent=83 // pred_region
          %s5014 = sand.u32 %s296, 1
          %s5015 = scalar_lea.sflag [#allocation5], %s5014
          %s5016 = sand.u32 %s296, 1
          %s5017 = smul.addr %s5016, 128
          %s5018 = scalar_lea.vmem [#allocation8], %s5017
          %5020 = dma.done %s5015, 2048
        $region88: #{tpu_custom_call.1} parent=83 // pred_fallthru
          _
      $region84: #{tpu_custom_call.1} parent=5 // pred_fallthru
        _
    $region6: #{tpu_custom_call.1} parent=1 // loop_footer
      %s29 = sadd.s32 1, %s25
    $region7: #{tpu_custom_call.1} parent=1 // loop_footer_branch
      %24 = sbr.rel target = $region3
    $region8: #{tpu_custom_call.1} parent=1 // loop_exit
      _
    %5021 = vsyncpa [#allocation4], 1
    %s5022 = scalar_lea.sflag [#allocation4], 1
    %5023 = vsyncpa %s5022, 1
    %5024 = vsyncpa [#allocation7], 1
    %5025 = vsyncpa [#allocation5], 1
    %s5026 = scalar_lea.sflag [#allocation5], 1
    %5027 = vsyncpa %s5026, 1

</llo_original>
